<compile_context>
chip_gen: v5e
topology: v5e:2x2
jax: 0.10.0
libtpu: 0.0.40
codegen_flags: <defaults>
</compile_context>

<pallas_src>
import jax
import jax.numpy as jnp
from jax.experimental import pallas as pl
from jax.experimental.pallas import tpu as pltpu

# ----------------------------- config ---------------------------------------
N_BATCH = 2      # batch
C_IN    = 4      # input channels
H = W   = 16     # spatial
C_OUT   = 8      # conv output channels
KH = KW = 3      # conv kernel (stride 1, pad 1)
HW      = H * W
FEAT    = C_OUT * HW          # base_model.fc_num_in_features = 2048

assert (W & (W - 1)) == 0     # in-kernel w-index uses a bitwise AND

# Packed parameter-slab layout: a single lane-dense (C_OUT, 384) f32 input.
P_COLS    = 384
COL_CONVW = 0                     # [0:36)    conv weight, tap-major/chan-minor
COL_CONVB = KH * KW * C_IN        # 36        conv bias (per out channel)
COL_FCB   = COL_CONVB + 1         # 37        fc bias (row 0 only)
COL_FCW   = 128                   # [128:384) fc weight (C_OUT, H*W)


# ------------------------- fused Pallas kernel -------------------------------
def _lane_roll(x, s):
    """Circular roll along the last axis: y[:, p] = x[:, (p - s) % n].

    Built from two static slices + concatenate so the shift direction is
    explicit (same convention as jnp.roll); lowers to cheap lane shifts.
    """
    n = x.shape[-1]
    s = s % n
    if s == 0:
        return x
    return jnp.concatenate([x[:, n - s:], x[:, :n - s]], axis=-1)


def fused_siamese_kernel(x1_ref, x2_ref, p_ref, o_ref):
    """Fused Siamese forward.

    x1_ref, x2_ref : (N, C_IN, H*W)  raw inputs (flattened spatial).
    p_ref          : (C_OUT, 384)    packed params (conv W, conv b, fc W, fc b).
    o_ref          : (1, N)          sigmoid(fc(|f1 - f2|)), lane-major.
    """
    n_batch = x1_ref.shape[0]
    c_in    = x1_ref.shape[1]
    hw      = x1_ref.shape[2]

    # ---- unpack the single parameter slab (static lane slices) ----
    wc  = p_ref[:, COL_CONVW:COL_CONVW + KH * KW * c_in]   # (C_OUT, 36)
    bc  = p_ref[:, COL_CONVB:COL_CONVB + 1]                # (C_OUT, 1)
    fcb = p_ref[0:1, COL_FCB:COL_FCB + 1]                  # (1, 1)
    fcw = p_ref[:, COL_FCW:COL_FCW + hw]                   # (C_OUT, H*W)

    # ---- per-tap shift + validity mask for the pad=1 conv (computed once) --
    lane  = jax.lax.broadcasted_iota(jnp.int32, (c_in, hw), 1)
    w_idx = jnp.bitwise_and(lane, W - 1)                   # lane % W (W pow 2)
    taps = []
    for kh in range(KH):
        for kw in range(KW):
            dh, dw = kh - 1, kw - 1
            off = dh * W + dw
            m = ((lane + dh * W >= 0) & (lane + dh * W < hw) &
                 (w_idx + dw >= 0) & (w_idx + dw < W))
            taps.append((kh * KW + kw, off, m))

    def conv_feat(x):
        """3x3 pad=1 conv + bias + ReLU on one image: (C_IN,HW) -> (C_OUT,HW)."""
        acc = jnp.zeros((C_OUT, hw), jnp.float32)
        for tap, off, m in taps:
            xs = _lane_roll(x, (-off) % hw)           # xs[:, p] = x[:, p + off]
            xs = jnp.where(m, xs, 0.0)                # zero-padding contributions
            wk = wc[:, tap * c_in:(tap + 1) * c_in]   # (C_OUT, C_IN)
            acc = acc + jnp.dot(wk, xs, preferred_element_type=jnp.float32)
        return jnp.maximum(acc + bc, 0.0)

    # ---- per-sample: |f1 - f2| -> fc (width 1) via VPU mul + XLU reductions --
    logits = []
    for n in range(n_batch):                          # static unroll (N tiny)
        d = jnp.abs(conv_feat(x1_ref[n]) - conv_feat(x2_ref[n]))  # (C_OUT, HW)
        part  = jnp.sum(d * fcw, axis=1, keepdims=True)           # (C_OUT, 1)
        logit = jnp.sum(part, axis=0, keepdims=True) + fcb        # (1, 1)
        logits.append(logit)

    lvec = jnp.concatenate(logits, axis=1)            # (1, N)
    # Exact sigmoid; approx EUP reciprocal is not worth the accuracy loss here.
    o_ref[...] = 1.0 / (1.0 + jnp.exp(-lvec))         # ONE lane-major store


def fused_siamese_pallas(x1, x2, pslab):
    n_batch = x1.shape[0]
    return pl.pallas_call(
        fused_siamese_kernel,
        out_shape=jax.ShapeDtypeStruct((1, n_batch), jnp.float32),
        grid_spec=pltpu.PrefetchScalarGridSpec(
            num_scalar_prefetch=0,
            grid=(1,),                                # ~40 KiB -> fits VMEM
            in_specs=[
                pl.BlockSpec(x1.shape, lambda i: (0, 0, 0)),
                pl.BlockSpec(x2.shape, lambda i: (0, 0, 0)),
                pl.BlockSpec(pslab.shape, lambda i: (0, 0)),
            ],
            out_specs=pl.BlockSpec((1, n_batch), lambda i: (0, 0)),
        ),
        compiler_params=pltpu.CompilerParams(
            dimension_semantics=("arbitrary",)),
        # TODO(synk): if batch/spatial grow beyond toy scale, add a batch grid
        # axis marked "parallel" so v7x's second TensorCore shares the work.
    )(x1, x2, pslab)


# -------------------------- glue (no host-side copies) -----------------------
def siamese_forward(input1, input2, pslab):
    """Full SiameseNetwork.forward with one fused Pallas kernel."""
    n = input1.shape[0]
    x1 = input1.reshape(n, C_IN, HW)        # metadata-only reshapes
    x2 = input2.reshape(n, C_IN, HW)
    out = fused_siamese_pallas(x1, x2, pslab)   # (1, N)
    return out.reshape(n, 1)                # module output shape (N, 1)


# ----------------------------- params ----------------------------------------
def make_params():
    """Parameters in PyTorch layout (Conv2d(4,8,3,pad=1) + Linear(2048,1))."""
    k = jax.random.PRNGKey(42)
    k1, k2, k3, k4 = jax.random.split(k, 4)
    conv_w = 0.1 * jax.random.normal(k1, (C_OUT, C_IN, KH, KW), jnp.float32)
    conv_b = 0.1 * jax.random.normal(k2, (C_OUT,), jnp.float32)
    fc_w = 0.02 * jax.random.normal(k3, (1, FEAT), jnp.float32)   # nn.Linear weight
    fc_b = 0.02 * jax.random.normal(k4, (1,), jnp.float32)
    return dict(conv_w=conv_w, conv_b=conv_b, fc_w=fc_w, fc_b=fc_b)


def prepare_kernel_params(params):
    """One-time offline repack of the PyTorch-layout params into ONE slab."""
    slab = jnp.zeros((C_OUT, P_COLS), jnp.float32)
    # conv weight tap-major: slab[o, tap*C_IN + c] = conv_w[o, c, kh, kw]
    wflat = params["conv_w"].transpose(0, 2, 3, 1).reshape(C_OUT, KH * KW * C_IN)
    slab = slab.at[:, COL_CONVW:COL_CONVW + KH * KW * C_IN].set(wflat)
    slab = slab.at[:, COL_CONVB].set(params["conv_b"])
    slab = slab.at[0, COL_FCB].set(params["fc_b"][0])
    # PyTorch flattens features (Cout, H, W); (Cout, H*W) matches kernel order.
    slab = slab.at[:, COL_FCW:COL_FCW + HW].set(params["fc_w"].reshape(C_OUT, HW))
    return slab


# --------------------------- pure-JAX reference -------------------------------
def reference_forward(input1, input2, params):
    def feat(x):
        y = jax.lax.conv_general_dilated(
            x, params["conv_w"], window_strides=(1, 1), padding="SAME",
            dimension_numbers=("NCHW", "OIHW", "NCHW"))
        y = jnp.maximum(y + params["conv_b"][None, :, None, None], 0.0)
        return y.reshape(x.shape[0], -1)
    d = jnp.abs(feat(input1) - feat(input2))
    logit = d @ params["fc_w"].T + params["fc_b"]
    return 1.0 / (1.0 + jnp.exp(-logit))


# ----------------------------- main -------------------------------------------
if __name__ == "__main__":
    key = jax.random.PRNGKey(0)
    kx1, kx2 = jax.random.split(key)
    input1 = jax.random.normal(kx1, (N_BATCH, C_IN, H, W), jnp.float32)
    input2 = jax.random.normal(kx2, (N_BATCH, C_IN, H, W), jnp.float32)

    params = make_params()
    pslab = prepare_kernel_params(params)     # done once, outside the forward

    fwd = jax.jit(siamese_forward)
    out = jax.block_until_ready(fwd(input1, input2, pslab))

    ref = jax.block_until_ready(reference_forward(input1, input2, params))
    assert out.shape == (N_BATCH, 1)
    assert bool(jnp.all((out >= 0.0) & (out <= 1.0)))
    assert bool(jnp.allclose(out, ref, atol=3e-4, rtol=3e-4)), (out, ref)
    print("KERNEL_OK")
</pallas_src>

<mosaic_0001>
module attributes {stable_mosaic.version = 11 : i64} {
  func.func @fused_siamese_kernel(%arg0: i32, %arg1: memref<2x4x256xf32, #tpu.memory_space<vmem>>, %arg2: memref<2x4x256xf32, #tpu.memory_space<vmem>>, %arg3: memref<8x384xf32, #tpu.memory_space<vmem>>, %arg4: memref<1x2xf32, #tpu.memory_space<vmem>>) attributes {dimension_semantics = [#tpu.dimension_semantics<arbitrary>], iteration_bounds = array<i64: 1>, scalar_prefetch = 0 : i64, scratch_operands = 0 : i64, tpu.core_type = #tpu.core_type<tc>, window_params = [{pipeline_mode = #tpu.pipeline_mode<synchronous>, transform_indices = @transform_0, window_bounds = array<i64: 2, 4, 256>}, {pipeline_mode = #tpu.pipeline_mode<synchronous>, transform_indices = @transform_1, window_bounds = array<i64: 2, 4, 256>}, {pipeline_mode = #tpu.pipeline_mode<synchronous>, transform_indices = @transform_2, window_bounds = array<i64: 8, 384>}, {pipeline_mode = #tpu.pipeline_mode<synchronous>, transform_indices = @transform_3, window_bounds = array<i64: 1, 2>}]} {
    %c0 = arith.constant 0 : index
    %c0_0 = arith.constant 0 : index
    %0 = vector.load %arg3[%c0, %c0_0] : memref<8x384xf32, #tpu.memory_space<vmem>>, vector<8x36xf32>
    %c0_1 = arith.constant 0 : index
    %c36 = arith.constant 36 : index
    %1 = vector.load %arg3[%c0_1, %c36] : memref<8x384xf32, #tpu.memory_space<vmem>>, vector<8x1xf32>
    %c0_2 = arith.constant 0 : index
    %c37 = arith.constant 37 : index
    %2 = vector.load %arg3[%c0_2, %c37] : memref<8x384xf32, #tpu.memory_space<vmem>>, vector<1x1xf32>
    %c0_3 = arith.constant 0 : index
    %c128 = arith.constant 128 : index
    %3 = vector.load %arg3[%c0_3, %c128] : memref<8x384xf32, #tpu.memory_space<vmem>>, vector<8x256xf32>
    %4 = tpu.iota {dimensions = array<i32: 1>} : vector<4x256xi32>
    %c15_i32 = arith.constant 15 : i32
    %5 = vector.broadcast %c15_i32 : i32 to vector<4x256xi32>
    %6 = arith.andi %4, %5 : vector<4x256xi32>
    %c-16_i32 = arith.constant -16 : i32
    %7 = vector.broadcast %c-16_i32 : i32 to vector<4x256xi32>
    %8 = arith.addi %4, %7 : vector<4x256xi32>
    %c0_i32 = arith.constant 0 : i32
    %9 = vector.broadcast %c0_i32 : i32 to vector<4x256xi32>
    %10 = arith.cmpi sge, %8, %9 : vector<4x256xi32>
    %c-16_i32_4 = arith.constant -16 : i32
    %11 = vector.broadcast %c-16_i32_4 : i32 to vector<4x256xi32>
    %12 = arith.addi %4, %11 : vector<4x256xi32>
    %c256_i32 = arith.constant 256 : i32
    %13 = vector.broadcast %c256_i32 : i32 to vector<4x256xi32>
    %14 = arith.cmpi slt, %12, %13 : vector<4x256xi32>
    %15 = arith.andi %10, %14 : vector<4x256xi1>
    %c-1_i32 = arith.constant -1 : i32
    %16 = vector.broadcast %c-1_i32 : i32 to vector<4x256xi32>
    %17 = arith.addi %6, %16 : vector<4x256xi32>
    %c0_i32_5 = arith.constant 0 : i32
    %18 = vector.broadcast %c0_i32_5 : i32 to vector<4x256xi32>
    %19 = arith.cmpi sge, %17, %18 : vector<4x256xi32>
    %20 = arith.andi %15, %19 : vector<4x256xi1>
    %c-1_i32_6 = arith.constant -1 : i32
    %21 = vector.broadcast %c-1_i32_6 : i32 to vector<4x256xi32>
    %22 = arith.addi %6, %21 : vector<4x256xi32>
    %c16_i32 = arith.constant 16 : i32
    %23 = vector.broadcast %c16_i32 : i32 to vector<4x256xi32>
    %24 = arith.cmpi slt, %22, %23 : vector<4x256xi32>
    %25 = arith.andi %20, %24 : vector<4x256xi1>
    %c-16_i32_7 = arith.constant -16 : i32
    %26 = vector.broadcast %c-16_i32_7 : i32 to vector<4x256xi32>
    %27 = arith.addi %4, %26 : vector<4x256xi32>
    %c0_i32_8 = arith.constant 0 : i32
    %28 = vector.broadcast %c0_i32_8 : i32 to vector<4x256xi32>
    %29 = arith.cmpi sge, %27, %28 : vector<4x256xi32>
    %c-16_i32_9 = arith.constant -16 : i32
    %30 = vector.broadcast %c-16_i32_9 : i32 to vector<4x256xi32>
    %31 = arith.addi %4, %30 : vector<4x256xi32>
    %c256_i32_10 = arith.constant 256 : i32
    %32 = vector.broadcast %c256_i32_10 : i32 to vector<4x256xi32>
    %33 = arith.cmpi slt, %31, %32 : vector<4x256xi32>
    %34 = arith.andi %29, %33 : vector<4x256xi1>
    %c0_i32_11 = arith.constant 0 : i32
    %35 = vector.broadcast %c0_i32_11 : i32 to vector<4x256xi32>
    %36 = arith.addi %6, %35 : vector<4x256xi32>
    %c0_i32_12 = arith.constant 0 : i32
    %37 = vector.broadcast %c0_i32_12 : i32 to vector<4x256xi32>
    %38 = arith.cmpi sge, %36, %37 : vector<4x256xi32>
    %39 = arith.andi %34, %38 : vector<4x256xi1>
    %c0_i32_13 = arith.constant 0 : i32
    %40 = vector.broadcast %c0_i32_13 : i32 to vector<4x256xi32>
    %41 = arith.addi %6, %40 : vector<4x256xi32>
    %c16_i32_14 = arith.constant 16 : i32
    %42 = vector.broadcast %c16_i32_14 : i32 to vector<4x256xi32>
    %43 = arith.cmpi slt, %41, %42 : vector<4x256xi32>
    %44 = arith.andi %39, %43 : vector<4x256xi1>
    %c-16_i32_15 = arith.constant -16 : i32
    %45 = vector.broadcast %c-16_i32_15 : i32 to vector<4x256xi32>
    %46 = arith.addi %4, %45 : vector<4x256xi32>
    %c0_i32_16 = arith.constant 0 : i32
    %47 = vector.broadcast %c0_i32_16 : i32 to vector<4x256xi32>
    %48 = arith.cmpi sge, %46, %47 : vector<4x256xi32>
    %c-16_i32_17 = arith.constant -16 : i32
    %49 = vector.broadcast %c-16_i32_17 : i32 to vector<4x256xi32>
    %50 = arith.addi %4, %49 : vector<4x256xi32>
    %c256_i32_18 = arith.constant 256 : i32
    %51 = vector.broadcast %c256_i32_18 : i32 to vector<4x256xi32>
    %52 = arith.cmpi slt, %50, %51 : vector<4x256xi32>
    %53 = arith.andi %48, %52 : vector<4x256xi1>
    %c1_i32 = arith.constant 1 : i32
    %54 = vector.broadcast %c1_i32 : i32 to vector<4x256xi32>
    %55 = arith.addi %6, %54 : vector<4x256xi32>
    %c0_i32_19 = arith.constant 0 : i32
    %56 = vector.broadcast %c0_i32_19 : i32 to vector<4x256xi32>
    %57 = arith.cmpi sge, %55, %56 : vector<4x256xi32>
    %58 = arith.andi %53, %57 : vector<4x256xi1>
    %c1_i32_20 = arith.constant 1 : i32
    %59 = vector.broadcast %c1_i32_20 : i32 to vector<4x256xi32>
    %60 = arith.addi %6, %59 : vector<4x256xi32>
    %c16_i32_21 = arith.constant 16 : i32
    %61 = vector.broadcast %c16_i32_21 : i32 to vector<4x256xi32>
    %62 = arith.cmpi slt, %60, %61 : vector<4x256xi32>
    %63 = arith.andi %58, %62 : vector<4x256xi1>
    %c0_i32_22 = arith.constant 0 : i32
    %64 = vector.broadcast %c0_i32_22 : i32 to vector<4x256xi32>
    %65 = arith.addi %4, %64 : vector<4x256xi32>
    %c0_i32_23 = arith.constant 0 : i32
    %66 = vector.broadcast %c0_i32_23 : i32 to vector<4x256xi32>
    %67 = arith.cmpi sge, %65, %66 : vector<4x256xi32>
    %c0_i32_24 = arith.constant 0 : i32
    %68 = vector.broadcast %c0_i32_24 : i32 to vector<4x256xi32>
    %69 = arith.addi %4, %68 : vector<4x256xi32>
    %c256_i32_25 = arith.constant 256 : i32
    %70 = vector.broadcast %c256_i32_25 : i32 to vector<4x256xi32>
    %71 = arith.cmpi slt, %69, %70 : vector<4x256xi32>
    %72 = arith.andi %67, %71 : vector<4x256xi1>
    %c-1_i32_26 = arith.constant -1 : i32
    %73 = vector.broadcast %c-1_i32_26 : i32 to vector<4x256xi32>
    %74 = arith.addi %6, %73 : vector<4x256xi32>
    %c0_i32_27 = arith.constant 0 : i32
    %75 = vector.broadcast %c0_i32_27 : i32 to vector<4x256xi32>
    %76 = arith.cmpi sge, %74, %75 : vector<4x256xi32>
    %77 = arith.andi %72, %76 : vector<4x256xi1>
    %c-1_i32_28 = arith.constant -1 : i32
    %78 = vector.broadcast %c-1_i32_28 : i32 to vector<4x256xi32>
    %79 = arith.addi %6, %78 : vector<4x256xi32>
    %c16_i32_29 = arith.constant 16 : i32
    %80 = vector.broadcast %c16_i32_29 : i32 to vector<4x256xi32>
    %81 = arith.cmpi slt, %79, %80 : vector<4x256xi32>
    %82 = arith.andi %77, %81 : vector<4x256xi1>
    %c0_i32_30 = arith.constant 0 : i32
    %83 = vector.broadcast %c0_i32_30 : i32 to vector<4x256xi32>
    %84 = arith.addi %4, %83 : vector<4x256xi32>
    %c0_i32_31 = arith.constant 0 : i32
    %85 = vector.broadcast %c0_i32_31 : i32 to vector<4x256xi32>
    %86 = arith.cmpi sge, %84, %85 : vector<4x256xi32>
    %c0_i32_32 = arith.constant 0 : i32
    %87 = vector.broadcast %c0_i32_32 : i32 to vector<4x256xi32>
    %88 = arith.addi %4, %87 : vector<4x256xi32>
    %c256_i32_33 = arith.constant 256 : i32
    %89 = vector.broadcast %c256_i32_33 : i32 to vector<4x256xi32>
    %90 = arith.cmpi slt, %88, %89 : vector<4x256xi32>
    %91 = arith.andi %86, %90 : vector<4x256xi1>
    %c0_i32_34 = arith.constant 0 : i32
    %92 = vector.broadcast %c0_i32_34 : i32 to vector<4x256xi32>
    %93 = arith.addi %6, %92 : vector<4x256xi32>
    %c0_i32_35 = arith.constant 0 : i32
    %94 = vector.broadcast %c0_i32_35 : i32 to vector<4x256xi32>
    %95 = arith.cmpi sge, %93, %94 : vector<4x256xi32>
    %96 = arith.andi %91, %95 : vector<4x256xi1>
    %c0_i32_36 = arith.constant 0 : i32
    %97 = vector.broadcast %c0_i32_36 : i32 to vector<4x256xi32>
    %98 = arith.addi %6, %97 : vector<4x256xi32>
    %c16_i32_37 = arith.constant 16 : i32
    %99 = vector.broadcast %c16_i32_37 : i32 to vector<4x256xi32>
    %100 = arith.cmpi slt, %98, %99 : vector<4x256xi32>
    %101 = arith.andi %96, %100 : vector<4x256xi1>
    %c0_i32_38 = arith.constant 0 : i32
    %102 = vector.broadcast %c0_i32_38 : i32 to vector<4x256xi32>
    %103 = arith.addi %4, %102 : vector<4x256xi32>
    %c0_i32_39 = arith.constant 0 : i32
    %104 = vector.broadcast %c0_i32_39 : i32 to vector<4x256xi32>
    %105 = arith.cmpi sge, %103, %104 : vector<4x256xi32>
    %c0_i32_40 = arith.constant 0 : i32
    %106 = vector.broadcast %c0_i32_40 : i32 to vector<4x256xi32>
    %107 = arith.addi %4, %106 : vector<4x256xi32>
    %c256_i32_41 = arith.constant 256 : i32
    %108 = vector.broadcast %c256_i32_41 : i32 to vector<4x256xi32>
    %109 = arith.cmpi slt, %107, %108 : vector<4x256xi32>
    %110 = arith.andi %105, %109 : vector<4x256xi1>
    %c1_i32_42 = arith.constant 1 : i32
    %111 = vector.broadcast %c1_i32_42 : i32 to vector<4x256xi32>
    %112 = arith.addi %6, %111 : vector<4x256xi32>
    %c0_i32_43 = arith.constant 0 : i32
    %113 = vector.broadcast %c0_i32_43 : i32 to vector<4x256xi32>
    %114 = arith.cmpi sge, %112, %113 : vector<4x256xi32>
    %115 = arith.andi %110, %114 : vector<4x256xi1>
    %c1_i32_44 = arith.constant 1 : i32
    %116 = vector.broadcast %c1_i32_44 : i32 to vector<4x256xi32>
    %117 = arith.addi %6, %116 : vector<4x256xi32>
    %c16_i32_45 = arith.constant 16 : i32
    %118 = vector.broadcast %c16_i32_45 : i32 to vector<4x256xi32>
    %119 = arith.cmpi slt, %117, %118 : vector<4x256xi32>
    %120 = arith.andi %115, %119 : vector<4x256xi1>
    %c16_i32_46 = arith.constant 16 : i32
    %121 = vector.broadcast %c16_i32_46 : i32 to vector<4x256xi32>
    %122 = arith.addi %4, %121 : vector<4x256xi32>
    %c0_i32_47 = arith.constant 0 : i32
    %123 = vector.broadcast %c0_i32_47 : i32 to vector<4x256xi32>
    %124 = arith.cmpi sge, %122, %123 : vector<4x256xi32>
    %c16_i32_48 = arith.constant 16 : i32
    %125 = vector.broadcast %c16_i32_48 : i32 to vector<4x256xi32>
    %126 = arith.addi %4, %125 : vector<4x256xi32>
    %c256_i32_49 = arith.constant 256 : i32
    %127 = vector.broadcast %c256_i32_49 : i32 to vector<4x256xi32>
    %128 = arith.cmpi slt, %126, %127 : vector<4x256xi32>
    %129 = arith.andi %124, %128 : vector<4x256xi1>
    %c-1_i32_50 = arith.constant -1 : i32
    %130 = vector.broadcast %c-1_i32_50 : i32 to vector<4x256xi32>
    %131 = arith.addi %6, %130 : vector<4x256xi32>
    %c0_i32_51 = arith.constant 0 : i32
    %132 = vector.broadcast %c0_i32_51 : i32 to vector<4x256xi32>
    %133 = arith.cmpi sge, %131, %132 : vector<4x256xi32>
    %134 = arith.andi %129, %133 : vector<4x256xi1>
    %c-1_i32_52 = arith.constant -1 : i32
    %135 = vector.broadcast %c-1_i32_52 : i32 to vector<4x256xi32>
    %136 = arith.addi %6, %135 : vector<4x256xi32>
    %c16_i32_53 = arith.constant 16 : i32
    %137 = vector.broadcast %c16_i32_53 : i32 to vector<4x256xi32>
    %138 = arith.cmpi slt, %136, %137 : vector<4x256xi32>
    %139 = arith.andi %134, %138 : vector<4x256xi1>
    %c16_i32_54 = arith.constant 16 : i32
    %140 = vector.broadcast %c16_i32_54 : i32 to vector<4x256xi32>
    %141 = arith.addi %4, %140 : vector<4x256xi32>
    %c0_i32_55 = arith.constant 0 : i32
    %142 = vector.broadcast %c0_i32_55 : i32 to vector<4x256xi32>
    %143 = arith.cmpi sge, %141, %142 : vector<4x256xi32>
    %c16_i32_56 = arith.constant 16 : i32
    %144 = vector.broadcast %c16_i32_56 : i32 to vector<4x256xi32>
    %145 = arith.addi %4, %144 : vector<4x256xi32>
    %c256_i32_57 = arith.constant 256 : i32
    %146 = vector.broadcast %c256_i32_57 : i32 to vector<4x256xi32>
    %147 = arith.cmpi slt, %145, %146 : vector<4x256xi32>
    %148 = arith.andi %143, %147 : vector<4x256xi1>
    %c0_i32_58 = arith.constant 0 : i32
    %149 = vector.broadcast %c0_i32_58 : i32 to vector<4x256xi32>
    %150 = arith.addi %6, %149 : vector<4x256xi32>
    %c0_i32_59 = arith.constant 0 : i32
    %151 = vector.broadcast %c0_i32_59 : i32 to vector<4x256xi32>
    %152 = arith.cmpi sge, %150, %151 : vector<4x256xi32>
    %153 = arith.andi %148, %152 : vector<4x256xi1>
    %c0_i32_60 = arith.constant 0 : i32
    %154 = vector.broadcast %c0_i32_60 : i32 to vector<4x256xi32>
    %155 = arith.addi %6, %154 : vector<4x256xi32>
    %c16_i32_61 = arith.constant 16 : i32
    %156 = vector.broadcast %c16_i32_61 : i32 to vector<4x256xi32>
    %157 = arith.cmpi slt, %155, %156 : vector<4x256xi32>
    %158 = arith.andi %153, %157 : vector<4x256xi1>
    %c16_i32_62 = arith.constant 16 : i32
    %159 = vector.broadcast %c16_i32_62 : i32 to vector<4x256xi32>
    %160 = arith.addi %4, %159 : vector<4x256xi32>
    %c0_i32_63 = arith.constant 0 : i32
    %161 = vector.broadcast %c0_i32_63 : i32 to vector<4x256xi32>
    %162 = arith.cmpi sge, %160, %161 : vector<4x256xi32>
    %c16_i32_64 = arith.constant 16 : i32
    %163 = vector.broadcast %c16_i32_64 : i32 to vector<4x256xi32>
    %164 = arith.addi %4, %163 : vector<4x256xi32>
    %c256_i32_65 = arith.constant 256 : i32
    %165 = vector.broadcast %c256_i32_65 : i32 to vector<4x256xi32>
    %166 = arith.cmpi slt, %164, %165 : vector<4x256xi32>
    %167 = arith.andi %162, %166 : vector<4x256xi1>
    %c1_i32_66 = arith.constant 1 : i32
    %168 = vector.broadcast %c1_i32_66 : i32 to vector<4x256xi32>
    %169 = arith.addi %6, %168 : vector<4x256xi32>
    %c0_i32_67 = arith.constant 0 : i32
    %170 = vector.broadcast %c0_i32_67 : i32 to vector<4x256xi32>
    %171 = arith.cmpi sge, %169, %170 : vector<4x256xi32>
    %172 = arith.andi %167, %171 : vector<4x256xi1>
    %c1_i32_68 = arith.constant 1 : i32
    %173 = vector.broadcast %c1_i32_68 : i32 to vector<4x256xi32>
    %174 = arith.addi %6, %173 : vector<4x256xi32>
    %c16_i32_69 = arith.constant 16 : i32
    %175 = vector.broadcast %c16_i32_69 : i32 to vector<4x256xi32>
    %176 = arith.cmpi slt, %174, %175 : vector<4x256xi32>
    %177 = arith.andi %172, %176 : vector<4x256xi1>
    %c0_70 = arith.constant 0 : index
    %c0_71 = arith.constant 0 : index
    %c0_72 = arith.constant 0 : index
    %178 = vector.load %arg1[%c0_70, %c0_71, %c0_72] : memref<2x4x256xf32, #tpu.memory_space<vmem>>, vector<1x4x256xf32>
    %179 = vector.shape_cast %178 : vector<1x4x256xf32> to vector<4x256xf32>
    %cst = arith.constant 0.000000e+00 : f32
    %180 = vector.broadcast %cst : f32 to vector<8x256xf32>
    %181 = vector.extract_strided_slice %179 {offsets = [0, 239], sizes = [4, 17], strides = [1, 1]} : vector<4x256xf32> to vector<4x17xf32>
    %182 = vector.extract_strided_slice %179 {offsets = [0, 0], sizes = [4, 239], strides = [1, 1]} : vector<4x256xf32> to vector<4x239xf32>
    %183 = tpu.concatenate %181, %182 in 1 : vector<4x17xf32>, vector<4x239xf32> -> vector<4x256xf32>
    %cst_73 = arith.constant 0.000000e+00 : f32
    %184 = vector.broadcast %cst_73 : f32 to vector<4x256xf32>
    %185 = arith.select %25, %183, %184 : vector<4x256xi1>, vector<4x256xf32>
    %186 = vector.extract_strided_slice %0 {offsets = [0, 0], sizes = [8, 4], strides = [1, 1]} : vector<8x36xf32> to vector<8x4xf32>
    %cst_74 = arith.constant dense<0.000000e+00> : vector<8x256xf32>
    %187 = tpu.matmul %186, %185, %cst_74 {dimension_numbers = #tpu.dot_dimension_numbers<[1], [0], [0], [1], [0, 0, 1, 1], [], []>} : vector<8x4xf32>, vector<4x256xf32>, vector<8x256xf32> -> vector<8x256xf32>
    %188 = arith.addf %180, %187 : vector<8x256xf32>
    %189 = vector.extract_strided_slice %179 {offsets = [0, 240], sizes = [4, 16], strides = [1, 1]} : vector<4x256xf32> to vector<4x16xf32>
    %190 = vector.extract_strided_slice %179 {offsets = [0, 0], sizes = [4, 240], strides = [1, 1]} : vector<4x256xf32> to vector<4x240xf32>
    %191 = tpu.concatenate %189, %190 in 1 : vector<4x16xf32>, vector<4x240xf32> -> vector<4x256xf32>
    %cst_75 = arith.constant 0.000000e+00 : f32
    %192 = vector.broadcast %cst_75 : f32 to vector<4x256xf32>
    %193 = arith.select %44, %191, %192 : vector<4x256xi1>, vector<4x256xf32>
    %194 = vector.extract_strided_slice %0 {offsets = [0, 4], sizes = [8, 4], strides = [1, 1]} : vector<8x36xf32> to vector<8x4xf32>
    %cst_76 = arith.constant dense<0.000000e+00> : vector<8x256xf32>
    %195 = tpu.matmul %194, %193, %cst_76 {dimension_numbers = #tpu.dot_dimension_numbers<[1], [0], [0], [1], [0, 0, 1, 1], [], []>} : vector<8x4xf32>, vector<4x256xf32>, vector<8x256xf32> -> vector<8x256xf32>
    %196 = arith.addf %188, %195 : vector<8x256xf32>
    %197 = vector.extract_strided_slice %179 {offsets = [0, 241], sizes = [4, 15], strides = [1, 1]} : vector<4x256xf32> to vector<4x15xf32>
    %198 = vector.extract_strided_slice %179 {offsets = [0, 0], sizes = [4, 241], strides = [1, 1]} : vector<4x256xf32> to vector<4x241xf32>
    %199 = tpu.concatenate %197, %198 in 1 : vector<4x15xf32>, vector<4x241xf32> -> vector<4x256xf32>
    %cst_77 = arith.constant 0.000000e+00 : f32
    %200 = vector.broadcast %cst_77 : f32 to vector<4x256xf32>
    %201 = arith.select %63, %199, %200 : vector<4x256xi1>, vector<4x256xf32>
    %202 = vector.extract_strided_slice %0 {offsets = [0, 8], sizes = [8, 4], strides = [1, 1]} : vector<8x36xf32> to vector<8x4xf32>
    %cst_78 = arith.constant dense<0.000000e+00> : vector<8x256xf32>
    %203 = tpu.matmul %202, %201, %cst_78 {dimension_numbers = #tpu.dot_dimension_numbers<[1], [0], [0], [1], [0, 0, 1, 1], [], []>} : vector<8x4xf32>, vector<4x256xf32>, vector<8x256xf32> -> vector<8x256xf32>
    %204 = arith.addf %196, %203 : vector<8x256xf32>
    %205 = vector.extract_strided_slice %179 {offsets = [0, 255], sizes = [4, 1], strides = [1, 1]} : vector<4x256xf32> to vector<4x1xf32>
    %206 = vector.extract_strided_slice %179 {offsets = [0, 0], sizes = [4, 255], strides = [1, 1]} : vector<4x256xf32> to vector<4x255xf32>
    %207 = tpu.concatenate %205, %206 in 1 : vector<4x1xf32>, vector<4x255xf32> -> vector<4x256xf32>
    %cst_79 = arith.constant 0.000000e+00 : f32
    %208 = vector.broadcast %cst_79 : f32 to vector<4x256xf32>
    %209 = arith.select %82, %207, %208 : vector<4x256xi1>, vector<4x256xf32>
    %210 = vector.extract_strided_slice %0 {offsets = [0, 12], sizes = [8, 4], strides = [1, 1]} : vector<8x36xf32> to vector<8x4xf32>
    %cst_80 = arith.constant dense<0.000000e+00> : vector<8x256xf32>
    %211 = tpu.matmul %210, %209, %cst_80 {dimension_numbers = #tpu.dot_dimension_numbers<[1], [0], [0], [1], [0, 0, 1, 1], [], []>} : vector<8x4xf32>, vector<4x256xf32>, vector<8x256xf32> -> vector<8x256xf32>
    %212 = arith.addf %204, %211 : vector<8x256xf32>
    %cst_81 = arith.constant 0.000000e+00 : f32
    %213 = vector.broadcast %cst_81 : f32 to vector<4x256xf32>
    %214 = arith.select %101, %179, %213 : vector<4x256xi1>, vector<4x256xf32>
    %215 = vector.extract_strided_slice %0 {offsets = [0, 16], sizes = [8, 4], strides = [1, 1]} : vector<8x36xf32> to vector<8x4xf32>
    %cst_82 = arith.constant dense<0.000000e+00> : vector<8x256xf32>
    %216 = tpu.matmul %215, %214, %cst_82 {dimension_numbers = #tpu.dot_dimension_numbers<[1], [0], [0], [1], [0, 0, 1, 1], [], []>} : vector<8x4xf32>, vector<4x256xf32>, vector<8x256xf32> -> vector<8x256xf32>
    %217 = arith.addf %212, %216 : vector<8x256xf32>
    %218 = vector.extract_strided_slice %179 {offsets = [0, 1], sizes = [4, 255], strides = [1, 1]} : vector<4x256xf32> to vector<4x255xf32>
    %219 = vector.extract_strided_slice %179 {offsets = [0, 0], sizes = [4, 1], strides = [1, 1]} : vector<4x256xf32> to vector<4x1xf32>
    %220 = tpu.concatenate %218, %219 in 1 : vector<4x255xf32>, vector<4x1xf32> -> vector<4x256xf32>
    %cst_83 = arith.constant 0.000000e+00 : f32
    %221 = vector.broadcast %cst_83 : f32 to vector<4x256xf32>
    %222 = arith.select %120, %220, %221 : vector<4x256xi1>, vector<4x256xf32>
    %223 = vector.extract_strided_slice %0 {offsets = [0, 20], sizes = [8, 4], strides = [1, 1]} : vector<8x36xf32> to vector<8x4xf32>
    %cst_84 = arith.constant dense<0.000000e+00> : vector<8x256xf32>
    %224 = tpu.matmul %223, %222, %cst_84 {dimension_numbers = #tpu.dot_dimension_numbers<[1], [0], [0], [1], [0, 0, 1, 1], [], []>} : vector<8x4xf32>, vector<4x256xf32>, vector<8x256xf32> -> vector<8x256xf32>
    %225 = arith.addf %217, %224 : vector<8x256xf32>
    %226 = vector.extract_strided_slice %179 {offsets = [0, 15], sizes = [4, 241], strides = [1, 1]} : vector<4x256xf32> to vector<4x241xf32>
    %227 = vector.extract_strided_slice %179 {offsets = [0, 0], sizes = [4, 15], strides = [1, 1]} : vector<4x256xf32> to vector<4x15xf32>
    %228 = tpu.concatenate %226, %227 in 1 : vector<4x241xf32>, vector<4x15xf32> -> vector<4x256xf32>
    %cst_85 = arith.constant 0.000000e+00 : f32
    %229 = vector.broadcast %cst_85 : f32 to vector<4x256xf32>
    %230 = arith.select %139, %228, %229 : vector<4x256xi1>, vector<4x256xf32>
    %231 = vector.extract_strided_slice %0 {offsets = [0, 24], sizes = [8, 4], strides = [1, 1]} : vector<8x36xf32> to vector<8x4xf32>
    %cst_86 = arith.constant dense<0.000000e+00> : vector<8x256xf32>
    %232 = tpu.matmul %231, %230, %cst_86 {dimension_numbers = #tpu.dot_dimension_numbers<[1], [0], [0], [1], [0, 0, 1, 1], [], []>} : vector<8x4xf32>, vector<4x256xf32>, vector<8x256xf32> -> vector<8x256xf32>
    %233 = arith.addf %225, %232 : vector<8x256xf32>
    %234 = vector.extract_strided_slice %179 {offsets = [0, 16], sizes = [4, 240], strides = [1, 1]} : vector<4x256xf32> to vector<4x240xf32>
    %235 = vector.extract_strided_slice %179 {offsets = [0, 0], sizes = [4, 16], strides = [1, 1]} : vector<4x256xf32> to vector<4x16xf32>
    %236 = tpu.concatenate %234, %235 in 1 : vector<4x240xf32>, vector<4x16xf32> -> vector<4x256xf32>
    %cst_87 = arith.constant 0.000000e+00 : f32
    %237 = vector.broadcast %cst_87 : f32 to vector<4x256xf32>
    %238 = arith.select %158, %236, %237 : vector<4x256xi1>, vector<4x256xf32>
    %239 = vector.extract_strided_slice %0 {offsets = [0, 28], sizes = [8, 4], strides = [1, 1]} : vector<8x36xf32> to vector<8x4xf32>
    %cst_88 = arith.constant dense<0.000000e+00> : vector<8x256xf32>
    %240 = tpu.matmul %239, %238, %cst_88 {dimension_numbers = #tpu.dot_dimension_numbers<[1], [0], [0], [1], [0, 0, 1, 1], [], []>} : vector<8x4xf32>, vector<4x256xf32>, vector<8x256xf32> -> vector<8x256xf32>
    %241 = arith.addf %233, %240 : vector<8x256xf32>
    %242 = vector.extract_strided_slice %179 {offsets = [0, 17], sizes = [4, 239], strides = [1, 1]} : vector<4x256xf32> to vector<4x239xf32>
    %243 = vector.extract_strided_slice %179 {offsets = [0, 0], sizes = [4, 17], strides = [1, 1]} : vector<4x256xf32> to vector<4x17xf32>
    %244 = tpu.concatenate %242, %243 in 1 : vector<4x239xf32>, vector<4x17xf32> -> vector<4x256xf32>
    %cst_89 = arith.constant 0.000000e+00 : f32
    %245 = vector.broadcast %cst_89 : f32 to vector<4x256xf32>
    %246 = arith.select %177, %244, %245 : vector<4x256xi1>, vector<4x256xf32>
    %247 = vector.extract_strided_slice %0 {offsets = [0, 32], sizes = [8, 4], strides = [1, 1]} : vector<8x36xf32> to vector<8x4xf32>
    %cst_90 = arith.constant dense<0.000000e+00> : vector<8x256xf32>
    %248 = tpu.matmul %247, %246, %cst_90 {dimension_numbers = #tpu.dot_dimension_numbers<[1], [0], [0], [1], [0, 0, 1, 1], [], []>} : vector<8x4xf32>, vector<4x256xf32>, vector<8x256xf32> -> vector<8x256xf32>
    %249 = arith.addf %241, %248 : vector<8x256xf32>
    %250 = vector.broadcast %1 : vector<8x1xf32> to vector<8x256xf32>
    %251 = arith.addf %249, %250 : vector<8x256xf32>
    %cst_91 = arith.constant 0.000000e+00 : f32
    %252 = vector.broadcast %cst_91 : f32 to vector<8x256xf32>
    %253 = arith.maximumf %251, %252 : vector<8x256xf32>
    %c0_92 = arith.constant 0 : index
    %c0_93 = arith.constant 0 : index
    %c0_94 = arith.constant 0 : index
    %254 = vector.load %arg2[%c0_92, %c0_93, %c0_94] : memref<2x4x256xf32, #tpu.memory_space<vmem>>, vector<1x4x256xf32>
    %255 = vector.shape_cast %254 : vector<1x4x256xf32> to vector<4x256xf32>
    %cst_95 = arith.constant 0.000000e+00 : f32
    %256 = vector.broadcast %cst_95 : f32 to vector<8x256xf32>
    %257 = vector.extract_strided_slice %255 {offsets = [0, 239], sizes = [4, 17], strides = [1, 1]} : vector<4x256xf32> to vector<4x17xf32>
    %258 = vector.extract_strided_slice %255 {offsets = [0, 0], sizes = [4, 239], strides = [1, 1]} : vector<4x256xf32> to vector<4x239xf32>
    %259 = tpu.concatenate %257, %258 in 1 : vector<4x17xf32>, vector<4x239xf32> -> vector<4x256xf32>
    %cst_96 = arith.constant 0.000000e+00 : f32
    %260 = vector.broadcast %cst_96 : f32 to vector<4x256xf32>
    %261 = arith.select %25, %259, %260 : vector<4x256xi1>, vector<4x256xf32>
    %262 = vector.extract_strided_slice %0 {offsets = [0, 0], sizes = [8, 4], strides = [1, 1]} : vector<8x36xf32> to vector<8x4xf32>
    %cst_97 = arith.constant dense<0.000000e+00> : vector<8x256xf32>
    %263 = tpu.matmul %262, %261, %cst_97 {dimension_numbers = #tpu.dot_dimension_numbers<[1], [0], [0], [1], [0, 0, 1, 1], [], []>} : vector<8x4xf32>, vector<4x256xf32>, vector<8x256xf32> -> vector<8x256xf32>
    %264 = arith.addf %256, %263 : vector<8x256xf32>
    %265 = vector.extract_strided_slice %255 {offsets = [0, 240], sizes = [4, 16], strides = [1, 1]} : vector<4x256xf32> to vector<4x16xf32>
    %266 = vector.extract_strided_slice %255 {offsets = [0, 0], sizes = [4, 240], strides = [1, 1]} : vector<4x256xf32> to vector<4x240xf32>
    %267 = tpu.concatenate %265, %266 in 1 : vector<4x16xf32>, vector<4x240xf32> -> vector<4x256xf32>
    %cst_98 = arith.constant 0.000000e+00 : f32
    %268 = vector.broadcast %cst_98 : f32 to vector<4x256xf32>
    %269 = arith.select %44, %267, %268 : vector<4x256xi1>, vector<4x256xf32>
    %270 = vector.extract_strided_slice %0 {offsets = [0, 4], sizes = [8, 4], strides = [1, 1]} : vector<8x36xf32> to vector<8x4xf32>
    %cst_99 = arith.constant dense<0.000000e+00> : vector<8x256xf32>
    %271 = tpu.matmul %270, %269, %cst_99 {dimension_numbers = #tpu.dot_dimension_numbers<[1], [0], [0], [1], [0, 0, 1, 1], [], []>} : vector<8x4xf32>, vector<4x256xf32>, vector<8x256xf32> -> vector<8x256xf32>
    %272 = arith.addf %264, %271 : vector<8x256xf32>
    %273 = vector.extract_strided_slice %255 {offsets = [0, 241], sizes = [4, 15], strides = [1, 1]} : vector<4x256xf32> to vector<4x15xf32>
    %274 = vector.extract_strided_slice %255 {offsets = [0, 0], sizes = [4, 241], strides = [1, 1]} : vector<4x256xf32> to vector<4x241xf32>
    %275 = tpu.concatenate %273, %274 in 1 : vector<4x15xf32>, vector<4x241xf32> -> vector<4x256xf32>
    %cst_100 = arith.constant 0.000000e+00 : f32
    %276 = vector.broadcast %cst_100 : f32 to vector<4x256xf32>
    %277 = arith.select %63, %275, %276 : vector<4x256xi1>, vector<4x256xf32>
    %278 = vector.extract_strided_slice %0 {offsets = [0, 8], sizes = [8, 4], strides = [1, 1]} : vector<8x36xf32> to vector<8x4xf32>
    %cst_101 = arith.constant dense<0.000000e+00> : vector<8x256xf32>
    %279 = tpu.matmul %278, %277, %cst_101 {dimension_numbers = #tpu.dot_dimension_numbers<[1], [0], [0], [1], [0, 0, 1, 1], [], []>} : vector<8x4xf32>, vector<4x256xf32>, vector<8x256xf32> -> vector<8x256xf32>
    %280 = arith.addf %272, %279 : vector<8x256xf32>
    %281 = vector.extract_strided_slice %255 {offsets = [0, 255], sizes = [4, 1], strides = [1, 1]} : vector<4x256xf32> to vector<4x1xf32>
    %282 = vector.extract_strided_slice %255 {offsets = [0, 0], sizes = [4, 255], strides = [1, 1]} : vector<4x256xf32> to vector<4x255xf32>
    %283 = tpu.concatenate %281, %282 in 1 : vector<4x1xf32>, vector<4x255xf32> -> vector<4x256xf32>
    %cst_102 = arith.constant 0.000000e+00 : f32
    %284 = vector.broadcast %cst_102 : f32 to vector<4x256xf32>
    %285 = arith.select %82, %283, %284 : vector<4x256xi1>, vector<4x256xf32>
    %286 = vector.extract_strided_slice %0 {offsets = [0, 12], sizes = [8, 4], strides = [1, 1]} : vector<8x36xf32> to vector<8x4xf32>
    %cst_103 = arith.constant dense<0.000000e+00> : vector<8x256xf32>
    %287 = tpu.matmul %286, %285, %cst_103 {dimension_numbers = #tpu.dot_dimension_numbers<[1], [0], [0], [1], [0, 0, 1, 1], [], []>} : vector<8x4xf32>, vector<4x256xf32>, vector<8x256xf32> -> vector<8x256xf32>
    %288 = arith.addf %280, %287 : vector<8x256xf32>
    %cst_104 = arith.constant 0.000000e+00 : f32
    %289 = vector.broadcast %cst_104 : f32 to vector<4x256xf32>
    %290 = arith.select %101, %255, %289 : vector<4x256xi1>, vector<4x256xf32>
    %291 = vector.extract_strided_slice %0 {offsets = [0, 16], sizes = [8, 4], strides = [1, 1]} : vector<8x36xf32> to vector<8x4xf32>
    %cst_105 = arith.constant dense<0.000000e+00> : vector<8x256xf32>
    %292 = tpu.matmul %291, %290, %cst_105 {dimension_numbers = #tpu.dot_dimension_numbers<[1], [0], [0], [1], [0, 0, 1, 1], [], []>} : vector<8x4xf32>, vector<4x256xf32>, vector<8x256xf32> -> vector<8x256xf32>
    %293 = arith.addf %288, %292 : vector<8x256xf32>
    %294 = vector.extract_strided_slice %255 {offsets = [0, 1], sizes = [4, 255], strides = [1, 1]} : vector<4x256xf32> to vector<4x255xf32>
    %295 = vector.extract_strided_slice %255 {offsets = [0, 0], sizes = [4, 1], strides = [1, 1]} : vector<4x256xf32> to vector<4x1xf32>
    %296 = tpu.concatenate %294, %295 in 1 : vector<4x255xf32>, vector<4x1xf32> -> vector<4x256xf32>
    %cst_106 = arith.constant 0.000000e+00 : f32
    %297 = vector.broadcast %cst_106 : f32 to vector<4x256xf32>
    %298 = arith.select %120, %296, %297 : vector<4x256xi1>, vector<4x256xf32>
    %299 = vector.extract_strided_slice %0 {offsets = [0, 20], sizes = [8, 4], strides = [1, 1]} : vector<8x36xf32> to vector<8x4xf32>
    %cst_107 = arith.constant dense<0.000000e+00> : vector<8x256xf32>
    %300 = tpu.matmul %299, %298, %cst_107 {dimension_numbers = #tpu.dot_dimension_numbers<[1], [0], [0], [1], [0, 0, 1, 1], [], []>} : vector<8x4xf32>, vector<4x256xf32>, vector<8x256xf32> -> vector<8x256xf32>
    %301 = arith.addf %293, %300 : vector<8x256xf32>
    %302 = vector.extract_strided_slice %255 {offsets = [0, 15], sizes = [4, 241], strides = [1, 1]} : vector<4x256xf32> to vector<4x241xf32>
    %303 = vector.extract_strided_slice %255 {offsets = [0, 0], sizes = [4, 15], strides = [1, 1]} : vector<4x256xf32> to vector<4x15xf32>
    %304 = tpu.concatenate %302, %303 in 1 : vector<4x241xf32>, vector<4x15xf32> -> vector<4x256xf32>
    %cst_108 = arith.constant 0.000000e+00 : f32
    %305 = vector.broadcast %cst_108 : f32 to vector<4x256xf32>
    %306 = arith.select %139, %304, %305 : vector<4x256xi1>, vector<4x256xf32>
    %307 = vector.extract_strided_slice %0 {offsets = [0, 24], sizes = [8, 4], strides = [1, 1]} : vector<8x36xf32> to vector<8x4xf32>
    %cst_109 = arith.constant dense<0.000000e+00> : vector<8x256xf32>
    %308 = tpu.matmul %307, %306, %cst_109 {dimension_numbers = #tpu.dot_dimension_numbers<[1], [0], [0], [1], [0, 0, 1, 1], [], []>} : vector<8x4xf32>, vector<4x256xf32>, vector<8x256xf32> -> vector<8x256xf32>
    %309 = arith.addf %301, %308 : vector<8x256xf32>
    %310 = vector.extract_strided_slice %255 {offsets = [0, 16], sizes = [4, 240], strides = [1, 1]} : vector<4x256xf32> to vector<4x240xf32>
    %311 = vector.extract_strided_slice %255 {offsets = [0, 0], sizes = [4, 16], strides = [1, 1]} : vector<4x256xf32> to vector<4x16xf32>
    %312 = tpu.concatenate %310, %311 in 1 : vector<4x240xf32>, vector<4x16xf32> -> vector<4x256xf32>
    %cst_110 = arith.constant 0.000000e+00 : f32
    %313 = vector.broadcast %cst_110 : f32 to vector<4x256xf32>
    %314 = arith.select %158, %312, %313 : vector<4x256xi1>, vector<4x256xf32>
    %315 = vector.extract_strided_slice %0 {offsets = [0, 28], sizes = [8, 4], strides = [1, 1]} : vector<8x36xf32> to vector<8x4xf32>
    %cst_111 = arith.constant dense<0.000000e+00> : vector<8x256xf32>
    %316 = tpu.matmul %315, %314, %cst_111 {dimension_numbers = #tpu.dot_dimension_numbers<[1], [0], [0], [1], [0, 0, 1, 1], [], []>} : vector<8x4xf32>, vector<4x256xf32>, vector<8x256xf32> -> vector<8x256xf32>
    %317 = arith.addf %309, %316 : vector<8x256xf32>
    %318 = vector.extract_strided_slice %255 {offsets = [0, 17], sizes = [4, 239], strides = [1, 1]} : vector<4x256xf32> to vector<4x239xf32>
    %319 = vector.extract_strided_slice %255 {offsets = [0, 0], sizes = [4, 17], strides = [1, 1]} : vector<4x256xf32> to vector<4x17xf32>
    %320 = tpu.concatenate %318, %319 in 1 : vector<4x239xf32>, vector<4x17xf32> -> vector<4x256xf32>
    %cst_112 = arith.constant 0.000000e+00 : f32
    %321 = vector.broadcast %cst_112 : f32 to vector<4x256xf32>
    %322 = arith.select %177, %320, %321 : vector<4x256xi1>, vector<4x256xf32>
    %323 = vector.extract_strided_slice %0 {offsets = [0, 32], sizes = [8, 4], strides = [1, 1]} : vector<8x36xf32> to vector<8x4xf32>
    %cst_113 = arith.constant dense<0.000000e+00> : vector<8x256xf32>
    %324 = tpu.matmul %323, %322, %cst_113 {dimension_numbers = #tpu.dot_dimension_numbers<[1], [0], [0], [1], [0, 0, 1, 1], [], []>} : vector<8x4xf32>, vector<4x256xf32>, vector<8x256xf32> -> vector<8x256xf32>
    %325 = arith.addf %317, %324 : vector<8x256xf32>
    %326 = vector.broadcast %1 : vector<8x1xf32> to vector<8x256xf32>
    %327 = arith.addf %325, %326 : vector<8x256xf32>
    %cst_114 = arith.constant 0.000000e+00 : f32
    %328 = vector.broadcast %cst_114 : f32 to vector<8x256xf32>
    %329 = arith.maximumf %327, %328 : vector<8x256xf32>
    %330 = arith.subf %253, %329 : vector<8x256xf32>
    %331 = math.absf %330 : vector<8x256xf32>
    %332 = arith.mulf %331, %3 : vector<8x256xf32>
    %cst_115 = arith.constant dense<0.000000e+00> : vector<8xf32>
    %333 = vector.multi_reduction <add>, %332, %cst_115 [1] : vector<8x256xf32> to vector<8xf32>
    %334 = vector.shape_cast %333 : vector<8xf32> to vector<8x1xf32>
    %cst_116 = arith.constant dense<0.000000e+00> : vector<1xf32>
    %335 = vector.multi_reduction <add>, %334, %cst_116 [0] : vector<8x1xf32> to vector<1xf32>
    %336 = vector.shape_cast %335 : vector<1xf32> to vector<1x1xf32>
    %337 = arith.addf %336, %2 : vector<1x1xf32>
    %c1 = arith.constant 1 : index
    %c0_117 = arith.constant 0 : index
    %c0_118 = arith.constant 0 : index
    %338 = vector.load %arg1[%c1, %c0_117, %c0_118] : memref<2x4x256xf32, #tpu.memory_space<vmem>>, vector<1x4x256xf32>
    %339 = vector.shape_cast %338 : vector<1x4x256xf32> to vector<4x256xf32>
    %cst_119 = arith.constant 0.000000e+00 : f32
    %340 = vector.broadcast %cst_119 : f32 to vector<8x256xf32>
    %341 = vector.extract_strided_slice %339 {offsets = [0, 239], sizes = [4, 17], strides = [1, 1]} : vector<4x256xf32> to vector<4x17xf32>
    %342 = vector.extract_strided_slice %339 {offsets = [0, 0], sizes = [4, 239], strides = [1, 1]} : vector<4x256xf32> to vector<4x239xf32>
    %343 = tpu.concatenate %341, %342 in 1 : vector<4x17xf32>, vector<4x239xf32> -> vector<4x256xf32>
    %cst_120 = arith.constant 0.000000e+00 : f32
    %344 = vector.broadcast %cst_120 : f32 to vector<4x256xf32>
    %345 = arith.select %25, %343, %344 : vector<4x256xi1>, vector<4x256xf32>
    %346 = vector.extract_strided_slice %0 {offsets = [0, 0], sizes = [8, 4], strides = [1, 1]} : vector<8x36xf32> to vector<8x4xf32>
    %cst_121 = arith.constant dense<0.000000e+00> : vector<8x256xf32>
    %347 = tpu.matmul %346, %345, %cst_121 {dimension_numbers = #tpu.dot_dimension_numbers<[1], [0], [0], [1], [0, 0, 1, 1], [], []>} : vector<8x4xf32>, vector<4x256xf32>, vector<8x256xf32> -> vector<8x256xf32>
    %348 = arith.addf %340, %347 : vector<8x256xf32>
    %349 = vector.extract_strided_slice %339 {offsets = [0, 240], sizes = [4, 16], strides = [1, 1]} : vector<4x256xf32> to vector<4x16xf32>
    %350 = vector.extract_strided_slice %339 {offsets = [0, 0], sizes = [4, 240], strides = [1, 1]} : vector<4x256xf32> to vector<4x240xf32>
    %351 = tpu.concatenate %349, %350 in 1 : vector<4x16xf32>, vector<4x240xf32> -> vector<4x256xf32>
    %cst_122 = arith.constant 0.000000e+00 : f32
    %352 = vector.broadcast %cst_122 : f32 to vector<4x256xf32>
    %353 = arith.select %44, %351, %352 : vector<4x256xi1>, vector<4x256xf32>
    %354 = vector.extract_strided_slice %0 {offsets = [0, 4], sizes = [8, 4], strides = [1, 1]} : vector<8x36xf32> to vector<8x4xf32>
    %cst_123 = arith.constant dense<0.000000e+00> : vector<8x256xf32>
    %355 = tpu.matmul %354, %353, %cst_123 {dimension_numbers = #tpu.dot_dimension_numbers<[1], [0], [0], [1], [0, 0, 1, 1], [], []>} : vector<8x4xf32>, vector<4x256xf32>, vector<8x256xf32> -> vector<8x256xf32>
    %356 = arith.addf %348, %355 : vector<8x256xf32>
    %357 = vector.extract_strided_slice %339 {offsets = [0, 241], sizes = [4, 15], strides = [1, 1]} : vector<4x256xf32> to vector<4x15xf32>
    %358 = vector.extract_strided_slice %339 {offsets = [0, 0], sizes = [4, 241], strides = [1, 1]} : vector<4x256xf32> to vector<4x241xf32>
    %359 = tpu.concatenate %357, %358 in 1 : vector<4x15xf32>, vector<4x241xf32> -> vector<4x256xf32>
    %cst_124 = arith.constant 0.000000e+00 : f32
    %360 = vector.broadcast %cst_124 : f32 to vector<4x256xf32>
    %361 = arith.select %63, %359, %360 : vector<4x256xi1>, vector<4x256xf32>
    %362 = vector.extract_strided_slice %0 {offsets = [0, 8], sizes = [8, 4], strides = [1, 1]} : vector<8x36xf32> to vector<8x4xf32>
    %cst_125 = arith.constant dense<0.000000e+00> : vector<8x256xf32>
    %363 = tpu.matmul %362, %361, %cst_125 {dimension_numbers = #tpu.dot_dimension_numbers<[1], [0], [0], [1], [0, 0, 1, 1], [], []>} : vector<8x4xf32>, vector<4x256xf32>, vector<8x256xf32> -> vector<8x256xf32>
    %364 = arith.addf %356, %363 : vector<8x256xf32>
    %365 = vector.extract_strided_slice %339 {offsets = [0, 255], sizes = [4, 1], strides = [1, 1]} : vector<4x256xf32> to vector<4x1xf32>
    %366 = vector.extract_strided_slice %339 {offsets = [0, 0], sizes = [4, 255], strides = [1, 1]} : vector<4x256xf32> to vector<4x255xf32>
    %367 = tpu.concatenate %365, %366 in 1 : vector<4x1xf32>, vector<4x255xf32> -> vector<4x256xf32>
    %cst_126 = arith.constant 0.000000e+00 : f32
    %368 = vector.broadcast %cst_126 : f32 to vector<4x256xf32>
    %369 = arith.select %82, %367, %368 : vector<4x256xi1>, vector<4x256xf32>
    %370 = vector.extract_strided_slice %0 {offsets = [0, 12], sizes = [8, 4], strides = [1, 1]} : vector<8x36xf32> to vector<8x4xf32>
    %cst_127 = arith.constant dense<0.000000e+00> : vector<8x256xf32>
    %371 = tpu.matmul %370, %369, %cst_127 {dimension_numbers = #tpu.dot_dimension_numbers<[1], [0], [0], [1], [0, 0, 1, 1], [], []>} : vector<8x4xf32>, vector<4x256xf32>, vector<8x256xf32> -> vector<8x256xf32>
    %372 = arith.addf %364, %371 : vector<8x256xf32>
    %cst_128 = arith.constant 0.000000e+00 : f32
    %373 = vector.broadcast %cst_128 : f32 to vector<4x256xf32>
    %374 = arith.select %101, %339, %373 : vector<4x256xi1>, vector<4x256xf32>
    %375 = vector.extract_strided_slice %0 {offsets = [0, 16], sizes = [8, 4], strides = [1, 1]} : vector<8x36xf32> to vector<8x4xf32>
    %cst_129 = arith.constant dense<0.000000e+00> : vector<8x256xf32>
    %376 = tpu.matmul %375, %374, %cst_129 {dimension_numbers = #tpu.dot_dimension_numbers<[1], [0], [0], [1], [0, 0, 1, 1], [], []>} : vector<8x4xf32>, vector<4x256xf32>, vector<8x256xf32> -> vector<8x256xf32>
    %377 = arith.addf %372, %376 : vector<8x256xf32>
    %378 = vector.extract_strided_slice %339 {offsets = [0, 1], sizes = [4, 255], strides = [1, 1]} : vector<4x256xf32> to vector<4x255xf32>
    %379 = vector.extract_strided_slice %339 {offsets = [0, 0], sizes = [4, 1], strides = [1, 1]} : vector<4x256xf32> to vector<4x1xf32>
    %380 = tpu.concatenate %378, %379 in 1 : vector<4x255xf32>, vector<4x1xf32> -> vector<4x256xf32>
    %cst_130 = arith.constant 0.000000e+00 : f32
    %381 = vector.broadcast %cst_130 : f32 to vector<4x256xf32>
    %382 = arith.select %120, %380, %381 : vector<4x256xi1>, vector<4x256xf32>
    %383 = vector.extract_strided_slice %0 {offsets = [0, 20], sizes = [8, 4], strides = [1, 1]} : vector<8x36xf32> to vector<8x4xf32>
    %cst_131 = arith.constant dense<0.000000e+00> : vector<8x256xf32>
    %384 = tpu.matmul %383, %382, %cst_131 {dimension_numbers = #tpu.dot_dimension_numbers<[1], [0], [0], [1], [0, 0, 1, 1], [], []>} : vector<8x4xf32>, vector<4x256xf32>, vector<8x256xf32> -> vector<8x256xf32>
    %385 = arith.addf %377, %384 : vector<8x256xf32>
    %386 = vector.extract_strided_slice %339 {offsets = [0, 15], sizes = [4, 241], strides = [1, 1]} : vector<4x256xf32> to vector<4x241xf32>
    %387 = vector.extract_strided_slice %339 {offsets = [0, 0], sizes = [4, 15], strides = [1, 1]} : vector<4x256xf32> to vector<4x15xf32>
    %388 = tpu.concatenate %386, %387 in 1 : vector<4x241xf32>, vector<4x15xf32> -> vector<4x256xf32>
    %cst_132 = arith.constant 0.000000e+00 : f32
    %389 = vector.broadcast %cst_132 : f32 to vector<4x256xf32>
    %390 = arith.select %139, %388, %389 : vector<4x256xi1>, vector<4x256xf32>
    %391 = vector.extract_strided_slice %0 {offsets = [0, 24], sizes = [8, 4], strides = [1, 1]} : vector<8x36xf32> to vector<8x4xf32>
    %cst_133 = arith.constant dense<0.000000e+00> : vector<8x256xf32>
    %392 = tpu.matmul %391, %390, %cst_133 {dimension_numbers = #tpu.dot_dimension_numbers<[1], [0], [0], [1], [0, 0, 1, 1], [], []>} : vector<8x4xf32>, vector<4x256xf32>, vector<8x256xf32> -> vector<8x256xf32>
    %393 = arith.addf %385, %392 : vector<8x256xf32>
    %394 = vector.extract_strided_slice %339 {offsets = [0, 16], sizes = [4, 240], strides = [1, 1]} : vector<4x256xf32> to vector<4x240xf32>
    %395 = vector.extract_strided_slice %339 {offsets = [0, 0], sizes = [4, 16], strides = [1, 1]} : vector<4x256xf32> to vector<4x16xf32>
    %396 = tpu.concatenate %394, %395 in 1 : vector<4x240xf32>, vector<4x16xf32> -> vector<4x256xf32>
    %cst_134 = arith.constant 0.000000e+00 : f32
    %397 = vector.broadcast %cst_134 : f32 to vector<4x256xf32>
    %398 = arith.select %158, %396, %397 : vector<4x256xi1>, vector<4x256xf32>
    %399 = vector.extract_strided_slice %0 {offsets = [0, 28], sizes = [8, 4], strides = [1, 1]} : vector<8x36xf32> to vector<8x4xf32>
    %cst_135 = arith.constant dense<0.000000e+00> : vector<8x256xf32>
    %400 = tpu.matmul %399, %398, %cst_135 {dimension_numbers = #tpu.dot_dimension_numbers<[1], [0], [0], [1], [0, 0, 1, 1], [], []>} : vector<8x4xf32>, vector<4x256xf32>, vector<8x256xf32> -> vector<8x256xf32>
    %401 = arith.addf %393, %400 : vector<8x256xf32>
    %402 = vector.extract_strided_slice %339 {offsets = [0, 17], sizes = [4, 239], strides = [1, 1]} : vector<4x256xf32> to vector<4x239xf32>
    %403 = vector.extract_strided_slice %339 {offsets = [0, 0], sizes = [4, 17], strides = [1, 1]} : vector<4x256xf32> to vector<4x17xf32>
    %404 = tpu.concatenate %402, %403 in 1 : vector<4x239xf32>, vector<4x17xf32> -> vector<4x256xf32>
    %cst_136 = arith.constant 0.000000e+00 : f32
    %405 = vector.broadcast %cst_136 : f32 to vector<4x256xf32>
    %406 = arith.select %177, %404, %405 : vector<4x256xi1>, vector<4x256xf32>
    %407 = vector.extract_strided_slice %0 {offsets = [0, 32], sizes = [8, 4], strides = [1, 1]} : vector<8x36xf32> to vector<8x4xf32>
    %cst_137 = arith.constant dense<0.000000e+00> : vector<8x256xf32>
    %408 = tpu.matmul %407, %406, %cst_137 {dimension_numbers = #tpu.dot_dimension_numbers<[1], [0], [0], [1], [0, 0, 1, 1], [], []>} : vector<8x4xf32>, vector<4x256xf32>, vector<8x256xf32> -> vector<8x256xf32>
    %409 = arith.addf %401, %408 : vector<8x256xf32>
    %410 = vector.broadcast %1 : vector<8x1xf32> to vector<8x256xf32>
    %411 = arith.addf %409, %410 : vector<8x256xf32>
    %cst_138 = arith.constant 0.000000e+00 : f32
    %412 = vector.broadcast %cst_138 : f32 to vector<8x256xf32>
    %413 = arith.maximumf %411, %412 : vector<8x256xf32>
    %c1_139 = arith.constant 1 : index
    %c0_140 = arith.constant 0 : index
    %c0_141 = arith.constant 0 : index
    %414 = vector.load %arg2[%c1_139, %c0_140, %c0_141] : memref<2x4x256xf32, #tpu.memory_space<vmem>>, vector<1x4x256xf32>
    %415 = vector.shape_cast %414 : vector<1x4x256xf32> to vector<4x256xf32>
    %cst_142 = arith.constant 0.000000e+00 : f32
    %416 = vector.broadcast %cst_142 : f32 to vector<8x256xf32>
    %417 = vector.extract_strided_slice %415 {offsets = [0, 239], sizes = [4, 17], strides = [1, 1]} : vector<4x256xf32> to vector<4x17xf32>
    %418 = vector.extract_strided_slice %415 {offsets = [0, 0], sizes = [4, 239], strides = [1, 1]} : vector<4x256xf32> to vector<4x239xf32>
    %419 = tpu.concatenate %417, %418 in 1 : vector<4x17xf32>, vector<4x239xf32> -> vector<4x256xf32>
    %cst_143 = arith.constant 0.000000e+00 : f32
    %420 = vector.broadcast %cst_143 : f32 to vector<4x256xf32>
    %421 = arith.select %25, %419, %420 : vector<4x256xi1>, vector<4x256xf32>
    %422 = vector.extract_strided_slice %0 {offsets = [0, 0], sizes = [8, 4], strides = [1, 1]} : vector<8x36xf32> to vector<8x4xf32>
    %cst_144 = arith.constant dense<0.000000e+00> : vector<8x256xf32>
    %423 = tpu.matmul %422, %421, %cst_144 {dimension_numbers = #tpu.dot_dimension_numbers<[1], [0], [0], [1], [0, 0, 1, 1], [], []>} : vector<8x4xf32>, vector<4x256xf32>, vector<8x256xf32> -> vector<8x256xf32>
    %424 = arith.addf %416, %423 : vector<8x256xf32>
    %425 = vector.extract_strided_slice %415 {offsets = [0, 240], sizes = [4, 16], strides = [1, 1]} : vector<4x256xf32> to vector<4x16xf32>
    %426 = vector.extract_strided_slice %415 {offsets = [0, 0], sizes = [4, 240], strides = [1, 1]} : vector<4x256xf32> to vector<4x240xf32>
    %427 = tpu.concatenate %425, %426 in 1 : vector<4x16xf32>, vector<4x240xf32> -> vector<4x256xf32>
    %cst_145 = arith.constant 0.000000e+00 : f32
    %428 = vector.broadcast %cst_145 : f32 to vector<4x256xf32>
    %429 = arith.select %44, %427, %428 : vector<4x256xi1>, vector<4x256xf32>
    %430 = vector.extract_strided_slice %0 {offsets = [0, 4], sizes = [8, 4], strides = [1, 1]} : vector<8x36xf32> to vector<8x4xf32>
    %cst_146 = arith.constant dense<0.000000e+00> : vector<8x256xf32>
    %431 = tpu.matmul %430, %429, %cst_146 {dimension_numbers = #tpu.dot_dimension_numbers<[1], [0], [0], [1], [0, 0, 1, 1], [], []>} : vector<8x4xf32>, vector<4x256xf32>, vector<8x256xf32> -> vector<8x256xf32>
    %432 = arith.addf %424, %431 : vector<8x256xf32>
    %433 = vector.extract_strided_slice %415 {offsets = [0, 241], sizes = [4, 15], strides = [1, 1]} : vector<4x256xf32> to vector<4x15xf32>
    %434 = vector.extract_strided_slice %415 {offsets = [0, 0], sizes = [4, 241], strides = [1, 1]} : vector<4x256xf32> to vector<4x241xf32>
    %435 = tpu.concatenate %433, %434 in 1 : vector<4x15xf32>, vector<4x241xf32> -> vector<4x256xf32>
    %cst_147 = arith.constant 0.000000e+00 : f32
    %436 = vector.broadcast %cst_147 : f32 to vector<4x256xf32>
    %437 = arith.select %63, %435, %436 : vector<4x256xi1>, vector<4x256xf32>
    %438 = vector.extract_strided_slice %0 {offsets = [0, 8], sizes = [8, 4], strides = [1, 1]} : vector<8x36xf32> to vector<8x4xf32>
    %cst_148 = arith.constant dense<0.000000e+00> : vector<8x256xf32>
    %439 = tpu.matmul %438, %437, %cst_148 {dimension_numbers = #tpu.dot_dimension_numbers<[1], [0], [0], [1], [0, 0, 1, 1], [], []>} : vector<8x4xf32>, vector<4x256xf32>, vector<8x256xf32> -> vector<8x256xf32>
    %440 = arith.addf %432, %439 : vector<8x256xf32>
    %441 = vector.extract_strided_slice %415 {offsets = [0, 255], sizes = [4, 1], strides = [1, 1]} : vector<4x256xf32> to vector<4x1xf32>
    %442 = vector.extract_strided_slice %415 {offsets = [0, 0], sizes = [4, 255], strides = [1, 1]} : vector<4x256xf32> to vector<4x255xf32>
    %443 = tpu.concatenate %441, %442 in 1 : vector<4x1xf32>, vector<4x255xf32> -> vector<4x256xf32>
    %cst_149 = arith.constant 0.000000e+00 : f32
    %444 = vector.broadcast %cst_149 : f32 to vector<4x256xf32>
    %445 = arith.select %82, %443, %444 : vector<4x256xi1>, vector<4x256xf32>
    %446 = vector.extract_strided_slice %0 {offsets = [0, 12], sizes = [8, 4], strides = [1, 1]} : vector<8x36xf32> to vector<8x4xf32>
    %cst_150 = arith.constant dense<0.000000e+00> : vector<8x256xf32>
    %447 = tpu.matmul %446, %445, %cst_150 {dimension_numbers = #tpu.dot_dimension_numbers<[1], [0], [0], [1], [0, 0, 1, 1], [], []>} : vector<8x4xf32>, vector<4x256xf32>, vector<8x256xf32> -> vector<8x256xf32>
    %448 = arith.addf %440, %447 : vector<8x256xf32>
    %cst_151 = arith.constant 0.000000e+00 : f32
    %449 = vector.broadcast %cst_151 : f32 to vector<4x256xf32>
    %450 = arith.select %101, %415, %449 : vector<4x256xi1>, vector<4x256xf32>
    %451 = vector.extract_strided_slice %0 {offsets = [0, 16], sizes = [8, 4], strides = [1, 1]} : vector<8x36xf32> to vector<8x4xf32>
    %cst_152 = arith.constant dense<0.000000e+00> : vector<8x256xf32>
    %452 = tpu.matmul %451, %450, %cst_152 {dimension_numbers = #tpu.dot_dimension_numbers<[1], [0], [0], [1], [0, 0, 1, 1], [], []>} : vector<8x4xf32>, vector<4x256xf32>, vector<8x256xf32> -> vector<8x256xf32>
    %453 = arith.addf %448, %452 : vector<8x256xf32>
    %454 = vector.extract_strided_slice %415 {offsets = [0, 1], sizes = [4, 255], strides = [1, 1]} : vector<4x256xf32> to vector<4x255xf32>
    %455 = vector.extract_strided_slice %415 {offsets = [0, 0], sizes = [4, 1], strides = [1, 1]} : vector<4x256xf32> to vector<4x1xf32>
    %456 = tpu.concatenate %454, %455 in 1 : vector<4x255xf32>, vector<4x1xf32> -> vector<4x256xf32>
    %cst_153 = arith.constant 0.000000e+00 : f32
    %457 = vector.broadcast %cst_153 : f32 to vector<4x256xf32>
    %458 = arith.select %120, %456, %457 : vector<4x256xi1>, vector<4x256xf32>
    %459 = vector.extract_strided_slice %0 {offsets = [0, 20], sizes = [8, 4], strides = [1, 1]} : vector<8x36xf32> to vector<8x4xf32>
    %cst_154 = arith.constant dense<0.000000e+00> : vector<8x256xf32>
    %460 = tpu.matmul %459, %458, %cst_154 {dimension_numbers = #tpu.dot_dimension_numbers<[1], [0], [0], [1], [0, 0, 1, 1], [], []>} : vector<8x4xf32>, vector<4x256xf32>, vector<8x256xf32> -> vector<8x256xf32>
    %461 = arith.addf %453, %460 : vector<8x256xf32>
    %462 = vector.extract_strided_slice %415 {offsets = [0, 15], sizes = [4, 241], strides = [1, 1]} : vector<4x256xf32> to vector<4x241xf32>
    %463 = vector.extract_strided_slice %415 {offsets = [0, 0], sizes = [4, 15], strides = [1, 1]} : vector<4x256xf32> to vector<4x15xf32>
    %464 = tpu.concatenate %462, %463 in 1 : vector<4x241xf32>, vector<4x15xf32> -> vector<4x256xf32>
    %cst_155 = arith.constant 0.000000e+00 : f32
    %465 = vector.broadcast %cst_155 : f32 to vector<4x256xf32>
    %466 = arith.select %139, %464, %465 : vector<4x256xi1>, vector<4x256xf32>
    %467 = vector.extract_strided_slice %0 {offsets = [0, 24], sizes = [8, 4], strides = [1, 1]} : vector<8x36xf32> to vector<8x4xf32>
    %cst_156 = arith.constant dense<0.000000e+00> : vector<8x256xf32>
    %468 = tpu.matmul %467, %466, %cst_156 {dimension_numbers = #tpu.dot_dimension_numbers<[1], [0], [0], [1], [0, 0, 1, 1], [], []>} : vector<8x4xf32>, vector<4x256xf32>, vector<8x256xf32> -> vector<8x256xf32>
    %469 = arith.addf %461, %468 : vector<8x256xf32>
    %470 = vector.extract_strided_slice %415 {offsets = [0, 16], sizes = [4, 240], strides = [1, 1]} : vector<4x256xf32> to vector<4x240xf32>
    %471 = vector.extract_strided_slice %415 {offsets = [0, 0], sizes = [4, 16], strides = [1, 1]} : vector<4x256xf32> to vector<4x16xf32>
    %472 = tpu.concatenate %470, %471 in 1 : vector<4x240xf32>, vector<4x16xf32> -> vector<4x256xf32>
    %cst_157 = arith.constant 0.000000e+00 : f32
    %473 = vector.broadcast %cst_157 : f32 to vector<4x256xf32>
    %474 = arith.select %158, %472, %473 : vector<4x256xi1>, vector<4x256xf32>
    %475 = vector.extract_strided_slice %0 {offsets = [0, 28], sizes = [8, 4], strides = [1, 1]} : vector<8x36xf32> to vector<8x4xf32>
    %cst_158 = arith.constant dense<0.000000e+00> : vector<8x256xf32>
    %476 = tpu.matmul %475, %474, %cst_158 {dimension_numbers = #tpu.dot_dimension_numbers<[1], [0], [0], [1], [0, 0, 1, 1], [], []>} : vector<8x4xf32>, vector<4x256xf32>, vector<8x256xf32> -> vector<8x256xf32>
    %477 = arith.addf %469, %476 : vector<8x256xf32>
    %478 = vector.extract_strided_slice %415 {offsets = [0, 17], sizes = [4, 239], strides = [1, 1]} : vector<4x256xf32> to vector<4x239xf32>
    %479 = vector.extract_strided_slice %415 {offsets = [0, 0], sizes = [4, 17], strides = [1, 1]} : vector<4x256xf32> to vector<4x17xf32>
    %480 = tpu.concatenate %478, %479 in 1 : vector<4x239xf32>, vector<4x17xf32> -> vector<4x256xf32>
    %cst_159 = arith.constant 0.000000e+00 : f32
    %481 = vector.broadcast %cst_159 : f32 to vector<4x256xf32>
    %482 = arith.select %177, %480, %481 : vector<4x256xi1>, vector<4x256xf32>
    %483 = vector.extract_strided_slice %0 {offsets = [0, 32], sizes = [8, 4], strides = [1, 1]} : vector<8x36xf32> to vector<8x4xf32>
    %cst_160 = arith.constant dense<0.000000e+00> : vector<8x256xf32>
    %484 = tpu.matmul %483, %482, %cst_160 {dimension_numbers = #tpu.dot_dimension_numbers<[1], [0], [0], [1], [0, 0, 1, 1], [], []>} : vector<8x4xf32>, vector<4x256xf32>, vector<8x256xf32> -> vector<8x256xf32>
    %485 = arith.addf %477, %484 : vector<8x256xf32>
    %486 = vector.broadcast %1 : vector<8x1xf32> to vector<8x256xf32>
    %487 = arith.addf %485, %486 : vector<8x256xf32>
    %cst_161 = arith.constant 0.000000e+00 : f32
    %488 = vector.broadcast %cst_161 : f32 to vector<8x256xf32>
    %489 = arith.maximumf %487, %488 : vector<8x256xf32>
    %490 = arith.subf %413, %489 : vector<8x256xf32>
    %491 = math.absf %490 : vector<8x256xf32>
    %492 = arith.mulf %491, %3 : vector<8x256xf32>
    %cst_162 = arith.constant dense<0.000000e+00> : vector<8xf32>
    %493 = vector.multi_reduction <add>, %492, %cst_162 [1] : vector<8x256xf32> to vector<8xf32>
    %494 = vector.shape_cast %493 : vector<8xf32> to vector<8x1xf32>
    %cst_163 = arith.constant dense<0.000000e+00> : vector<1xf32>
    %495 = vector.multi_reduction <add>, %494, %cst_163 [0] : vector<8x1xf32> to vector<1xf32>
    %496 = vector.shape_cast %495 : vector<1xf32> to vector<1x1xf32>
    %497 = arith.addf %496, %2 : vector<1x1xf32>
    %498 = tpu.concatenate %337, %497 in 1 : vector<1x1xf32>, vector<1x1xf32> -> vector<1x2xf32>
    %cst_164 = arith.constant 0.000000e+00 : f32
    %499 = vector.broadcast %cst_164 : f32 to vector<1x2xf32>
    %500 = arith.subf %499, %498 : vector<1x2xf32>
    %501 = math.exp %500 : vector<1x2xf32>
    %cst_165 = arith.constant 1.000000e+00 : f32
    %502 = vector.broadcast %cst_165 : f32 to vector<1x2xf32>
    %503 = arith.addf %502, %501 : vector<1x2xf32>
    %cst_166 = arith.constant 1.000000e+00 : f32
    %504 = vector.broadcast %cst_166 : f32 to vector<1x2xf32>
    %505 = arith.divf %504, %503 : vector<1x2xf32>
    %c0_167 = arith.constant 0 : index
    %c0_168 = arith.constant 0 : index
    %506 = vector.load %arg4[%c0_167, %c0_168] : memref<1x2xf32, #tpu.memory_space<vmem>>, vector<1x2xf32>
    tpu.vector_store %arg4[%c0_167, %c0_168], %505 {strides = array<i32>} : memref<1x2xf32, #tpu.memory_space<vmem>>, vector<1x2xf32>,
    return
  }
  func.func @transform_0(%arg0: i32) -> (i32, i32, i32) {
    %c0_i32 = arith.constant 0 : i32
    %c0_i32_0 = arith.constant 0 : i32
    %c0_i32_1 = arith.constant 0 : i32
    %c0_i32_2 = arith.constant 0 : i32
    return %c0_i32, %c0_i32_0, %c0_i32_1 : i32, i32, i32
  }
  func.func @transform_1(%arg0: i32) -> (i32, i32, i32) {
    %c0_i32 = arith.constant 0 : i32
    %c0_i32_0 = arith.constant 0 : i32
    %c0_i32_1 = arith.constant 0 : i32
    %c0_i32_2 = arith.constant 0 : i32
    return %c0_i32, %c0_i32_0, %c0_i32_1 : i32, i32, i32
  }
  func.func @transform_2(%arg0: i32) -> (i32, i32) {
    %c0_i32 = arith.constant 0 : i32
    %c0_i32_0 = arith.constant 0 : i32
    %c0_i32_1 = arith.constant 0 : i32
    return %c0_i32, %c0_i32_0 : i32, i32
  }
  func.func @transform_3(%arg0: i32) -> (i32, i32) {
    %c0_i32 = arith.constant 0 : i32
    %c0_i32_0 = arith.constant 0 : i32
    %c0_i32_1 = arith.constant 0 : i32
    return %c0_i32, %c0_i32_0 : i32, i32
  }
}

</mosaic_0001>

<llo_original>
// kernel: siamese_forward.1
$region0: #{siamese_forward.1}
  #allocation0 [shape = 'u32[]', space=smem, size = 0x4, offset = 0x4, fixed_abs, tag = 'smem constant byte address 0x4 - core index']
  #allocation1 [shape = 'u32[72,128]{1,0:T(1,128)}', space=vmem, size = 0x9000, scoped, tag = 'internal scratch']
  %s0 = inlined_call_operand.vmem [shape: f32[2,4,256], index: 0, kind: input, shape index: {}]
  %s1 = inlined_call_operand.vmem [shape: f32[2,4,256], index: 1, kind: input, shape index: {}]
  %s2 = inlined_call_operand.vmem [shape: f32[8,384], index: 2, kind: input, shape index: {}]
  %s3 = inlined_call_operand.hbm [shape: f32[1,2], index: 3, kind: output, shape index: {}]
  %s4 = sld [smem:[#allocation0]]
  $region22: #{siamese_forward.1} parent=0
    _
  %s6 = ssub.s32 1, %s4
  %s7 = scalar_select 0, %s6, %s4
  $region1: #{siamese_forward.1} parent=0
    #allocation2 [shape = 'u8[512]{0}', space=vmem, size = 0x400, scoped, tag = 'output window, operand 0, single buffered']
    #allocation3 [shape = 's32[1]{0}', space=sflag, size = 0x4, scoped, tag = 'scoped memory for siamese_forward.1']
    %8 = vsyncpa [#allocation3], 0
    // Predicated region
    $region2: #{siamese_forward.1} parent=1 // pred_check
      _
    $region3: #{siamese_forward.1} parent=1 // pred_check_branch
      %10 = sbr.rel (0) target = $region5
    $region4: #{siamese_forward.1} parent=1 // pred_region
      _
    $region5: #{siamese_forward.1} parent=1 // pred_fallthru
      _
    // Predicated region
    $region6: #{siamese_forward.1} parent=1 // pred_check
      _
    $region7: #{siamese_forward.1} parent=1 // pred_check_branch
      %12 = sbr.rel (0) target = $region9
    $region8: #{siamese_forward.1} parent=1 // pred_region
      _
    $region9: #{siamese_forward.1} parent=1 // pred_fallthru
      _
    // Predicated region
    $region10: #{siamese_forward.1} parent=1 // pred_check
      _
    $region11: #{siamese_forward.1} parent=1 // pred_check_branch
      %14 = sbr.rel (0) target = $region13
    $region12: #{siamese_forward.1} parent=1 // pred_region
      _
    $region13: #{siamese_forward.1} parent=1 // pred_fallthru
      _
    %v15 = vld [vmem:[%s2] sm:$0xff]
    %v16 = vld [vmem:[%s2] ss:$0 sm:$0xff]
    %v17 = vld [vmem:[%s2 + $0x8] sm:$0xff]
    %v18 = vld [vmem:[%s2 + $0x10] sm:$0xff]
    %v19 = vlaneseq
    %v20 = vand.u32 %v19, 127
    %v21 = vadd.s32 %v20, 128
    %v22 = vand.u32 %v20, 15
    %v23 = vand.u32 %v21, 15
    %v24 = vadd.s32 %v20, 4294967280
    %v25 = vadd.s32 %v21, 4294967280
    %vm26 = vcmp.ge.s32.totalorder %v24, 0
    %vm27 = vcmp.ge.s32.totalorder %v25, 0
    %vm28 = vcmp.lt.s32.totalorder %v24, 256
    %vm29 = vcmp.lt.s32.totalorder %v25, 256
    %vm30 = vmand %vm26, %vm28
    %vm31 = vmand %vm27, %vm29
    %v32 = vadd.s32 %v22, 4294967295
    %v33 = vadd.s32 %v23, 4294967295
    %vm34 = vcmp.ge.s32.totalorder %v32, 0
    %vm35 = vcmp.ge.s32.totalorder %v33, 0
    %vm36 = vmand %vm30, %vm34
    %vm37 = vmand %vm31, %vm35
    %vm38 = vcmp.lt.s32.totalorder %v32, 16
    %vm39 = vcmp.lt.s32.totalorder %v33, 16
    %vm40 = vmand %vm36, %vm38
    %vm41 = vmand %vm37, %vm39
    %vm42 = vcmp.ge.s32.totalorder %v22, 0
    %vm43 = vcmp.ge.s32.totalorder %v23, 0
    %vm44 = vmand %vm30, %vm42
    %vm45 = vmand %vm31, %vm43
    %vm46 = vcmp.lt.s32.totalorder %v22, 16
    %vm47 = vcmp.lt.s32.totalorder %v23, 16
    %vm48 = vmand %vm44, %vm46
    %vm49 = vmand %vm45, %vm47
    %v50 = vadd.s32 %v22, 1
    %v51 = vadd.s32 %v23, 1
    %vm52 = vcmp.ge.s32.totalorder %v50, 0
    %vm53 = vcmp.ge.s32.totalorder %v51, 0
    %vm54 = vmand %vm30, %vm52
    %vm55 = vmand %vm31, %vm53
    %vm56 = vcmp.lt.s32.totalorder %v50, 16
    %vm57 = vcmp.lt.s32.totalorder %v51, 16
    %vm58 = vmand %vm54, %vm56
    %vm59 = vmand %vm55, %vm57
    %vm60 = vcmp.ge.s32.totalorder %v20, 0
    %vm61 = vcmp.ge.s32.totalorder %v21, 0
    %vm62 = vcmp.lt.s32.totalorder %v20, 256
    %vm63 = vcmp.lt.s32.totalorder %v21, 256
    %vm64 = vmand %vm60, %vm62
    %vm65 = vmand %vm61, %vm63
    %vm66 = vmand %vm64, %vm34
    %vm67 = vmand %vm65, %vm35
    %vm68 = vmand %vm66, %vm38
    %vm69 = vmand %vm67, %vm39
    %vm70 = vmand %vm64, %vm42
    %vm71 = vmand %vm65, %vm43
    %vm72 = vmand %vm70, %vm46
    %vm73 = vmand %vm71, %vm47
    %vm74 = vmand %vm64, %vm52
    %vm75 = vmand %vm65, %vm53
    %vm76 = vmand %vm74, %vm56
    %vm77 = vmand %vm75, %vm57
    %v78 = vadd.s32 %v20, 16
    %v79 = vadd.s32 %v21, 16
    %vm80 = vcmp.ge.s32.totalorder %v78, 0
    %vm81 = vcmp.ge.s32.totalorder %v79, 0
    %vm82 = vcmp.lt.s32.totalorder %v78, 256
    %vm83 = vcmp.lt.s32.totalorder %v79, 256
    %vm84 = vmand %vm80, %vm82
    %vm85 = vmand %vm81, %vm83
    %vm86 = vmand %vm84, %vm34
    %vm87 = vmand %vm85, %vm35
    %vm88 = vmand %vm86, %vm38
    %vm89 = vmand %vm87, %vm39
    %vm90 = vmand %vm84, %vm42
    %vm91 = vmand %vm85, %vm43
    %vm92 = vmand %vm90, %vm46
    %vm93 = vmand %vm91, %vm47
    %vm94 = vmand %vm84, %vm52
    %vm95 = vmand %vm85, %vm53
    %vm96 = vmand %vm94, %vm56
    %vm97 = vmand %vm95, %vm57
    %v98 = vld [vmem:[%s0] sm:$0xff]
    %100 = vst [vmem:[#allocation1] ss:$2 sm:$0xff] %v98
    %v101 = vld.sshfl [vmem:[#allocation1 + $0x8] sm:$0xff pattern:$0x75316420]
    %102 = vrot.lane.b32.xlu0 %v101, 17
    %v103 = vpop.permute.xlu0 %102
    %105 = vst [vmem:[#allocation1] ss:$2 sm:$0xff] %v98
    %v106 = vld.sshfl [vmem:[#allocation1] sm:$0xff pattern:$0x75316420]
    %v107 = vld.sshfl [vmem:[#allocation1 + $0x8] sm:$0xff pattern:$0x75316420]
    %108 = vrot.lane.b32.xlu0 %v106, 17
    %v109 = vpop.permute.xlu0 %108
    %110 = vrot.lane.b32.xlu0 %v107, 17
    %v111 = vpop.permute.xlu0 %110
    %vm112 = vcmask 138240
    %v113 = vsel %vm112, %v109, %v111
    %v116 = vsel %vm112, %v103, %v109
    %v117 = vsel %vm40, %v116, 0.0
    %v118 = vsel %vm41, %v113, 0.0
    %119 = vst [vmem:[#allocation1] ss:$2 sm:$0xff] %v98
    %v120 = vld.sshfl [vmem:[#allocation1 + $0x8] sm:$0xff pattern:$0x75316420]
    %121 = vrot.lane.b32.xlu0 %v120, 16
    %v122 = vpop.permute.xlu0 %121
    %124 = vst [vmem:[#allocation1] ss:$2 sm:$0xff] %v98
    %v125 = vld.sshfl [vmem:[#allocation1] sm:$0xff pattern:$0x75316420]
    %v126 = vld.sshfl [vmem:[#allocation1 + $0x8] sm:$0xff pattern:$0x75316420]
    %127 = vrot.lane.b32.xlu0 %v125, 16
    %v128 = vpop.permute.xlu0 %127
    %129 = vrot.lane.b32.xlu0 %v126, 16
    %v130 = vpop.permute.xlu0 %129
    %vm131 = vcmask 130048
    %v132 = vsel %vm131, %v128, %v130
    %v135 = vsel %vm131, %v122, %v128
    %v136 = vsel %vm48, %v135, 0.0
    %v137 = vsel %vm49, %v132, 0.0
    %139 = vrot.lane.b32.xlu0 %v15, 124
    %v140 = vpop.permute.xlu0 %139
    %vm141 = vcmask 31744
    %v142 = vsel %vm141, %v140, 0
    %vm144 = vcmask 1043456
    %v146 = vsel %vm144, %v136, 0
    %v149 = vsel %vm144, %v137, 0
    %151 = vmatpush.msra.mxu0 0.0
    %152 = vmatpush.msra.mxu0 0.0
    %153 = vmatpush.msra.mxu0 0.0
    %154 = vmatpush.msra.mxu0 0.0
    %155 = vmatpush.msra.mxu0 0.0
    %156 = vmatpush.msra.mxu0 0.0
    %157 = vmatpush.msra.mxu0 0.0
    %158 = vmatpush.msra.mxu0 0.0
    %159 = vmatpush.msra.mxu0 0.0
    %160 = vmatpush.msra.mxu0 0.0
    %161 = vmatpush.msra.mxu0 0.0
    %162 = vmatpush.msra.mxu0 0.0
    %163 = vmatpush.msra.mxu0 0.0
    %164 = vmatpush.msra.mxu0 0.0
    %165 = vmatpush.msra.mxu0 0.0
    %166 = vmatpush.msra.mxu0 %v146
    %167 = vmatmul.f32.gmra.mxu0 %v142
    %v168 = vpop.f32.mrf.mxu0
    %v169 = vadd.f32 0.0, %v168
    %170 = vdwg.mxu0
    %171 = vmatpush.msra.mxu0 0.0
    %172 = vmatpush.msra.mxu0 0.0
    %173 = vmatpush.msra.mxu0 0.0
    %174 = vmatpush.msra.mxu0 0.0
    %175 = vmatpush.msra.mxu0 0.0
    %176 = vmatpush.msra.mxu0 0.0
    %177 = vmatpush.msra.mxu0 0.0
    %178 = vmatpush.msra.mxu0 0.0
    %179 = vmatpush.msra.mxu0 0.0
    %180 = vmatpush.msra.mxu0 0.0
    %181 = vmatpush.msra.mxu0 0.0
    %182 = vmatpush.msra.mxu0 0.0
    %183 = vmatpush.msra.mxu0 0.0
    %184 = vmatpush.msra.mxu0 0.0
    %185 = vmatpush.msra.mxu0 0.0
    %186 = vmatpush.msra.mxu0 %v149
    %187 = vmatmul.f32.gmra.mxu0 %v142
    %v188 = vpop.f32.mrf.mxu0
    %v189 = vadd.f32 0.0, %v188
    %190 = vdwg.mxu0
    %v191 = vsel %vm141, %v15, 0
    %v194 = vsel %vm144, %v117, 0
    %v197 = vsel %vm144, %v118, 0
    %199 = vmatpush.msra.mxu0 0.0
    %200 = vmatpush.msra.mxu0 0.0
    %201 = vmatpush.msra.mxu0 0.0
    %202 = vmatpush.msra.mxu0 0.0
    %203 = vmatpush.msra.mxu0 0.0
    %204 = vmatpush.msra.mxu0 0.0
    %205 = vmatpush.msra.mxu0 0.0
    %206 = vmatpush.msra.mxu0 0.0
    %207 = vmatpush.msra.mxu0 0.0
    %208 = vmatpush.msra.mxu0 0.0
    %209 = vmatpush.msra.mxu0 0.0
    %210 = vmatpush.msra.mxu0 0.0
    %211 = vmatpush.msra.mxu0 0.0
    %212 = vmatpush.msra.mxu0 0.0
    %213 = vmatpush.msra.mxu0 0.0
    %214 = vmatpush.msra.mxu0 %v194
    %215 = vmatmul.f32.gmra.mxu0 %v191
    %v216 = vpop.f32.mrf.mxu0
    %v217 = vadd.f32 %v169, %v216
    %218 = vdwg.mxu0
    %219 = vmatpush.msra.mxu0 0.0
    %220 = vmatpush.msra.mxu0 0.0
    %221 = vmatpush.msra.mxu0 0.0
    %222 = vmatpush.msra.mxu0 0.0
    %223 = vmatpush.msra.mxu0 0.0
    %224 = vmatpush.msra.mxu0 0.0
    %225 = vmatpush.msra.mxu0 0.0
    %226 = vmatpush.msra.mxu0 0.0
    %227 = vmatpush.msra.mxu0 0.0
    %228 = vmatpush.msra.mxu0 0.0
    %229 = vmatpush.msra.mxu0 0.0
    %230 = vmatpush.msra.mxu0 0.0
    %231 = vmatpush.msra.mxu0 0.0
    %232 = vmatpush.msra.mxu0 0.0
    %233 = vmatpush.msra.mxu0 0.0
    %234 = vmatpush.msra.mxu0 %v197
    %235 = vmatmul.f32.gmra.mxu0 %v191
    %v236 = vpop.f32.mrf.mxu0
    %v237 = vadd.f32 %v189, %v236
    %238 = vdwg.mxu0
    %239 = vst [vmem:[#allocation1] ss:$2 sm:$0xff] %v98
    %v240 = vld.sshfl [vmem:[#allocation1 + $0x8] sm:$0xff pattern:$0x75316420]
    %241 = vrot.lane.b32.xlu0 %v240, 15
    %v242 = vpop.permute.xlu0 %241
    %244 = vst [vmem:[#allocation1] ss:$2 sm:$0xff] %v98
    %v245 = vld.sshfl [vmem:[#allocation1] sm:$0xff pattern:$0x75316420]
    %v246 = vld.sshfl [vmem:[#allocation1 + $0x8] sm:$0xff pattern:$0x75316420]
    %247 = vrot.lane.b32.xlu0 %v245, 15
    %v248 = vpop.permute.xlu0 %247
    %249 = vrot.lane.b32.xlu0 %v246, 15
    %v250 = vpop.permute.xlu0 %249
    %vm251 = vcmask 121856
    %v252 = vsel %vm251, %v248, %v250
    %v255 = vsel %vm251, %v242, %v248
    %v256 = vsel %vm58, %v255, 0.0
    %v257 = vsel %vm59, %v252, 0.0
    %258 = vrot.lane.b32.xlu0 %v15, 120
    %v259 = vpop.permute.xlu0 %258
    %v260 = vsel %vm141, %v259, 0
    %v263 = vsel %vm144, %v256, 0
    %v266 = vsel %vm144, %v257, 0
    %268 = vmatpush.msra.mxu0 0.0
    %269 = vmatpush.msra.mxu0 0.0
    %270 = vmatpush.msra.mxu0 0.0
    %271 = vmatpush.msra.mxu0 0.0
    %272 = vmatpush.msra.mxu0 0.0
    %273 = vmatpush.msra.mxu0 0.0
    %274 = vmatpush.msra.mxu0 0.0
    %275 = vmatpush.msra.mxu0 0.0
    %276 = vmatpush.msra.mxu0 0.0
    %277 = vmatpush.msra.mxu0 0.0
    %278 = vmatpush.msra.mxu0 0.0
    %279 = vmatpush.msra.mxu0 0.0
    %280 = vmatpush.msra.mxu0 0.0
    %281 = vmatpush.msra.mxu0 0.0
    %282 = vmatpush.msra.mxu0 0.0
    %283 = vmatpush.msra.mxu0 %v263
    %284 = vmatmul.f32.gmra.mxu0 %v260
    %v285 = vpop.f32.mrf.mxu0
    %v286 = vadd.f32 0.0, %v285
    %287 = vdwg.mxu0
    %288 = vmatpush.msra.mxu0 0.0
    %289 = vmatpush.msra.mxu0 0.0
    %290 = vmatpush.msra.mxu0 0.0
    %291 = vmatpush.msra.mxu0 0.0
    %292 = vmatpush.msra.mxu0 0.0
    %293 = vmatpush.msra.mxu0 0.0
    %294 = vmatpush.msra.mxu0 0.0
    %295 = vmatpush.msra.mxu0 0.0
    %296 = vmatpush.msra.mxu0 0.0
    %297 = vmatpush.msra.mxu0 0.0
    %298 = vmatpush.msra.mxu0 0.0
    %299 = vmatpush.msra.mxu0 0.0
    %300 = vmatpush.msra.mxu0 0.0
    %301 = vmatpush.msra.mxu0 0.0
    %302 = vmatpush.msra.mxu0 0.0
    %303 = vmatpush.msra.mxu0 %v266
    %304 = vmatmul.f32.gmra.mxu0 %v260
    %v305 = vpop.f32.mrf.mxu0
    %v306 = vadd.f32 0.0, %v305
    %307 = vdwg.mxu0
    %v308 = vadd.f32 %v217, %v286
    %v309 = vadd.f32 %v237, %v306
    %310 = vst [vmem:[#allocation1] ss:$2 sm:$0xff] %v98
    %v311 = vld.sshfl [vmem:[#allocation1 + $0x8] sm:$0xff pattern:$0x75316420]
    %312 = vrot.lane.b32.xlu0 %v311, 1
    %v313 = vpop.permute.xlu0 %312
    %315 = vst [vmem:[#allocation1] ss:$2 sm:$0xff] %v98
    %v316 = vld.sshfl [vmem:[#allocation1] sm:$0xff pattern:$0x75316420]
    %v317 = vld.sshfl [vmem:[#allocation1 + $0x8] sm:$0xff pattern:$0x75316420]
    %318 = vrot.lane.b32.xlu0 %v316, 1
    %v319 = vpop.permute.xlu0 %318
    %320 = vrot.lane.b32.xlu0 %v317, 1
    %v321 = vpop.permute.xlu0 %320
    %vm322 = vcmask 7168
    %v323 = vsel %vm322, %v319, %v321
    %v326 = vsel %vm322, %v313, %v319
    %v327 = vsel %vm68, %v326, 0.0
    %v328 = vsel %vm69, %v323, 0.0
    %329 = vrot.lane.b32.xlu0 %v15, 116
    %v330 = vpop.permute.xlu0 %329
    %v331 = vsel %vm141, %v330, 0
    %v334 = vsel %vm144, %v327, 0
    %v337 = vsel %vm144, %v328, 0
    %339 = vmatpush.msra.mxu0 0.0
    %340 = vmatpush.msra.mxu0 0.0
    %341 = vmatpush.msra.mxu0 0.0
    %342 = vmatpush.msra.mxu0 0.0
    %343 = vmatpush.msra.mxu0 0.0
    %344 = vmatpush.msra.mxu0 0.0
    %345 = vmatpush.msra.mxu0 0.0
    %346 = vmatpush.msra.mxu0 0.0
    %347 = vmatpush.msra.mxu0 0.0
    %348 = vmatpush.msra.mxu0 0.0
    %349 = vmatpush.msra.mxu0 0.0
    %350 = vmatpush.msra.mxu0 0.0
    %351 = vmatpush.msra.mxu0 0.0
    %352 = vmatpush.msra.mxu0 0.0
    %353 = vmatpush.msra.mxu0 0.0
    %354 = vmatpush.msra.mxu0 %v334
    %355 = vmatmul.f32.gmra.mxu0 %v331
    %v356 = vpop.f32.mrf.mxu0
    %v357 = vadd.f32 0.0, %v356
    %358 = vdwg.mxu0
    %359 = vmatpush.msra.mxu0 0.0
    %360 = vmatpush.msra.mxu0 0.0
    %361 = vmatpush.msra.mxu0 0.0
    %362 = vmatpush.msra.mxu0 0.0
    %363 = vmatpush.msra.mxu0 0.0
    %364 = vmatpush.msra.mxu0 0.0
    %365 = vmatpush.msra.mxu0 0.0
    %366 = vmatpush.msra.mxu0 0.0
    %367 = vmatpush.msra.mxu0 0.0
    %368 = vmatpush.msra.mxu0 0.0
    %369 = vmatpush.msra.mxu0 0.0
    %370 = vmatpush.msra.mxu0 0.0
    %371 = vmatpush.msra.mxu0 0.0
    %372 = vmatpush.msra.mxu0 0.0
    %373 = vmatpush.msra.mxu0 0.0
    %374 = vmatpush.msra.mxu0 %v337
    %375 = vmatmul.f32.gmra.mxu0 %v331
    %v376 = vpop.f32.mrf.mxu0
    %v377 = vadd.f32 0.0, %v376
    %378 = vdwg.mxu0
    %v379 = vadd.f32 %v308, %v357
    %v380 = vadd.f32 %v309, %v377
    %381 = vst [vmem:[#allocation1] ss:$2 sm:$0xff] %v98
    %v382 = vld.sshfl [vmem:[#allocation1] sm:$0xff pattern:$0x75316420]
    %v383 = vld.sshfl [vmem:[#allocation1 + $0x8] sm:$0xff pattern:$0x75316420]
    %v386 = vsel %vm72, %v382, 0.0
    %v387 = vsel %vm73, %v383, 0.0
    %388 = vrot.lane.b32.xlu0 %v15, 112
    %v389 = vpop.permute.xlu0 %388
    %v390 = vsel %vm141, %v389, 0
    %v393 = vsel %vm144, %v386, 0
    %v396 = vsel %vm144, %v387, 0
    %398 = vmatpush.msra.mxu0 0.0
    %399 = vmatpush.msra.mxu0 0.0
    %400 = vmatpush.msra.mxu0 0.0
    %401 = vmatpush.msra.mxu0 0.0
    %402 = vmatpush.msra.mxu0 0.0
    %403 = vmatpush.msra.mxu0 0.0
    %404 = vmatpush.msra.mxu0 0.0
    %405 = vmatpush.msra.mxu0 0.0
    %406 = vmatpush.msra.mxu0 0.0
    %407 = vmatpush.msra.mxu0 0.0
    %408 = vmatpush.msra.mxu0 0.0
    %409 = vmatpush.msra.mxu0 0.0
    %410 = vmatpush.msra.mxu0 0.0
    %411 = vmatpush.msra.mxu0 0.0
    %412 = vmatpush.msra.mxu0 0.0
    %413 = vmatpush.msra.mxu0 %v393
    %414 = vmatmul.f32.gmra.mxu0 %v390
    %v415 = vpop.f32.mrf.mxu0
    %v416 = vadd.f32 0.0, %v415
    %417 = vdwg.mxu0
    %418 = vmatpush.msra.mxu0 0.0
    %419 = vmatpush.msra.mxu0 0.0
    %420 = vmatpush.msra.mxu0 0.0
    %421 = vmatpush.msra.mxu0 0.0
    %422 = vmatpush.msra.mxu0 0.0
    %423 = vmatpush.msra.mxu0 0.0
    %424 = vmatpush.msra.mxu0 0.0
    %425 = vmatpush.msra.mxu0 0.0
    %426 = vmatpush.msra.mxu0 0.0
    %427 = vmatpush.msra.mxu0 0.0
    %428 = vmatpush.msra.mxu0 0.0
    %429 = vmatpush.msra.mxu0 0.0
    %430 = vmatpush.msra.mxu0 0.0
    %431 = vmatpush.msra.mxu0 0.0
    %432 = vmatpush.msra.mxu0 0.0
    %433 = vmatpush.msra.mxu0 %v396
    %434 = vmatmul.f32.gmra.mxu0 %v390
    %v435 = vpop.f32.mrf.mxu0
    %v436 = vadd.f32 0.0, %v435
    %437 = vdwg.mxu0
    %v438 = vadd.f32 %v379, %v416
    %v439 = vadd.f32 %v380, %v436
    %440 = vst [vmem:[#allocation1] ss:$2 sm:$0xff] %v98
    %v441 = vld.sshfl [vmem:[#allocation1] sm:$0xff pattern:$0x75316420]
    %v442 = vld.sshfl [vmem:[#allocation1 + $0x8] sm:$0xff pattern:$0x75316420]
    %443 = vrot.lane.b32.xlu0 %v441, 127
    %v444 = vpop.permute.xlu0 %443
    %445 = vrot.lane.b32.xlu0 %v442, 127
    %v446 = vpop.permute.xlu0 %445
    %vm447 = vcmask 1039360
    %v448 = vsel %vm447, %v444, %v446
    %451 = vst [vmem:[#allocation1] ss:$2 sm:$0xff] %v98
    %v452 = vld.sshfl [vmem:[#allocation1] sm:$0xff pattern:$0x75316420]
    %453 = vrot.lane.b32.xlu0 %v452, 127
    %v454 = vpop.permute.xlu0 %453
    %v456 = vsel %vm447, %v446, %v454
    %v457 = vsel %vm76, %v448, 0.0
    %v458 = vsel %vm77, %v456, 0.0
    %459 = vrot.lane.b32.xlu0 %v15, 108
    %v460 = vpop.permute.xlu0 %459
    %v461 = vsel %vm141, %v460, 0
    %v464 = vsel %vm144, %v457, 0
    %v467 = vsel %vm144, %v458, 0
    %469 = vmatpush.msra.mxu0 0.0
    %470 = vmatpush.msra.mxu0 0.0
    %471 = vmatpush.msra.mxu0 0.0
    %472 = vmatpush.msra.mxu0 0.0
    %473 = vmatpush.msra.mxu0 0.0
    %474 = vmatpush.msra.mxu0 0.0
    %475 = vmatpush.msra.mxu0 0.0
    %476 = vmatpush.msra.mxu0 0.0
    %477 = vmatpush.msra.mxu0 0.0
    %478 = vmatpush.msra.mxu0 0.0
    %479 = vmatpush.msra.mxu0 0.0
    %480 = vmatpush.msra.mxu0 0.0
    %481 = vmatpush.msra.mxu0 0.0
    %482 = vmatpush.msra.mxu0 0.0
    %483 = vmatpush.msra.mxu0 0.0
    %484 = vmatpush.msra.mxu0 %v464
    %485 = vmatmul.f32.gmra.mxu0 %v461
    %v486 = vpop.f32.mrf.mxu0
    %v487 = vadd.f32 0.0, %v486
    %488 = vdwg.mxu0
    %489 = vmatpush.msra.mxu0 0.0
    %490 = vmatpush.msra.mxu0 0.0
    %491 = vmatpush.msra.mxu0 0.0
    %492 = vmatpush.msra.mxu0 0.0
    %493 = vmatpush.msra.mxu0 0.0
    %494 = vmatpush.msra.mxu0 0.0
    %495 = vmatpush.msra.mxu0 0.0
    %496 = vmatpush.msra.mxu0 0.0
    %497 = vmatpush.msra.mxu0 0.0
    %498 = vmatpush.msra.mxu0 0.0
    %499 = vmatpush.msra.mxu0 0.0
    %500 = vmatpush.msra.mxu0 0.0
    %501 = vmatpush.msra.mxu0 0.0
    %502 = vmatpush.msra.mxu0 0.0
    %503 = vmatpush.msra.mxu0 0.0
    %504 = vmatpush.msra.mxu0 %v467
    %505 = vmatmul.f32.gmra.mxu0 %v461
    %v506 = vpop.f32.mrf.mxu0
    %v507 = vadd.f32 0.0, %v506
    %508 = vdwg.mxu0
    %v509 = vadd.f32 %v438, %v487
    %v510 = vadd.f32 %v439, %v507
    %511 = vst [vmem:[#allocation1] ss:$2 sm:$0xff] %v98
    %v512 = vld.sshfl [vmem:[#allocation1] sm:$0xff pattern:$0x75316420]
    %v513 = vld.sshfl [vmem:[#allocation1 + $0x8] sm:$0xff pattern:$0x75316420]
    %514 = vrot.lane.b32.xlu0 %v512, 113
    %v515 = vpop.permute.xlu0 %514
    %516 = vrot.lane.b32.xlu0 %v513, 113
    %v517 = vpop.permute.xlu0 %516
    %vm518 = vcmask 924672
    %v519 = vsel %vm518, %v515, %v517
    %522 = vst [vmem:[#allocation1] ss:$2 sm:$0xff] %v98
    %v523 = vld.sshfl [vmem:[#allocation1] sm:$0xff pattern:$0x75316420]
    %524 = vrot.lane.b32.xlu0 %v523, 113
    %v525 = vpop.permute.xlu0 %524
    %v527 = vsel %vm518, %v517, %v525
    %v528 = vsel %vm88, %v519, 0.0
    %v529 = vsel %vm89, %v527, 0.0
    %530 = vrot.lane.b32.xlu0 %v15, 104
    %v531 = vpop.permute.xlu0 %530
    %v532 = vsel %vm141, %v531, 0
    %v535 = vsel %vm144, %v528, 0
    %v538 = vsel %vm144, %v529, 0
    %540 = vmatpush.msra.mxu0 0.0
    %541 = vmatpush.msra.mxu0 0.0
    %542 = vmatpush.msra.mxu0 0.0
    %543 = vmatpush.msra.mxu0 0.0
    %544 = vmatpush.msra.mxu0 0.0
    %545 = vmatpush.msra.mxu0 0.0
    %546 = vmatpush.msra.mxu0 0.0
    %547 = vmatpush.msra.mxu0 0.0
    %548 = vmatpush.msra.mxu0 0.0
    %549 = vmatpush.msra.mxu0 0.0
    %550 = vmatpush.msra.mxu0 0.0
    %551 = vmatpush.msra.mxu0 0.0
    %552 = vmatpush.msra.mxu0 0.0
    %553 = vmatpush.msra.mxu0 0.0
    %554 = vmatpush.msra.mxu0 0.0
    %555 = vmatpush.msra.mxu0 %v535
    %556 = vmatmul.f32.gmra.mxu0 %v532
    %v557 = vpop.f32.mrf.mxu0
    %v558 = vadd.f32 0.0, %v557
    %559 = vdwg.mxu0
    %560 = vmatpush.msra.mxu0 0.0
    %561 = vmatpush.msra.mxu0 0.0
    %562 = vmatpush.msra.mxu0 0.0
    %563 = vmatpush.msra.mxu0 0.0
    %564 = vmatpush.msra.mxu0 0.0
    %565 = vmatpush.msra.mxu0 0.0
    %566 = vmatpush.msra.mxu0 0.0
    %567 = vmatpush.msra.mxu0 0.0
    %568 = vmatpush.msra.mxu0 0.0
    %569 = vmatpush.msra.mxu0 0.0
    %570 = vmatpush.msra.mxu0 0.0
    %571 = vmatpush.msra.mxu0 0.0
    %572 = vmatpush.msra.mxu0 0.0
    %573 = vmatpush.msra.mxu0 0.0
    %574 = vmatpush.msra.mxu0 0.0
    %575 = vmatpush.msra.mxu0 %v538
    %576 = vmatmul.f32.gmra.mxu0 %v532
    %v577 = vpop.f32.mrf.mxu0
    %v578 = vadd.f32 0.0, %v577
    %579 = vdwg.mxu0
    %v580 = vadd.f32 %v509, %v558
    %v581 = vadd.f32 %v510, %v578
    %582 = vst [vmem:[#allocation1] ss:$2 sm:$0xff] %v98
    %v583 = vld.sshfl [vmem:[#allocation1] sm:$0xff pattern:$0x75316420]
    %v584 = vld.sshfl [vmem:[#allocation1 + $0x8] sm:$0xff pattern:$0x75316420]
    %585 = vrot.lane.b32.xlu0 %v583, 112
    %v586 = vpop.permute.xlu0 %585
    %587 = vrot.lane.b32.xlu0 %v584, 112
    %v588 = vpop.permute.xlu0 %587
    %vm589 = vcmask 916480
    %v590 = vsel %vm589, %v586, %v588
    %593 = vst [vmem:[#allocation1] ss:$2 sm:$0xff] %v98
    %v594 = vld.sshfl [vmem:[#allocation1] sm:$0xff pattern:$0x75316420]
    %595 = vrot.lane.b32.xlu0 %v594, 112
    %v596 = vpop.permute.xlu0 %595
    %v598 = vsel %vm589, %v588, %v596
    %v599 = vsel %vm92, %v590, 0.0
    %v600 = vsel %vm93, %v598, 0.0
    %601 = vrot.lane.b32.xlu0 %v15, 100
    %v602 = vpop.permute.xlu0 %601
    %v603 = vsel %vm141, %v602, 0
    %v606 = vsel %vm144, %v599, 0
    %v609 = vsel %vm144, %v600, 0
    %611 = vmatpush.msra.mxu0 0.0
    %612 = vmatpush.msra.mxu0 0.0
    %613 = vmatpush.msra.mxu0 0.0
    %614 = vmatpush.msra.mxu0 0.0
    %615 = vmatpush.msra.mxu0 0.0
    %616 = vmatpush.msra.mxu0 0.0
    %617 = vmatpush.msra.mxu0 0.0
    %618 = vmatpush.msra.mxu0 0.0
    %619 = vmatpush.msra.mxu0 0.0
    %620 = vmatpush.msra.mxu0 0.0
    %621 = vmatpush.msra.mxu0 0.0
    %622 = vmatpush.msra.mxu0 0.0
    %623 = vmatpush.msra.mxu0 0.0
    %624 = vmatpush.msra.mxu0 0.0
    %625 = vmatpush.msra.mxu0 0.0
    %626 = vmatpush.msra.mxu0 %v606
    %627 = vmatmul.f32.gmra.mxu0 %v603
    %v628 = vpop.f32.mrf.mxu0
    %v629 = vadd.f32 0.0, %v628
    %630 = vdwg.mxu0
    %631 = vmatpush.msra.mxu0 0.0
    %632 = vmatpush.msra.mxu0 0.0
    %633 = vmatpush.msra.mxu0 0.0
    %634 = vmatpush.msra.mxu0 0.0
    %635 = vmatpush.msra.mxu0 0.0
    %636 = vmatpush.msra.mxu0 0.0
    %637 = vmatpush.msra.mxu0 0.0
    %638 = vmatpush.msra.mxu0 0.0
    %639 = vmatpush.msra.mxu0 0.0
    %640 = vmatpush.msra.mxu0 0.0
    %641 = vmatpush.msra.mxu0 0.0
    %642 = vmatpush.msra.mxu0 0.0
    %643 = vmatpush.msra.mxu0 0.0
    %644 = vmatpush.msra.mxu0 0.0
    %645 = vmatpush.msra.mxu0 0.0
    %646 = vmatpush.msra.mxu0 %v609
    %647 = vmatmul.f32.gmra.mxu0 %v603
    %v648 = vpop.f32.mrf.mxu0
    %v649 = vadd.f32 0.0, %v648
    %650 = vdwg.mxu0
    %v651 = vadd.f32 %v580, %v629
    %v652 = vadd.f32 %v581, %v649
    %653 = vst [vmem:[#allocation1] ss:$2 sm:$0xff] %v98
    %v654 = vld.sshfl [vmem:[#allocation1] sm:$0xff pattern:$0x75316420]
    %v655 = vld.sshfl [vmem:[#allocation1 + $0x8] sm:$0xff pattern:$0x75316420]
    %656 = vrot.lane.b32.xlu0 %v654, 111
    %v657 = vpop.permute.xlu0 %656
    %658 = vrot.lane.b32.xlu0 %v655, 111
    %v659 = vpop.permute.xlu0 %658
    %vm660 = vcmask 908288
    %v661 = vsel %vm660, %v657, %v659
    %664 = vst [vmem:[#allocation1] ss:$2 sm:$0xff] %v98
    %v665 = vld.sshfl [vmem:[#allocation1] sm:$0xff pattern:$0x75316420]
    %666 = vrot.lane.b32.xlu0 %v665, 111
    %v667 = vpop.permute.xlu0 %666
    %v669 = vsel %vm660, %v659, %v667
    %v670 = vsel %vm96, %v661, 0.0
    %v671 = vsel %vm97, %v669, 0.0
    %672 = vrot.lane.b32.xlu0 %v15, 96
    %v673 = vpop.permute.xlu0 %672
    %v674 = vsel %vm141, %v673, 0
    %v677 = vsel %vm144, %v670, 0
    %v680 = vsel %vm144, %v671, 0
    %682 = vmatpush.msra.mxu0 0.0
    %683 = vmatpush.msra.mxu0 0.0
    %684 = vmatpush.msra.mxu0 0.0
    %685 = vmatpush.msra.mxu0 0.0
    %686 = vmatpush.msra.mxu0 0.0
    %687 = vmatpush.msra.mxu0 0.0
    %688 = vmatpush.msra.mxu0 0.0
    %689 = vmatpush.msra.mxu0 0.0
    %690 = vmatpush.msra.mxu0 0.0
    %691 = vmatpush.msra.mxu0 0.0
    %692 = vmatpush.msra.mxu0 0.0
    %693 = vmatpush.msra.mxu0 0.0
    %694 = vmatpush.msra.mxu0 0.0
    %695 = vmatpush.msra.mxu0 0.0
    %696 = vmatpush.msra.mxu0 0.0
    %697 = vmatpush.msra.mxu0 %v677
    %698 = vmatmul.f32.gmra.mxu0 %v674
    %v699 = vpop.f32.mrf.mxu0
    %v700 = vadd.f32 0.0, %v699
    %701 = vdwg.mxu0
    %702 = vmatpush.msra.mxu0 0.0
    %703 = vmatpush.msra.mxu0 0.0
    %704 = vmatpush.msra.mxu0 0.0
    %705 = vmatpush.msra.mxu0 0.0
    %706 = vmatpush.msra.mxu0 0.0
    %707 = vmatpush.msra.mxu0 0.0
    %708 = vmatpush.msra.mxu0 0.0
    %709 = vmatpush.msra.mxu0 0.0
    %710 = vmatpush.msra.mxu0 0.0
    %711 = vmatpush.msra.mxu0 0.0
    %712 = vmatpush.msra.mxu0 0.0
    %713 = vmatpush.msra.mxu0 0.0
    %714 = vmatpush.msra.mxu0 0.0
    %715 = vmatpush.msra.mxu0 0.0
    %716 = vmatpush.msra.mxu0 0.0
    %717 = vmatpush.msra.mxu0 %v680
    %718 = vmatmul.f32.gmra.mxu0 %v674
    %v719 = vpop.f32.mrf.mxu0
    %v720 = vadd.f32 0.0, %v719
    %721 = vdwg.mxu0
    %v722 = vadd.f32 %v651, %v700
    %v723 = vadd.f32 %v652, %v720
    %724 = vset.pattern.permute.xlu0 36
    %725 = vperm.xlu0 %724, %v15
    %v726 = vpop.permute.xlu0 %725
    %v728 = vadd.f32 %v722, %v726
    %v729 = vadd.f32 %v723, %v726
    %v730 = vmax.f32 %v728, 0.0
    %v731 = vmax.f32 %v729, 0.0
    %v732 = vld [vmem:[%s1] sm:$0xff]
    %734 = vst [vmem:[#allocation1] ss:$2 sm:$0xff] %v732
    %v735 = vld.sshfl [vmem:[#allocation1 + $0x8] sm:$0xff pattern:$0x75316420]
    %736 = vrot.lane.b32.xlu0 %v735, 17
    %v737 = vpop.permute.xlu0 %736
    %739 = vst [vmem:[#allocation1] ss:$2 sm:$0xff] %v732
    %v740 = vld.sshfl [vmem:[#allocation1] sm:$0xff pattern:$0x75316420]
    %v741 = vld.sshfl [vmem:[#allocation1 + $0x8] sm:$0xff pattern:$0x75316420]
    %742 = vrot.lane.b32.xlu0 %v740, 17
    %v743 = vpop.permute.xlu0 %742
    %744 = vrot.lane.b32.xlu0 %v741, 17
    %v745 = vpop.permute.xlu0 %744
    %v746 = vsel %vm112, %v743, %v745
    %v749 = vsel %vm112, %v737, %v743
    %v750 = vsel %vm40, %v749, 0.0
    %v751 = vsel %vm41, %v746, 0.0
    %752 = vst [vmem:[#allocation1] ss:$2 sm:$0xff] %v732
    %v753 = vld.sshfl [vmem:[#allocation1 + $0x8] sm:$0xff pattern:$0x75316420]
    %754 = vrot.lane.b32.xlu0 %v753, 16
    %v755 = vpop.permute.xlu0 %754
    %757 = vst [vmem:[#allocation1] ss:$2 sm:$0xff] %v732
    %v758 = vld.sshfl [vmem:[#allocation1] sm:$0xff pattern:$0x75316420]
    %v759 = vld.sshfl [vmem:[#allocation1 + $0x8] sm:$0xff pattern:$0x75316420]
    %760 = vrot.lane.b32.xlu0 %v758, 16
    %v761 = vpop.permute.xlu0 %760
    %762 = vrot.lane.b32.xlu0 %v759, 16
    %v763 = vpop.permute.xlu0 %762
    %v764 = vsel %vm131, %v761, %v763
    %v767 = vsel %vm131, %v755, %v761
    %v768 = vsel %vm48, %v767, 0.0
    %v769 = vsel %vm49, %v764, 0.0
    %v771 = vsel %vm144, %v768, 0
    %v774 = vsel %vm144, %v769, 0
    %776 = vmatpush.msra.mxu0 0.0
    %777 = vmatpush.msra.mxu0 0.0
    %778 = vmatpush.msra.mxu0 0.0
    %779 = vmatpush.msra.mxu0 0.0
    %780 = vmatpush.msra.mxu0 0.0
    %781 = vmatpush.msra.mxu0 0.0
    %782 = vmatpush.msra.mxu0 0.0
    %783 = vmatpush.msra.mxu0 0.0
    %784 = vmatpush.msra.mxu0 0.0
    %785 = vmatpush.msra.mxu0 0.0
    %786 = vmatpush.msra.mxu0 0.0
    %787 = vmatpush.msra.mxu0 0.0
    %788 = vmatpush.msra.mxu0 0.0
    %789 = vmatpush.msra.mxu0 0.0
    %790 = vmatpush.msra.mxu0 0.0
    %791 = vmatpush.msra.mxu0 %v771
    %792 = vmatmul.f32.gmra.mxu0 %v142
    %v793 = vpop.f32.mrf.mxu0
    %v794 = vadd.f32 0.0, %v793
    %795 = vdwg.mxu0
    %796 = vmatpush.msra.mxu0 0.0
    %797 = vmatpush.msra.mxu0 0.0
    %798 = vmatpush.msra.mxu0 0.0
    %799 = vmatpush.msra.mxu0 0.0
    %800 = vmatpush.msra.mxu0 0.0
    %801 = vmatpush.msra.mxu0 0.0
    %802 = vmatpush.msra.mxu0 0.0
    %803 = vmatpush.msra.mxu0 0.0
    %804 = vmatpush.msra.mxu0 0.0
    %805 = vmatpush.msra.mxu0 0.0
    %806 = vmatpush.msra.mxu0 0.0
    %807 = vmatpush.msra.mxu0 0.0
    %808 = vmatpush.msra.mxu0 0.0
    %809 = vmatpush.msra.mxu0 0.0
    %810 = vmatpush.msra.mxu0 0.0
    %811 = vmatpush.msra.mxu0 %v774
    %812 = vmatmul.f32.gmra.mxu0 %v142
    %v813 = vpop.f32.mrf.mxu0
    %v814 = vadd.f32 0.0, %v813
    %815 = vdwg.mxu0
    %v817 = vsel %vm144, %v750, 0
    %v820 = vsel %vm144, %v751, 0
    %822 = vmatpush.msra.mxu0 0.0
    %823 = vmatpush.msra.mxu0 0.0
    %824 = vmatpush.msra.mxu0 0.0
    %825 = vmatpush.msra.mxu0 0.0
    %826 = vmatpush.msra.mxu0 0.0
    %827 = vmatpush.msra.mxu0 0.0
    %828 = vmatpush.msra.mxu0 0.0
    %829 = vmatpush.msra.mxu0 0.0
    %830 = vmatpush.msra.mxu0 0.0
    %831 = vmatpush.msra.mxu0 0.0
    %832 = vmatpush.msra.mxu0 0.0
    %833 = vmatpush.msra.mxu0 0.0
    %834 = vmatpush.msra.mxu0 0.0
    %835 = vmatpush.msra.mxu0 0.0
    %836 = vmatpush.msra.mxu0 0.0
    %837 = vmatpush.msra.mxu0 %v817
    %838 = vmatmul.f32.gmra.mxu0 %v191
    %v839 = vpop.f32.mrf.mxu0
    %v840 = vadd.f32 %v794, %v839
    %841 = vdwg.mxu0
    %842 = vmatpush.msra.mxu0 0.0
    %843 = vmatpush.msra.mxu0 0.0
    %844 = vmatpush.msra.mxu0 0.0
    %845 = vmatpush.msra.mxu0 0.0
    %846 = vmatpush.msra.mxu0 0.0
    %847 = vmatpush.msra.mxu0 0.0
    %848 = vmatpush.msra.mxu0 0.0
    %849 = vmatpush.msra.mxu0 0.0
    %850 = vmatpush.msra.mxu0 0.0
    %851 = vmatpush.msra.mxu0 0.0
    %852 = vmatpush.msra.mxu0 0.0
    %853 = vmatpush.msra.mxu0 0.0
    %854 = vmatpush.msra.mxu0 0.0
    %855 = vmatpush.msra.mxu0 0.0
    %856 = vmatpush.msra.mxu0 0.0
    %857 = vmatpush.msra.mxu0 %v820
    %858 = vmatmul.f32.gmra.mxu0 %v191
    %v859 = vpop.f32.mrf.mxu0
    %v860 = vadd.f32 %v814, %v859
    %861 = vdwg.mxu0
    %862 = vst [vmem:[#allocation1] ss:$2 sm:$0xff] %v732
    %v863 = vld.sshfl [vmem:[#allocation1 + $0x8] sm:$0xff pattern:$0x75316420]
    %864 = vrot.lane.b32.xlu0 %v863, 15
    %v865 = vpop.permute.xlu0 %864
    %867 = vst [vmem:[#allocation1] ss:$2 sm:$0xff] %v732
    %v868 = vld.sshfl [vmem:[#allocation1] sm:$0xff pattern:$0x75316420]
    %v869 = vld.sshfl [vmem:[#allocation1 + $0x8] sm:$0xff pattern:$0x75316420]
    %870 = vrot.lane.b32.xlu0 %v868, 15
    %v871 = vpop.permute.xlu0 %870
    %872 = vrot.lane.b32.xlu0 %v869, 15
    %v873 = vpop.permute.xlu0 %872
    %v874 = vsel %vm251, %v871, %v873
    %v877 = vsel %vm251, %v865, %v871
    %v878 = vsel %vm58, %v877, 0.0
    %v879 = vsel %vm59, %v874, 0.0
    %v881 = vsel %vm144, %v878, 0
    %v884 = vsel %vm144, %v879, 0
    %886 = vmatpush.msra.mxu0 0.0
    %887 = vmatpush.msra.mxu0 0.0
    %888 = vmatpush.msra.mxu0 0.0
    %889 = vmatpush.msra.mxu0 0.0
    %890 = vmatpush.msra.mxu0 0.0
    %891 = vmatpush.msra.mxu0 0.0
    %892 = vmatpush.msra.mxu0 0.0
    %893 = vmatpush.msra.mxu0 0.0
    %894 = vmatpush.msra.mxu0 0.0
    %895 = vmatpush.msra.mxu0 0.0
    %896 = vmatpush.msra.mxu0 0.0
    %897 = vmatpush.msra.mxu0 0.0
    %898 = vmatpush.msra.mxu0 0.0
    %899 = vmatpush.msra.mxu0 0.0
    %900 = vmatpush.msra.mxu0 0.0
    %901 = vmatpush.msra.mxu0 %v881
    %902 = vmatmul.f32.gmra.mxu0 %v260
    %v903 = vpop.f32.mrf.mxu0
    %v904 = vadd.f32 0.0, %v903
    %905 = vdwg.mxu0
    %906 = vmatpush.msra.mxu0 0.0
    %907 = vmatpush.msra.mxu0 0.0
    %908 = vmatpush.msra.mxu0 0.0
    %909 = vmatpush.msra.mxu0 0.0
    %910 = vmatpush.msra.mxu0 0.0
    %911 = vmatpush.msra.mxu0 0.0
    %912 = vmatpush.msra.mxu0 0.0
    %913 = vmatpush.msra.mxu0 0.0
    %914 = vmatpush.msra.mxu0 0.0
    %915 = vmatpush.msra.mxu0 0.0
    %916 = vmatpush.msra.mxu0 0.0
    %917 = vmatpush.msra.mxu0 0.0
    %918 = vmatpush.msra.mxu0 0.0
    %919 = vmatpush.msra.mxu0 0.0
    %920 = vmatpush.msra.mxu0 0.0
    %921 = vmatpush.msra.mxu0 %v884
    %922 = vmatmul.f32.gmra.mxu0 %v260
    %v923 = vpop.f32.mrf.mxu0
    %v924 = vadd.f32 0.0, %v923
    %925 = vdwg.mxu0
    %v926 = vadd.f32 %v840, %v904
    %v927 = vadd.f32 %v860, %v924
    %928 = vst [vmem:[#allocation1] ss:$2 sm:$0xff] %v732
    %v929 = vld.sshfl [vmem:[#allocation1 + $0x8] sm:$0xff pattern:$0x75316420]
    %930 = vrot.lane.b32.xlu0 %v929, 1
    %v931 = vpop.permute.xlu0 %930
    %933 = vst [vmem:[#allocation1] ss:$2 sm:$0xff] %v732
    %v934 = vld.sshfl [vmem:[#allocation1] sm:$0xff pattern:$0x75316420]
    %v935 = vld.sshfl [vmem:[#allocation1 + $0x8] sm:$0xff pattern:$0x75316420]
    %936 = vrot.lane.b32.xlu0 %v934, 1
    %v937 = vpop.permute.xlu0 %936
    %938 = vrot.lane.b32.xlu0 %v935, 1
    %v939 = vpop.permute.xlu0 %938
    %v940 = vsel %vm322, %v937, %v939
    %v943 = vsel %vm322, %v931, %v937
    %v944 = vsel %vm68, %v943, 0.0
    %v945 = vsel %vm69, %v940, 0.0
    %v947 = vsel %vm144, %v944, 0
    %v950 = vsel %vm144, %v945, 0
    %952 = vmatpush.msra.mxu0 0.0
    %953 = vmatpush.msra.mxu0 0.0
    %954 = vmatpush.msra.mxu0 0.0
    %955 = vmatpush.msra.mxu0 0.0
    %956 = vmatpush.msra.mxu0 0.0
    %957 = vmatpush.msra.mxu0 0.0
    %958 = vmatpush.msra.mxu0 0.0
    %959 = vmatpush.msra.mxu0 0.0
    %960 = vmatpush.msra.mxu0 0.0
    %961 = vmatpush.msra.mxu0 0.0
    %962 = vmatpush.msra.mxu0 0.0
    %963 = vmatpush.msra.mxu0 0.0
    %964 = vmatpush.msra.mxu0 0.0
    %965 = vmatpush.msra.mxu0 0.0
    %966 = vmatpush.msra.mxu0 0.0
    %967 = vmatpush.msra.mxu0 %v947
    %968 = vmatmul.f32.gmra.mxu0 %v331
    %v969 = vpop.f32.mrf.mxu0
    %v970 = vadd.f32 0.0, %v969
    %971 = vdwg.mxu0
    %972 = vmatpush.msra.mxu0 0.0
    %973 = vmatpush.msra.mxu0 0.0
    %974 = vmatpush.msra.mxu0 0.0
    %975 = vmatpush.msra.mxu0 0.0
    %976 = vmatpush.msra.mxu0 0.0
    %977 = vmatpush.msra.mxu0 0.0
    %978 = vmatpush.msra.mxu0 0.0
    %979 = vmatpush.msra.mxu0 0.0
    %980 = vmatpush.msra.mxu0 0.0
    %981 = vmatpush.msra.mxu0 0.0
    %982 = vmatpush.msra.mxu0 0.0
    %983 = vmatpush.msra.mxu0 0.0
    %984 = vmatpush.msra.mxu0 0.0
    %985 = vmatpush.msra.mxu0 0.0
    %986 = vmatpush.msra.mxu0 0.0
    %987 = vmatpush.msra.mxu0 %v950
    %988 = vmatmul.f32.gmra.mxu0 %v331
    %v989 = vpop.f32.mrf.mxu0
    %v990 = vadd.f32 0.0, %v989
    %991 = vdwg.mxu0
    %v992 = vadd.f32 %v926, %v970
    %v993 = vadd.f32 %v927, %v990
    %994 = vst [vmem:[#allocation1] ss:$2 sm:$0xff] %v732
    %v995 = vld.sshfl [vmem:[#allocation1] sm:$0xff pattern:$0x75316420]
    %v996 = vld.sshfl [vmem:[#allocation1 + $0x8] sm:$0xff pattern:$0x75316420]
    %v999 = vsel %vm72, %v995, 0.0
    %v1000 = vsel %vm73, %v996, 0.0
    %v1002 = vsel %vm144, %v999, 0
    %v1005 = vsel %vm144, %v1000, 0
    %1007 = vmatpush.msra.mxu0 0.0
    %1008 = vmatpush.msra.mxu0 0.0
    %1009 = vmatpush.msra.mxu0 0.0
    %1010 = vmatpush.msra.mxu0 0.0
    %1011 = vmatpush.msra.mxu0 0.0
    %1012 = vmatpush.msra.mxu0 0.0
    %1013 = vmatpush.msra.mxu0 0.0
    %1014 = vmatpush.msra.mxu0 0.0
    %1015 = vmatpush.msra.mxu0 0.0
    %1016 = vmatpush.msra.mxu0 0.0
    %1017 = vmatpush.msra.mxu0 0.0
    %1018 = vmatpush.msra.mxu0 0.0
    %1019 = vmatpush.msra.mxu0 0.0
    %1020 = vmatpush.msra.mxu0 0.0
    %1021 = vmatpush.msra.mxu0 0.0
    %1022 = vmatpush.msra.mxu0 %v1002
    %1023 = vmatmul.f32.gmra.mxu0 %v390
    %v1024 = vpop.f32.mrf.mxu0
    %v1025 = vadd.f32 0.0, %v1024
    %1026 = vdwg.mxu0
    %1027 = vmatpush.msra.mxu0 0.0
    %1028 = vmatpush.msra.mxu0 0.0
    %1029 = vmatpush.msra.mxu0 0.0
    %1030 = vmatpush.msra.mxu0 0.0
    %1031 = vmatpush.msra.mxu0 0.0
    %1032 = vmatpush.msra.mxu0 0.0
    %1033 = vmatpush.msra.mxu0 0.0
    %1034 = vmatpush.msra.mxu0 0.0
    %1035 = vmatpush.msra.mxu0 0.0
    %1036 = vmatpush.msra.mxu0 0.0
    %1037 = vmatpush.msra.mxu0 0.0
    %1038 = vmatpush.msra.mxu0 0.0
    %1039 = vmatpush.msra.mxu0 0.0
    %1040 = vmatpush.msra.mxu0 0.0
    %1041 = vmatpush.msra.mxu0 0.0
    %1042 = vmatpush.msra.mxu0 %v1005
    %1043 = vmatmul.f32.gmra.mxu0 %v390
    %v1044 = vpop.f32.mrf.mxu0
    %v1045 = vadd.f32 0.0, %v1044
    %1046 = vdwg.mxu0
    %v1047 = vadd.f32 %v992, %v1025
    %v1048 = vadd.f32 %v993, %v1045
    %1049 = vst [vmem:[#allocation1] ss:$2 sm:$0xff] %v732
    %v1050 = vld.sshfl [vmem:[#allocation1] sm:$0xff pattern:$0x75316420]
    %v1051 = vld.sshfl [vmem:[#allocation1 + $0x8] sm:$0xff pattern:$0x75316420]
    %1052 = vrot.lane.b32.xlu0 %v1050, 127
    %v1053 = vpop.permute.xlu0 %1052
    %1054 = vrot.lane.b32.xlu0 %v1051, 127
    %v1055 = vpop.permute.xlu0 %1054
    %v1056 = vsel %vm447, %v1053, %v1055
    %1059 = vst [vmem:[#allocation1] ss:$2 sm:$0xff] %v732
    %v1060 = vld.sshfl [vmem:[#allocation1] sm:$0xff pattern:$0x75316420]
    %1061 = vrot.lane.b32.xlu0 %v1060, 127
    %v1062 = vpop.permute.xlu0 %1061
    %v1064 = vsel %vm447, %v1055, %v1062
    %v1065 = vsel %vm76, %v1056, 0.0
    %v1066 = vsel %vm77, %v1064, 0.0
    %v1068 = vsel %vm144, %v1065, 0
    %v1071 = vsel %vm144, %v1066, 0
    %1073 = vmatpush.msra.mxu0 0.0
    %1074 = vmatpush.msra.mxu0 0.0
    %1075 = vmatpush.msra.mxu0 0.0
    %1076 = vmatpush.msra.mxu0 0.0
    %1077 = vmatpush.msra.mxu0 0.0
    %1078 = vmatpush.msra.mxu0 0.0
    %1079 = vmatpush.msra.mxu0 0.0
    %1080 = vmatpush.msra.mxu0 0.0
    %1081 = vmatpush.msra.mxu0 0.0
    %1082 = vmatpush.msra.mxu0 0.0
    %1083 = vmatpush.msra.mxu0 0.0
    %1084 = vmatpush.msra.mxu0 0.0
    %1085 = vmatpush.msra.mxu0 0.0
    %1086 = vmatpush.msra.mxu0 0.0
    %1087 = vmatpush.msra.mxu0 0.0
    %1088 = vmatpush.msra.mxu0 %v1068
    %1089 = vmatmul.f32.gmra.mxu0 %v461
    %v1090 = vpop.f32.mrf.mxu0
    %v1091 = vadd.f32 0.0, %v1090
    %1092 = vdwg.mxu0
    %1093 = vmatpush.msra.mxu0 0.0
    %1094 = vmatpush.msra.mxu0 0.0
    %1095 = vmatpush.msra.mxu0 0.0
    %1096 = vmatpush.msra.mxu0 0.0
    %1097 = vmatpush.msra.mxu0 0.0
    %1098 = vmatpush.msra.mxu0 0.0
    %1099 = vmatpush.msra.mxu0 0.0
    %1100 = vmatpush.msra.mxu0 0.0
    %1101 = vmatpush.msra.mxu0 0.0
    %1102 = vmatpush.msra.mxu0 0.0
    %1103 = vmatpush.msra.mxu0 0.0
    %1104 = vmatpush.msra.mxu0 0.0
    %1105 = vmatpush.msra.mxu0 0.0
    %1106 = vmatpush.msra.mxu0 0.0
    %1107 = vmatpush.msra.mxu0 0.0
    %1108 = vmatpush.msra.mxu0 %v1071
    %1109 = vmatmul.f32.gmra.mxu0 %v461
    %v1110 = vpop.f32.mrf.mxu0
    %v1111 = vadd.f32 0.0, %v1110
    %1112 = vdwg.mxu0
    %v1113 = vadd.f32 %v1047, %v1091
    %v1114 = vadd.f32 %v1048, %v1111
    %1115 = vst [vmem:[#allocation1] ss:$2 sm:$0xff] %v732
    %v1116 = vld.sshfl [vmem:[#allocation1] sm:$0xff pattern:$0x75316420]
    %v1117 = vld.sshfl [vmem:[#allocation1 + $0x8] sm:$0xff pattern:$0x75316420]
    %1118 = vrot.lane.b32.xlu0 %v1116, 113
    %v1119 = vpop.permute.xlu0 %1118
    %1120 = vrot.lane.b32.xlu0 %v1117, 113
    %v1121 = vpop.permute.xlu0 %1120
    %v1122 = vsel %vm518, %v1119, %v1121
    %1125 = vst [vmem:[#allocation1] ss:$2 sm:$0xff] %v732
    %v1126 = vld.sshfl [vmem:[#allocation1] sm:$0xff pattern:$0x75316420]
    %1127 = vrot.lane.b32.xlu0 %v1126, 113
    %v1128 = vpop.permute.xlu0 %1127
    %v1130 = vsel %vm518, %v1121, %v1128
    %v1131 = vsel %vm88, %v1122, 0.0
    %v1132 = vsel %vm89, %v1130, 0.0
    %v1134 = vsel %vm144, %v1131, 0
    %v1137 = vsel %vm144, %v1132, 0
    %1139 = vmatpush.msra.mxu0 0.0
    %1140 = vmatpush.msra.mxu0 0.0
    %1141 = vmatpush.msra.mxu0 0.0
    %1142 = vmatpush.msra.mxu0 0.0
    %1143 = vmatpush.msra.mxu0 0.0
    %1144 = vmatpush.msra.mxu0 0.0
    %1145 = vmatpush.msra.mxu0 0.0
    %1146 = vmatpush.msra.mxu0 0.0
    %1147 = vmatpush.msra.mxu0 0.0
    %1148 = vmatpush.msra.mxu0 0.0
    %1149 = vmatpush.msra.mxu0 0.0
    %1150 = vmatpush.msra.mxu0 0.0
    %1151 = vmatpush.msra.mxu0 0.0
    %1152 = vmatpush.msra.mxu0 0.0
    %1153 = vmatpush.msra.mxu0 0.0
    %1154 = vmatpush.msra.mxu0 %v1134
    %1155 = vmatmul.f32.gmra.mxu0 %v532
    %v1156 = vpop.f32.mrf.mxu0
    %v1157 = vadd.f32 0.0, %v1156
    %1158 = vdwg.mxu0
    %1159 = vmatpush.msra.mxu0 0.0
    %1160 = vmatpush.msra.mxu0 0.0
    %1161 = vmatpush.msra.mxu0 0.0
    %1162 = vmatpush.msra.mxu0 0.0
    %1163 = vmatpush.msra.mxu0 0.0
    %1164 = vmatpush.msra.mxu0 0.0
    %1165 = vmatpush.msra.mxu0 0.0
    %1166 = vmatpush.msra.mxu0 0.0
    %1167 = vmatpush.msra.mxu0 0.0
    %1168 = vmatpush.msra.mxu0 0.0
    %1169 = vmatpush.msra.mxu0 0.0
    %1170 = vmatpush.msra.mxu0 0.0
    %1171 = vmatpush.msra.mxu0 0.0
    %1172 = vmatpush.msra.mxu0 0.0
    %1173 = vmatpush.msra.mxu0 0.0
    %1174 = vmatpush.msra.mxu0 %v1137
    %1175 = vmatmul.f32.gmra.mxu0 %v532
    %v1176 = vpop.f32.mrf.mxu0
    %v1177 = vadd.f32 0.0, %v1176
    %1178 = vdwg.mxu0
    %v1179 = vadd.f32 %v1113, %v1157
    %v1180 = vadd.f32 %v1114, %v1177
    %1181 = vst [vmem:[#allocation1] ss:$2 sm:$0xff] %v732
    %v1182 = vld.sshfl [vmem:[#allocation1] sm:$0xff pattern:$0x75316420]
    %v1183 = vld.sshfl [vmem:[#allocation1 + $0x8] sm:$0xff pattern:$0x75316420]
    %1184 = vrot.lane.b32.xlu0 %v1182, 112
    %v1185 = vpop.permute.xlu0 %1184
    %1186 = vrot.lane.b32.xlu0 %v1183, 112
    %v1187 = vpop.permute.xlu0 %1186
    %v1188 = vsel %vm589, %v1185, %v1187
    %1191 = vst [vmem:[#allocation1] ss:$2 sm:$0xff] %v732
    %v1192 = vld.sshfl [vmem:[#allocation1] sm:$0xff pattern:$0x75316420]
    %1193 = vrot.lane.b32.xlu0 %v1192, 112
    %v1194 = vpop.permute.xlu0 %1193
    %v1196 = vsel %vm589, %v1187, %v1194
    %v1197 = vsel %vm92, %v1188, 0.0
    %v1198 = vsel %vm93, %v1196, 0.0
    %v1200 = vsel %vm144, %v1197, 0
    %v1203 = vsel %vm144, %v1198, 0
    %1205 = vmatpush.msra.mxu0 0.0
    %1206 = vmatpush.msra.mxu0 0.0
    %1207 = vmatpush.msra.mxu0 0.0
    %1208 = vmatpush.msra.mxu0 0.0
    %1209 = vmatpush.msra.mxu0 0.0
    %1210 = vmatpush.msra.mxu0 0.0
    %1211 = vmatpush.msra.mxu0 0.0
    %1212 = vmatpush.msra.mxu0 0.0
    %1213 = vmatpush.msra.mxu0 0.0
    %1214 = vmatpush.msra.mxu0 0.0
    %1215 = vmatpush.msra.mxu0 0.0
    %1216 = vmatpush.msra.mxu0 0.0
    %1217 = vmatpush.msra.mxu0 0.0
    %1218 = vmatpush.msra.mxu0 0.0
    %1219 = vmatpush.msra.mxu0 0.0
    %1220 = vmatpush.msra.mxu0 %v1200
    %1221 = vmatmul.f32.gmra.mxu0 %v603
    %v1222 = vpop.f32.mrf.mxu0
    %v1223 = vadd.f32 0.0, %v1222
    %1224 = vdwg.mxu0
    %1225 = vmatpush.msra.mxu0 0.0
    %1226 = vmatpush.msra.mxu0 0.0
    %1227 = vmatpush.msra.mxu0 0.0
    %1228 = vmatpush.msra.mxu0 0.0
    %1229 = vmatpush.msra.mxu0 0.0
    %1230 = vmatpush.msra.mxu0 0.0
    %1231 = vmatpush.msra.mxu0 0.0
    %1232 = vmatpush.msra.mxu0 0.0
    %1233 = vmatpush.msra.mxu0 0.0
    %1234 = vmatpush.msra.mxu0 0.0
    %1235 = vmatpush.msra.mxu0 0.0
    %1236 = vmatpush.msra.mxu0 0.0
    %1237 = vmatpush.msra.mxu0 0.0
    %1238 = vmatpush.msra.mxu0 0.0
    %1239 = vmatpush.msra.mxu0 0.0
    %1240 = vmatpush.msra.mxu0 %v1203
    %1241 = vmatmul.f32.gmra.mxu0 %v603
    %v1242 = vpop.f32.mrf.mxu0
    %v1243 = vadd.f32 0.0, %v1242
    %1244 = vdwg.mxu0
    %v1245 = vadd.f32 %v1179, %v1223
    %v1246 = vadd.f32 %v1180, %v1243
    %1247 = vst [vmem:[#allocation1] ss:$2 sm:$0xff] %v732
    %v1248 = vld.sshfl [vmem:[#allocation1] sm:$0xff pattern:$0x75316420]
    %v1249 = vld.sshfl [vmem:[#allocation1 + $0x8] sm:$0xff pattern:$0x75316420]
    %1250 = vrot.lane.b32.xlu0 %v1248, 111
    %v1251 = vpop.permute.xlu0 %1250
    %1252 = vrot.lane.b32.xlu0 %v1249, 111
    %v1253 = vpop.permute.xlu0 %1252
    %v1254 = vsel %vm660, %v1251, %v1253
    %1257 = vst [vmem:[#allocation1] ss:$2 sm:$0xff] %v732
    %v1258 = vld.sshfl [vmem:[#allocation1] sm:$0xff pattern:$0x75316420]
    %1259 = vrot.lane.b32.xlu0 %v1258, 111
    %v1260 = vpop.permute.xlu0 %1259
    %v1262 = vsel %vm660, %v1253, %v1260
    %v1263 = vsel %vm96, %v1254, 0.0
    %v1264 = vsel %vm97, %v1262, 0.0
    %v1266 = vsel %vm144, %v1263, 0
    %v1269 = vsel %vm144, %v1264, 0
    %1271 = vmatpush.msra.mxu0 0.0
    %1272 = vmatpush.msra.mxu0 0.0
    %1273 = vmatpush.msra.mxu0 0.0
    %1274 = vmatpush.msra.mxu0 0.0
    %1275 = vmatpush.msra.mxu0 0.0
    %1276 = vmatpush.msra.mxu0 0.0
    %1277 = vmatpush.msra.mxu0 0.0
    %1278 = vmatpush.msra.mxu0 0.0
    %1279 = vmatpush.msra.mxu0 0.0
    %1280 = vmatpush.msra.mxu0 0.0
    %1281 = vmatpush.msra.mxu0 0.0
    %1282 = vmatpush.msra.mxu0 0.0
    %1283 = vmatpush.msra.mxu0 0.0
    %1284 = vmatpush.msra.mxu0 0.0
    %1285 = vmatpush.msra.mxu0 0.0
    %1286 = vmatpush.msra.mxu0 %v1266
    %1287 = vmatmul.f32.gmra.mxu0 %v674
    %v1288 = vpop.f32.mrf.mxu0
    %v1289 = vadd.f32 0.0, %v1288
    %1290 = vdwg.mxu0
    %1291 = vmatpush.msra.mxu0 0.0
    %1292 = vmatpush.msra.mxu0 0.0
    %1293 = vmatpush.msra.mxu0 0.0
    %1294 = vmatpush.msra.mxu0 0.0
    %1295 = vmatpush.msra.mxu0 0.0
    %1296 = vmatpush.msra.mxu0 0.0
    %1297 = vmatpush.msra.mxu0 0.0
    %1298 = vmatpush.msra.mxu0 0.0
    %1299 = vmatpush.msra.mxu0 0.0
    %1300 = vmatpush.msra.mxu0 0.0
    %1301 = vmatpush.msra.mxu0 0.0
    %1302 = vmatpush.msra.mxu0 0.0
    %1303 = vmatpush.msra.mxu0 0.0
    %1304 = vmatpush.msra.mxu0 0.0
    %1305 = vmatpush.msra.mxu0 0.0
    %1306 = vmatpush.msra.mxu0 %v1269
    %1307 = vmatmul.f32.gmra.mxu0 %v674
    %v1308 = vpop.f32.mrf.mxu0
    %v1309 = vadd.f32 0.0, %v1308
    %1310 = vdwg.mxu0
    %v1311 = vadd.f32 %v1245, %v1289
    %v1312 = vadd.f32 %v1246, %v1309
    %v1313 = vadd.f32 %v1311, %v726
    %v1314 = vadd.f32 %v1312, %v726
    %v1315 = vmax.f32 %v1313, 0.0
    %v1316 = vmax.f32 %v1314, 0.0
    %v1317 = vsub.f32 %v730, %v1315
    %v1318 = vsub.f32 %v731, %v1316
    %v1319 = vand.u32 2147483647, %v1317
    %v1320 = vand.u32 2147483647, %v1318
    %v1321 = vmul.f32 %v1319, %v17
    %v1322 = vmul.f32 %v1320, %v18
    %v1323 = vadd.f32 %v1321, %v1322
    %1324 = vadd.xlane.f32.xlu0 %v1323
    %v1325 = vpop.xlane.xlu0 %1324
    %v1326 = vrot.slane %v1325, 4
    %v1327 = vadd.f32 %v1325, %v1326
    %v1328 = vrot.slane %v1327, 2
    %v1329 = vadd.f32 %v1327, %v1328
    %v1330 = vrot.slane %v1329, 1
    %v1331 = vadd.f32 %v1329, %v1330
    %v1332 = vadd.f32 %v1331, %v16
    %s1333 = scalar_lea.vmem %s0, 8
    %v1334 = vld [vmem:[%s1333] sm:$0xff]
    %1336 = vst [vmem:[#allocation1] ss:$2 sm:$0xff] %v1334
    %v1337 = vld.sshfl [vmem:[#allocation1 + $0x8] sm:$0xff pattern:$0x75316420]
    %1338 = vrot.lane.b32.xlu0 %v1337, 17
    %v1339 = vpop.permute.xlu0 %1338
    %1341 = vst [vmem:[#allocation1] ss:$2 sm:$0xff] %v1334
    %v1342 = vld.sshfl [vmem:[#allocation1] sm:$0xff pattern:$0x75316420]
    %v1343 = vld.sshfl [vmem:[#allocation1 + $0x8] sm:$0xff pattern:$0x75316420]
    %1344 = vrot.lane.b32.xlu0 %v1342, 17
    %v1345 = vpop.permute.xlu0 %1344
    %1346 = vrot.lane.b32.xlu0 %v1343, 17
    %v1347 = vpop.permute.xlu0 %1346
    %v1348 = vsel %vm112, %v1345, %v1347
    %v1351 = vsel %vm112, %v1339, %v1345
    %v1352 = vsel %vm40, %v1351, 0.0
    %v1353 = vsel %vm41, %v1348, 0.0
    %1354 = vst [vmem:[#allocation1] ss:$2 sm:$0xff] %v1334
    %v1355 = vld.sshfl [vmem:[#allocation1 + $0x8] sm:$0xff pattern:$0x75316420]
    %1356 = vrot.lane.b32.xlu0 %v1355, 16
    %v1357 = vpop.permute.xlu0 %1356
    %1359 = vst [vmem:[#allocation1] ss:$2 sm:$0xff] %v1334
    %v1360 = vld.sshfl [vmem:[#allocation1] sm:$0xff pattern:$0x75316420]
    %v1361 = vld.sshfl [vmem:[#allocation1 + $0x8] sm:$0xff pattern:$0x75316420]
    %1362 = vrot.lane.b32.xlu0 %v1360, 16
    %v1363 = vpop.permute.xlu0 %1362
    %1364 = vrot.lane.b32.xlu0 %v1361, 16
    %v1365 = vpop.permute.xlu0 %1364
    %v1366 = vsel %vm131, %v1363, %v1365
    %v1369 = vsel %vm131, %v1357, %v1363
    %v1370 = vsel %vm48, %v1369, 0.0
    %v1371 = vsel %vm49, %v1366, 0.0
    %v1373 = vsel %vm144, %v1370, 0
    %v1376 = vsel %vm144, %v1371, 0
    %1378 = vmatpush.msra.mxu0 0.0
    %1379 = vmatpush.msra.mxu0 0.0
    %1380 = vmatpush.msra.mxu0 0.0
    %1381 = vmatpush.msra.mxu0 0.0
    %1382 = vmatpush.msra.mxu0 0.0
    %1383 = vmatpush.msra.mxu0 0.0
    %1384 = vmatpush.msra.mxu0 0.0
    %1385 = vmatpush.msra.mxu0 0.0
    %1386 = vmatpush.msra.mxu0 0.0
    %1387 = vmatpush.msra.mxu0 0.0
    %1388 = vmatpush.msra.mxu0 0.0
    %1389 = vmatpush.msra.mxu0 0.0
    %1390 = vmatpush.msra.mxu0 0.0
    %1391 = vmatpush.msra.mxu0 0.0
    %1392 = vmatpush.msra.mxu0 0.0
    %1393 = vmatpush.msra.mxu0 %v1373
    %1394 = vmatmul.f32.gmra.mxu0 %v142
    %v1395 = vpop.f32.mrf.mxu0
    %v1396 = vadd.f32 0.0, %v1395
    %1397 = vdwg.mxu0
    %1398 = vmatpush.msra.mxu0 0.0
    %1399 = vmatpush.msra.mxu0 0.0
    %1400 = vmatpush.msra.mxu0 0.0
    %1401 = vmatpush.msra.mxu0 0.0
    %1402 = vmatpush.msra.mxu0 0.0
    %1403 = vmatpush.msra.mxu0 0.0
    %1404 = vmatpush.msra.mxu0 0.0
    %1405 = vmatpush.msra.mxu0 0.0
    %1406 = vmatpush.msra.mxu0 0.0
    %1407 = vmatpush.msra.mxu0 0.0
    %1408 = vmatpush.msra.mxu0 0.0
    %1409 = vmatpush.msra.mxu0 0.0
    %1410 = vmatpush.msra.mxu0 0.0
    %1411 = vmatpush.msra.mxu0 0.0
    %1412 = vmatpush.msra.mxu0 0.0
    %1413 = vmatpush.msra.mxu0 %v1376
    %1414 = vmatmul.f32.gmra.mxu0 %v142
    %v1415 = vpop.f32.mrf.mxu0
    %v1416 = vadd.f32 0.0, %v1415
    %1417 = vdwg.mxu0
    %v1419 = vsel %vm144, %v1352, 0
    %v1422 = vsel %vm144, %v1353, 0
    %1424 = vmatpush.msra.mxu0 0.0
    %1425 = vmatpush.msra.mxu0 0.0
    %1426 = vmatpush.msra.mxu0 0.0
    %1427 = vmatpush.msra.mxu0 0.0
    %1428 = vmatpush.msra.mxu0 0.0
    %1429 = vmatpush.msra.mxu0 0.0
    %1430 = vmatpush.msra.mxu0 0.0
    %1431 = vmatpush.msra.mxu0 0.0
    %1432 = vmatpush.msra.mxu0 0.0
    %1433 = vmatpush.msra.mxu0 0.0
    %1434 = vmatpush.msra.mxu0 0.0
    %1435 = vmatpush.msra.mxu0 0.0
    %1436 = vmatpush.msra.mxu0 0.0
    %1437 = vmatpush.msra.mxu0 0.0
    %1438 = vmatpush.msra.mxu0 0.0
    %1439 = vmatpush.msra.mxu0 %v1419
    %1440 = vmatmul.f32.gmra.mxu0 %v191
    %v1441 = vpop.f32.mrf.mxu0
    %v1442 = vadd.f32 %v1396, %v1441
    %1443 = vdwg.mxu0
    %1444 = vmatpush.msra.mxu0 0.0
    %1445 = vmatpush.msra.mxu0 0.0
    %1446 = vmatpush.msra.mxu0 0.0
    %1447 = vmatpush.msra.mxu0 0.0
    %1448 = vmatpush.msra.mxu0 0.0
    %1449 = vmatpush.msra.mxu0 0.0
    %1450 = vmatpush.msra.mxu0 0.0
    %1451 = vmatpush.msra.mxu0 0.0
    %1452 = vmatpush.msra.mxu0 0.0
    %1453 = vmatpush.msra.mxu0 0.0
    %1454 = vmatpush.msra.mxu0 0.0
    %1455 = vmatpush.msra.mxu0 0.0
    %1456 = vmatpush.msra.mxu0 0.0
    %1457 = vmatpush.msra.mxu0 0.0
    %1458 = vmatpush.msra.mxu0 0.0
    %1459 = vmatpush.msra.mxu0 %v1422
    %1460 = vmatmul.f32.gmra.mxu0 %v191
    %v1461 = vpop.f32.mrf.mxu0
    %v1462 = vadd.f32 %v1416, %v1461
    %1463 = vdwg.mxu0
    %1464 = vst [vmem:[#allocation1] ss:$2 sm:$0xff] %v1334
    %v1465 = vld.sshfl [vmem:[#allocation1 + $0x8] sm:$0xff pattern:$0x75316420]
    %1466 = vrot.lane.b32.xlu0 %v1465, 15
    %v1467 = vpop.permute.xlu0 %1466
    %1469 = vst [vmem:[#allocation1] ss:$2 sm:$0xff] %v1334
    %v1470 = vld.sshfl [vmem:[#allocation1] sm:$0xff pattern:$0x75316420]
    %v1471 = vld.sshfl [vmem:[#allocation1 + $0x8] sm:$0xff pattern:$0x75316420]
    %1472 = vrot.lane.b32.xlu0 %v1470, 15
    %v1473 = vpop.permute.xlu0 %1472
    %1474 = vrot.lane.b32.xlu0 %v1471, 15
    %v1475 = vpop.permute.xlu0 %1474
    %v1476 = vsel %vm251, %v1473, %v1475
    %v1479 = vsel %vm251, %v1467, %v1473
    %v1480 = vsel %vm58, %v1479, 0.0
    %v1481 = vsel %vm59, %v1476, 0.0
    %v1483 = vsel %vm144, %v1480, 0
    %v1486 = vsel %vm144, %v1481, 0
    %1488 = vmatpush.msra.mxu0 0.0
    %1489 = vmatpush.msra.mxu0 0.0
    %1490 = vmatpush.msra.mxu0 0.0
    %1491 = vmatpush.msra.mxu0 0.0
    %1492 = vmatpush.msra.mxu0 0.0
    %1493 = vmatpush.msra.mxu0 0.0
    %1494 = vmatpush.msra.mxu0 0.0
    %1495 = vmatpush.msra.mxu0 0.0
    %1496 = vmatpush.msra.mxu0 0.0
    %1497 = vmatpush.msra.mxu0 0.0
    %1498 = vmatpush.msra.mxu0 0.0
    %1499 = vmatpush.msra.mxu0 0.0
    %1500 = vmatpush.msra.mxu0 0.0
    %1501 = vmatpush.msra.mxu0 0.0
    %1502 = vmatpush.msra.mxu0 0.0
    %1503 = vmatpush.msra.mxu0 %v1483
    %1504 = vmatmul.f32.gmra.mxu0 %v260
    %v1505 = vpop.f32.mrf.mxu0
    %v1506 = vadd.f32 0.0, %v1505
    %1507 = vdwg.mxu0
    %1508 = vmatpush.msra.mxu0 0.0
    %1509 = vmatpush.msra.mxu0 0.0
    %1510 = vmatpush.msra.mxu0 0.0
    %1511 = vmatpush.msra.mxu0 0.0
    %1512 = vmatpush.msra.mxu0 0.0
    %1513 = vmatpush.msra.mxu0 0.0
    %1514 = vmatpush.msra.mxu0 0.0
    %1515 = vmatpush.msra.mxu0 0.0
    %1516 = vmatpush.msra.mxu0 0.0
    %1517 = vmatpush.msra.mxu0 0.0
    %1518 = vmatpush.msra.mxu0 0.0
    %1519 = vmatpush.msra.mxu0 0.0
    %1520 = vmatpush.msra.mxu0 0.0
    %1521 = vmatpush.msra.mxu0 0.0
    %1522 = vmatpush.msra.mxu0 0.0
    %1523 = vmatpush.msra.mxu0 %v1486
    %1524 = vmatmul.f32.gmra.mxu0 %v260
    %v1525 = vpop.f32.mrf.mxu0
    %v1526 = vadd.f32 0.0, %v1525
    %1527 = vdwg.mxu0
    %v1528 = vadd.f32 %v1442, %v1506
    %v1529 = vadd.f32 %v1462, %v1526
    %1530 = vst [vmem:[#allocation1] ss:$2 sm:$0xff] %v1334
    %v1531 = vld.sshfl [vmem:[#allocation1 + $0x8] sm:$0xff pattern:$0x75316420]
    %1532 = vrot.lane.b32.xlu0 %v1531, 1
    %v1533 = vpop.permute.xlu0 %1532
    %1535 = vst [vmem:[#allocation1] ss:$2 sm:$0xff] %v1334
    %v1536 = vld.sshfl [vmem:[#allocation1] sm:$0xff pattern:$0x75316420]
    %v1537 = vld.sshfl [vmem:[#allocation1 + $0x8] sm:$0xff pattern:$0x75316420]
    %1538 = vrot.lane.b32.xlu0 %v1536, 1
    %v1539 = vpop.permute.xlu0 %1538
    %1540 = vrot.lane.b32.xlu0 %v1537, 1
    %v1541 = vpop.permute.xlu0 %1540
    %v1542 = vsel %vm322, %v1539, %v1541
    %v1545 = vsel %vm322, %v1533, %v1539
    %v1546 = vsel %vm68, %v1545, 0.0
    %v1547 = vsel %vm69, %v1542, 0.0
    %v1549 = vsel %vm144, %v1546, 0
    %v1552 = vsel %vm144, %v1547, 0
    %1554 = vmatpush.msra.mxu0 0.0
    %1555 = vmatpush.msra.mxu0 0.0
    %1556 = vmatpush.msra.mxu0 0.0
    %1557 = vmatpush.msra.mxu0 0.0
    %1558 = vmatpush.msra.mxu0 0.0
    %1559 = vmatpush.msra.mxu0 0.0
    %1560 = vmatpush.msra.mxu0 0.0
    %1561 = vmatpush.msra.mxu0 0.0
    %1562 = vmatpush.msra.mxu0 0.0
    %1563 = vmatpush.msra.mxu0 0.0
    %1564 = vmatpush.msra.mxu0 0.0
    %1565 = vmatpush.msra.mxu0 0.0
    %1566 = vmatpush.msra.mxu0 0.0
    %1567 = vmatpush.msra.mxu0 0.0
    %1568 = vmatpush.msra.mxu0 0.0
    %1569 = vmatpush.msra.mxu0 %v1549
    %1570 = vmatmul.f32.gmra.mxu0 %v331
    %v1571 = vpop.f32.mrf.mxu0
    %v1572 = vadd.f32 0.0, %v1571
    %1573 = vdwg.mxu0
    %1574 = vmatpush.msra.mxu0 0.0
    %1575 = vmatpush.msra.mxu0 0.0
    %1576 = vmatpush.msra.mxu0 0.0
    %1577 = vmatpush.msra.mxu0 0.0
    %1578 = vmatpush.msra.mxu0 0.0
    %1579 = vmatpush.msra.mxu0 0.0
    %1580 = vmatpush.msra.mxu0 0.0
    %1581 = vmatpush.msra.mxu0 0.0
    %1582 = vmatpush.msra.mxu0 0.0
    %1583 = vmatpush.msra.mxu0 0.0
    %1584 = vmatpush.msra.mxu0 0.0
    %1585 = vmatpush.msra.mxu0 0.0
    %1586 = vmatpush.msra.mxu0 0.0
    %1587 = vmatpush.msra.mxu0 0.0
    %1588 = vmatpush.msra.mxu0 0.0
    %1589 = vmatpush.msra.mxu0 %v1552
    %1590 = vmatmul.f32.gmra.mxu0 %v331
    %v1591 = vpop.f32.mrf.mxu0
    %v1592 = vadd.f32 0.0, %v1591
    %1593 = vdwg.mxu0
    %v1594 = vadd.f32 %v1528, %v1572
    %v1595 = vadd.f32 %v1529, %v1592
    %1596 = vst [vmem:[#allocation1] ss:$2 sm:$0xff] %v1334
    %v1597 = vld.sshfl [vmem:[#allocation1] sm:$0xff pattern:$0x75316420]
    %v1598 = vld.sshfl [vmem:[#allocation1 + $0x8] sm:$0xff pattern:$0x75316420]
    %v1601 = vsel %vm72, %v1597, 0.0
    %v1602 = vsel %vm73, %v1598, 0.0
    %v1604 = vsel %vm144, %v1601, 0
    %v1607 = vsel %vm144, %v1602, 0
    %1609 = vmatpush.msra.mxu0 0.0
    %1610 = vmatpush.msra.mxu0 0.0
    %1611 = vmatpush.msra.mxu0 0.0
    %1612 = vmatpush.msra.mxu0 0.0
    %1613 = vmatpush.msra.mxu0 0.0
    %1614 = vmatpush.msra.mxu0 0.0
    %1615 = vmatpush.msra.mxu0 0.0
    %1616 = vmatpush.msra.mxu0 0.0
    %1617 = vmatpush.msra.mxu0 0.0
    %1618 = vmatpush.msra.mxu0 0.0
    %1619 = vmatpush.msra.mxu0 0.0
    %1620 = vmatpush.msra.mxu0 0.0
    %1621 = vmatpush.msra.mxu0 0.0
    %1622 = vmatpush.msra.mxu0 0.0
    %1623 = vmatpush.msra.mxu0 0.0
    %1624 = vmatpush.msra.mxu0 %v1604
    %1625 = vmatmul.f32.gmra.mxu0 %v390
    %v1626 = vpop.f32.mrf.mxu0
    %v1627 = vadd.f32 0.0, %v1626
    %1628 = vdwg.mxu0
    %1629 = vmatpush.msra.mxu0 0.0
    %1630 = vmatpush.msra.mxu0 0.0
    %1631 = vmatpush.msra.mxu0 0.0
    %1632 = vmatpush.msra.mxu0 0.0
    %1633 = vmatpush.msra.mxu0 0.0
    %1634 = vmatpush.msra.mxu0 0.0
    %1635 = vmatpush.msra.mxu0 0.0
    %1636 = vmatpush.msra.mxu0 0.0
    %1637 = vmatpush.msra.mxu0 0.0
    %1638 = vmatpush.msra.mxu0 0.0
    %1639 = vmatpush.msra.mxu0 0.0
    %1640 = vmatpush.msra.mxu0 0.0
    %1641 = vmatpush.msra.mxu0 0.0
    %1642 = vmatpush.msra.mxu0 0.0
    %1643 = vmatpush.msra.mxu0 0.0
    %1644 = vmatpush.msra.mxu0 %v1607
    %1645 = vmatmul.f32.gmra.mxu0 %v390
    %v1646 = vpop.f32.mrf.mxu0
    %v1647 = vadd.f32 0.0, %v1646
    %1648 = vdwg.mxu0
    %v1649 = vadd.f32 %v1594, %v1627
    %v1650 = vadd.f32 %v1595, %v1647
    %1651 = vst [vmem:[#allocation1] ss:$2 sm:$0xff] %v1334
    %v1652 = vld.sshfl [vmem:[#allocation1] sm:$0xff pattern:$0x75316420]
    %v1653 = vld.sshfl [vmem:[#allocation1 + $0x8] sm:$0xff pattern:$0x75316420]
    %1654 = vrot.lane.b32.xlu0 %v1652, 127
    %v1655 = vpop.permute.xlu0 %1654
    %1656 = vrot.lane.b32.xlu0 %v1653, 127
    %v1657 = vpop.permute.xlu0 %1656
    %v1658 = vsel %vm447, %v1655, %v1657
    %1661 = vst [vmem:[#allocation1] ss:$2 sm:$0xff] %v1334
    %v1662 = vld.sshfl [vmem:[#allocation1] sm:$0xff pattern:$0x75316420]
    %1663 = vrot.lane.b32.xlu0 %v1662, 127
    %v1664 = vpop.permute.xlu0 %1663
    %v1666 = vsel %vm447, %v1657, %v1664
    %v1667 = vsel %vm76, %v1658, 0.0
    %v1668 = vsel %vm77, %v1666, 0.0
    %v1670 = vsel %vm144, %v1667, 0
    %v1673 = vsel %vm144, %v1668, 0
    %1675 = vmatpush.msra.mxu0 0.0
    %1676 = vmatpush.msra.mxu0 0.0
    %1677 = vmatpush.msra.mxu0 0.0
    %1678 = vmatpush.msra.mxu0 0.0
    %1679 = vmatpush.msra.mxu0 0.0
    %1680 = vmatpush.msra.mxu0 0.0
    %1681 = vmatpush.msra.mxu0 0.0
    %1682 = vmatpush.msra.mxu0 0.0
    %1683 = vmatpush.msra.mxu0 0.0
    %1684 = vmatpush.msra.mxu0 0.0
    %1685 = vmatpush.msra.mxu0 0.0
    %1686 = vmatpush.msra.mxu0 0.0
    %1687 = vmatpush.msra.mxu0 0.0
    %1688 = vmatpush.msra.mxu0 0.0
    %1689 = vmatpush.msra.mxu0 0.0
    %1690 = vmatpush.msra.mxu0 %v1670
    %1691 = vmatmul.f32.gmra.mxu0 %v461
    %v1692 = vpop.f32.mrf.mxu0
    %v1693 = vadd.f32 0.0, %v1692
    %1694 = vdwg.mxu0
    %1695 = vmatpush.msra.mxu0 0.0
    %1696 = vmatpush.msra.mxu0 0.0
    %1697 = vmatpush.msra.mxu0 0.0
    %1698 = vmatpush.msra.mxu0 0.0
    %1699 = vmatpush.msra.mxu0 0.0
    %1700 = vmatpush.msra.mxu0 0.0
    %1701 = vmatpush.msra.mxu0 0.0
    %1702 = vmatpush.msra.mxu0 0.0
    %1703 = vmatpush.msra.mxu0 0.0
    %1704 = vmatpush.msra.mxu0 0.0
    %1705 = vmatpush.msra.mxu0 0.0
    %1706 = vmatpush.msra.mxu0 0.0
    %1707 = vmatpush.msra.mxu0 0.0
    %1708 = vmatpush.msra.mxu0 0.0
    %1709 = vmatpush.msra.mxu0 0.0
    %1710 = vmatpush.msra.mxu0 %v1673
    %1711 = vmatmul.f32.gmra.mxu0 %v461
    %v1712 = vpop.f32.mrf.mxu0
    %v1713 = vadd.f32 0.0, %v1712
    %1714 = vdwg.mxu0
    %v1715 = vadd.f32 %v1649, %v1693
    %v1716 = vadd.f32 %v1650, %v1713
    %1717 = vst [vmem:[#allocation1] ss:$2 sm:$0xff] %v1334
    %v1718 = vld.sshfl [vmem:[#allocation1] sm:$0xff pattern:$0x75316420]
    %v1719 = vld.sshfl [vmem:[#allocation1 + $0x8] sm:$0xff pattern:$0x75316420]
    %1720 = vrot.lane.b32.xlu0 %v1718, 113
    %v1721 = vpop.permute.xlu0 %1720
    %1722 = vrot.lane.b32.xlu0 %v1719, 113
    %v1723 = vpop.permute.xlu0 %1722
    %v1724 = vsel %vm518, %v1721, %v1723
    %1727 = vst [vmem:[#allocation1] ss:$2 sm:$0xff] %v1334
    %v1728 = vld.sshfl [vmem:[#allocation1] sm:$0xff pattern:$0x75316420]
    %1729 = vrot.lane.b32.xlu0 %v1728, 113
    %v1730 = vpop.permute.xlu0 %1729
    %v1732 = vsel %vm518, %v1723, %v1730
    %v1733 = vsel %vm88, %v1724, 0.0
    %v1734 = vsel %vm89, %v1732, 0.0
    %v1736 = vsel %vm144, %v1733, 0
    %v1739 = vsel %vm144, %v1734, 0
    %1741 = vmatpush.msra.mxu0 0.0
    %1742 = vmatpush.msra.mxu0 0.0
    %1743 = vmatpush.msra.mxu0 0.0
    %1744 = vmatpush.msra.mxu0 0.0
    %1745 = vmatpush.msra.mxu0 0.0
    %1746 = vmatpush.msra.mxu0 0.0
    %1747 = vmatpush.msra.mxu0 0.0
    %1748 = vmatpush.msra.mxu0 0.0
    %1749 = vmatpush.msra.mxu0 0.0
    %1750 = vmatpush.msra.mxu0 0.0
    %1751 = vmatpush.msra.mxu0 0.0
    %1752 = vmatpush.msra.mxu0 0.0
    %1753 = vmatpush.msra.mxu0 0.0
    %1754 = vmatpush.msra.mxu0 0.0
    %1755 = vmatpush.msra.mxu0 0.0
    %1756 = vmatpush.msra.mxu0 %v1736
    %1757 = vmatmul.f32.gmra.mxu0 %v532
    %v1758 = vpop.f32.mrf.mxu0
    %v1759 = vadd.f32 0.0, %v1758
    %1760 = vdwg.mxu0
    %1761 = vmatpush.msra.mxu0 0.0
    %1762 = vmatpush.msra.mxu0 0.0
    %1763 = vmatpush.msra.mxu0 0.0
    %1764 = vmatpush.msra.mxu0 0.0
    %1765 = vmatpush.msra.mxu0 0.0
    %1766 = vmatpush.msra.mxu0 0.0
    %1767 = vmatpush.msra.mxu0 0.0
    %1768 = vmatpush.msra.mxu0 0.0
    %1769 = vmatpush.msra.mxu0 0.0
    %1770 = vmatpush.msra.mxu0 0.0
    %1771 = vmatpush.msra.mxu0 0.0
    %1772 = vmatpush.msra.mxu0 0.0
    %1773 = vmatpush.msra.mxu0 0.0
    %1774 = vmatpush.msra.mxu0 0.0
    %1775 = vmatpush.msra.mxu0 0.0
    %1776 = vmatpush.msra.mxu0 %v1739
    %1777 = vmatmul.f32.gmra.mxu0 %v532
    %v1778 = vpop.f32.mrf.mxu0
    %v1779 = vadd.f32 0.0, %v1778
    %1780 = vdwg.mxu0
    %v1781 = vadd.f32 %v1715, %v1759
    %v1782 = vadd.f32 %v1716, %v1779
    %1783 = vst [vmem:[#allocation1] ss:$2 sm:$0xff] %v1334
    %v1784 = vld.sshfl [vmem:[#allocation1] sm:$0xff pattern:$0x75316420]
    %v1785 = vld.sshfl [vmem:[#allocation1 + $0x8] sm:$0xff pattern:$0x75316420]
    %1786 = vrot.lane.b32.xlu0 %v1784, 112
    %v1787 = vpop.permute.xlu0 %1786
    %1788 = vrot.lane.b32.xlu0 %v1785, 112
    %v1789 = vpop.permute.xlu0 %1788
    %v1790 = vsel %vm589, %v1787, %v1789
    %1793 = vst [vmem:[#allocation1] ss:$2 sm:$0xff] %v1334
    %v1794 = vld.sshfl [vmem:[#allocation1] sm:$0xff pattern:$0x75316420]
    %1795 = vrot.lane.b32.xlu0 %v1794, 112
    %v1796 = vpop.permute.xlu0 %1795
    %v1798 = vsel %vm589, %v1789, %v1796
    %v1799 = vsel %vm92, %v1790, 0.0
    %v1800 = vsel %vm93, %v1798, 0.0
    %v1802 = vsel %vm144, %v1799, 0
    %v1805 = vsel %vm144, %v1800, 0
    %1807 = vmatpush.msra.mxu0 0.0
    %1808 = vmatpush.msra.mxu0 0.0
    %1809 = vmatpush.msra.mxu0 0.0
    %1810 = vmatpush.msra.mxu0 0.0
    %1811 = vmatpush.msra.mxu0 0.0
    %1812 = vmatpush.msra.mxu0 0.0
    %1813 = vmatpush.msra.mxu0 0.0
    %1814 = vmatpush.msra.mxu0 0.0
    %1815 = vmatpush.msra.mxu0 0.0
    %1816 = vmatpush.msra.mxu0 0.0
    %1817 = vmatpush.msra.mxu0 0.0
    %1818 = vmatpush.msra.mxu0 0.0
    %1819 = vmatpush.msra.mxu0 0.0
    %1820 = vmatpush.msra.mxu0 0.0
    %1821 = vmatpush.msra.mxu0 0.0
    %1822 = vmatpush.msra.mxu0 %v1802
    %1823 = vmatmul.f32.gmra.mxu0 %v603
    %v1824 = vpop.f32.mrf.mxu0
    %v1825 = vadd.f32 0.0, %v1824
    %1826 = vdwg.mxu0
    %1827 = vmatpush.msra.mxu0 0.0
    %1828 = vmatpush.msra.mxu0 0.0
    %1829 = vmatpush.msra.mxu0 0.0
    %1830 = vmatpush.msra.mxu0 0.0
    %1831 = vmatpush.msra.mxu0 0.0
    %1832 = vmatpush.msra.mxu0 0.0
    %1833 = vmatpush.msra.mxu0 0.0
    %1834 = vmatpush.msra.mxu0 0.0
    %1835 = vmatpush.msra.mxu0 0.0
    %1836 = vmatpush.msra.mxu0 0.0
    %1837 = vmatpush.msra.mxu0 0.0
    %1838 = vmatpush.msra.mxu0 0.0
    %1839 = vmatpush.msra.mxu0 0.0
    %1840 = vmatpush.msra.mxu0 0.0
    %1841 = vmatpush.msra.mxu0 0.0
    %1842 = vmatpush.msra.mxu0 %v1805
    %1843 = vmatmul.f32.gmra.mxu0 %v603
    %v1844 = vpop.f32.mrf.mxu0
    %v1845 = vadd.f32 0.0, %v1844
    %1846 = vdwg.mxu0
    %v1847 = vadd.f32 %v1781, %v1825
    %v1848 = vadd.f32 %v1782, %v1845
    %1849 = vst [vmem:[#allocation1] ss:$2 sm:$0xff] %v1334
    %v1850 = vld.sshfl [vmem:[#allocation1] sm:$0xff pattern:$0x75316420]
    %v1851 = vld.sshfl [vmem:[#allocation1 + $0x8] sm:$0xff pattern:$0x75316420]
    %1852 = vrot.lane.b32.xlu0 %v1850, 111
    %v1853 = vpop.permute.xlu0 %1852
    %1854 = vrot.lane.b32.xlu0 %v1851, 111
    %v1855 = vpop.permute.xlu0 %1854
    %v1856 = vsel %vm660, %v1853, %v1855
    %1859 = vst [vmem:[#allocation1] ss:$2 sm:$0xff] %v1334
    %v1860 = vld.sshfl [vmem:[#allocation1] sm:$0xff pattern:$0x75316420]
    %1861 = vrot.lane.b32.xlu0 %v1860, 111
    %v1862 = vpop.permute.xlu0 %1861
    %v1864 = vsel %vm660, %v1855, %v1862
    %v1865 = vsel %vm96, %v1856, 0.0
    %v1866 = vsel %vm97, %v1864, 0.0
    %v1868 = vsel %vm144, %v1865, 0
    %v1871 = vsel %vm144, %v1866, 0
    %1873 = vmatpush.msra.mxu0 0.0
    %1874 = vmatpush.msra.mxu0 0.0
    %1875 = vmatpush.msra.mxu0 0.0
    %1876 = vmatpush.msra.mxu0 0.0
    %1877 = vmatpush.msra.mxu0 0.0
    %1878 = vmatpush.msra.mxu0 0.0
    %1879 = vmatpush.msra.mxu0 0.0
    %1880 = vmatpush.msra.mxu0 0.0
    %1881 = vmatpush.msra.mxu0 0.0
    %1882 = vmatpush.msra.mxu0 0.0
    %1883 = vmatpush.msra.mxu0 0.0
    %1884 = vmatpush.msra.mxu0 0.0
    %1885 = vmatpush.msra.mxu0 0.0
    %1886 = vmatpush.msra.mxu0 0.0
    %1887 = vmatpush.msra.mxu0 0.0
    %1888 = vmatpush.msra.mxu0 %v1868
    %1889 = vmatmul.f32.gmra.mxu0 %v674
    %v1890 = vpop.f32.mrf.mxu0
    %v1891 = vadd.f32 0.0, %v1890
    %1892 = vdwg.mxu0
    %1893 = vmatpush.msra.mxu0 0.0
    %1894 = vmatpush.msra.mxu0 0.0
    %1895 = vmatpush.msra.mxu0 0.0
    %1896 = vmatpush.msra.mxu0 0.0
    %1897 = vmatpush.msra.mxu0 0.0
    %1898 = vmatpush.msra.mxu0 0.0
    %1899 = vmatpush.msra.mxu0 0.0
    %1900 = vmatpush.msra.mxu0 0.0
    %1901 = vmatpush.msra.mxu0 0.0
    %1902 = vmatpush.msra.mxu0 0.0
    %1903 = vmatpush.msra.mxu0 0.0
    %1904 = vmatpush.msra.mxu0 0.0
    %1905 = vmatpush.msra.mxu0 0.0
    %1906 = vmatpush.msra.mxu0 0.0
    %1907 = vmatpush.msra.mxu0 0.0
    %1908 = vmatpush.msra.mxu0 %v1871
    %1909 = vmatmul.f32.gmra.mxu0 %v674
    %v1910 = vpop.f32.mrf.mxu0
    %v1911 = vadd.f32 0.0, %v1910
    %1912 = vdwg.mxu0
    %v1913 = vadd.f32 %v1847, %v1891
    %v1914 = vadd.f32 %v1848, %v1911
    %v1915 = vadd.f32 %v1913, %v726
    %v1916 = vadd.f32 %v1914, %v726
    %v1917 = vmax.f32 %v1915, 0.0
    %v1918 = vmax.f32 %v1916, 0.0
    %s1919 = scalar_lea.vmem %s1, 8
    %v1920 = vld [vmem:[%s1919] sm:$0xff]
    %1922 = vst [vmem:[#allocation1] ss:$2 sm:$0xff] %v1920
    %v1923 = vld.sshfl [vmem:[#allocation1 + $0x8] sm:$0xff pattern:$0x75316420]
    %1924 = vrot.lane.b32.xlu0 %v1923, 17
    %v1925 = vpop.permute.xlu0 %1924
    %1927 = vst [vmem:[#allocation1] ss:$2 sm:$0xff] %v1920
    %v1928 = vld.sshfl [vmem:[#allocation1] sm:$0xff pattern:$0x75316420]
    %v1929 = vld.sshfl [vmem:[#allocation1 + $0x8] sm:$0xff pattern:$0x75316420]
    %1930 = vrot.lane.b32.xlu0 %v1928, 17
    %v1931 = vpop.permute.xlu0 %1930
    %1932 = vrot.lane.b32.xlu0 %v1929, 17
    %v1933 = vpop.permute.xlu0 %1932
    %v1934 = vsel %vm112, %v1931, %v1933
    %v1937 = vsel %vm112, %v1925, %v1931
    %v1938 = vsel %vm40, %v1937, 0.0
    %v1939 = vsel %vm41, %v1934, 0.0
    %1940 = vst [vmem:[#allocation1] ss:$2 sm:$0xff] %v1920
    %v1941 = vld.sshfl [vmem:[#allocation1 + $0x8] sm:$0xff pattern:$0x75316420]
    %1942 = vrot.lane.b32.xlu0 %v1941, 16
    %v1943 = vpop.permute.xlu0 %1942
    %1945 = vst [vmem:[#allocation1] ss:$2 sm:$0xff] %v1920
    %v1946 = vld.sshfl [vmem:[#allocation1] sm:$0xff pattern:$0x75316420]
    %v1947 = vld.sshfl [vmem:[#allocation1 + $0x8] sm:$0xff pattern:$0x75316420]
    %1948 = vrot.lane.b32.xlu0 %v1946, 16
    %v1949 = vpop.permute.xlu0 %1948
    %1950 = vrot.lane.b32.xlu0 %v1947, 16
    %v1951 = vpop.permute.xlu0 %1950
    %v1952 = vsel %vm131, %v1949, %v1951
    %v1955 = vsel %vm131, %v1943, %v1949
    %v1956 = vsel %vm48, %v1955, 0.0
    %v1957 = vsel %vm49, %v1952, 0.0
    %v1959 = vsel %vm144, %v1956, 0
    %v1962 = vsel %vm144, %v1957, 0
    %1964 = vmatpush.msra.mxu0 0.0
    %1965 = vmatpush.msra.mxu0 0.0
    %1966 = vmatpush.msra.mxu0 0.0
    %1967 = vmatpush.msra.mxu0 0.0
    %1968 = vmatpush.msra.mxu0 0.0
    %1969 = vmatpush.msra.mxu0 0.0
    %1970 = vmatpush.msra.mxu0 0.0
    %1971 = vmatpush.msra.mxu0 0.0
    %1972 = vmatpush.msra.mxu0 0.0
    %1973 = vmatpush.msra.mxu0 0.0
    %1974 = vmatpush.msra.mxu0 0.0
    %1975 = vmatpush.msra.mxu0 0.0
    %1976 = vmatpush.msra.mxu0 0.0
    %1977 = vmatpush.msra.mxu0 0.0
    %1978 = vmatpush.msra.mxu0 0.0
    %1979 = vmatpush.msra.mxu0 %v1959
    %1980 = vmatmul.f32.gmra.mxu0 %v142
    %v1981 = vpop.f32.mrf.mxu0
    %v1982 = vadd.f32 0.0, %v1981
    %1983 = vdwg.mxu0
    %1984 = vmatpush.msra.mxu0 0.0
    %1985 = vmatpush.msra.mxu0 0.0
    %1986 = vmatpush.msra.mxu0 0.0
    %1987 = vmatpush.msra.mxu0 0.0
    %1988 = vmatpush.msra.mxu0 0.0
    %1989 = vmatpush.msra.mxu0 0.0
    %1990 = vmatpush.msra.mxu0 0.0
    %1991 = vmatpush.msra.mxu0 0.0
    %1992 = vmatpush.msra.mxu0 0.0
    %1993 = vmatpush.msra.mxu0 0.0
    %1994 = vmatpush.msra.mxu0 0.0
    %1995 = vmatpush.msra.mxu0 0.0
    %1996 = vmatpush.msra.mxu0 0.0
    %1997 = vmatpush.msra.mxu0 0.0
    %1998 = vmatpush.msra.mxu0 0.0
    %1999 = vmatpush.msra.mxu0 %v1962
    %2000 = vmatmul.f32.gmra.mxu0 %v142
    %v2001 = vpop.f32.mrf.mxu0
    %v2002 = vadd.f32 0.0, %v2001
    %2003 = vdwg.mxu0
    %v2005 = vsel %vm144, %v1938, 0
    %v2008 = vsel %vm144, %v1939, 0
    %2010 = vmatpush.msra.mxu0 0.0
    %2011 = vmatpush.msra.mxu0 0.0
    %2012 = vmatpush.msra.mxu0 0.0
    %2013 = vmatpush.msra.mxu0 0.0
    %2014 = vmatpush.msra.mxu0 0.0
    %2015 = vmatpush.msra.mxu0 0.0
    %2016 = vmatpush.msra.mxu0 0.0
    %2017 = vmatpush.msra.mxu0 0.0
    %2018 = vmatpush.msra.mxu0 0.0
    %2019 = vmatpush.msra.mxu0 0.0
    %2020 = vmatpush.msra.mxu0 0.0
    %2021 = vmatpush.msra.mxu0 0.0
    %2022 = vmatpush.msra.mxu0 0.0
    %2023 = vmatpush.msra.mxu0 0.0
    %2024 = vmatpush.msra.mxu0 0.0
    %2025 = vmatpush.msra.mxu0 %v2005
    %2026 = vmatmul.f32.gmra.mxu0 %v191
    %v2027 = vpop.f32.mrf.mxu0
    %v2028 = vadd.f32 %v1982, %v2027
    %2029 = vdwg.mxu0
    %2030 = vmatpush.msra.mxu0 0.0
    %2031 = vmatpush.msra.mxu0 0.0
    %2032 = vmatpush.msra.mxu0 0.0
    %2033 = vmatpush.msra.mxu0 0.0
    %2034 = vmatpush.msra.mxu0 0.0
    %2035 = vmatpush.msra.mxu0 0.0
    %2036 = vmatpush.msra.mxu0 0.0
    %2037 = vmatpush.msra.mxu0 0.0
    %2038 = vmatpush.msra.mxu0 0.0
    %2039 = vmatpush.msra.mxu0 0.0
    %2040 = vmatpush.msra.mxu0 0.0
    %2041 = vmatpush.msra.mxu0 0.0
    %2042 = vmatpush.msra.mxu0 0.0
    %2043 = vmatpush.msra.mxu0 0.0
    %2044 = vmatpush.msra.mxu0 0.0
    %2045 = vmatpush.msra.mxu0 %v2008
    %2046 = vmatmul.f32.gmra.mxu0 %v191
    %v2047 = vpop.f32.mrf.mxu0
    %v2048 = vadd.f32 %v2002, %v2047
    %2049 = vdwg.mxu0
    %2050 = vst [vmem:[#allocation1] ss:$2 sm:$0xff] %v1920
    %v2051 = vld.sshfl [vmem:[#allocation1 + $0x8] sm:$0xff pattern:$0x75316420]
    %2052 = vrot.lane.b32.xlu0 %v2051, 15
    %v2053 = vpop.permute.xlu0 %2052
    %2055 = vst [vmem:[#allocation1] ss:$2 sm:$0xff] %v1920
    %v2056 = vld.sshfl [vmem:[#allocation1] sm:$0xff pattern:$0x75316420]
    %v2057 = vld.sshfl [vmem:[#allocation1 + $0x8] sm:$0xff pattern:$0x75316420]
    %2058 = vrot.lane.b32.xlu0 %v2056, 15
    %v2059 = vpop.permute.xlu0 %2058
    %2060 = vrot.lane.b32.xlu0 %v2057, 15
    %v2061 = vpop.permute.xlu0 %2060
    %v2062 = vsel %vm251, %v2059, %v2061
    %v2065 = vsel %vm251, %v2053, %v2059
    %v2066 = vsel %vm58, %v2065, 0.0
    %v2067 = vsel %vm59, %v2062, 0.0
    %v2069 = vsel %vm144, %v2066, 0
    %v2072 = vsel %vm144, %v2067, 0
    %2074 = vmatpush.msra.mxu0 0.0
    %2075 = vmatpush.msra.mxu0 0.0
    %2076 = vmatpush.msra.mxu0 0.0
    %2077 = vmatpush.msra.mxu0 0.0
    %2078 = vmatpush.msra.mxu0 0.0
    %2079 = vmatpush.msra.mxu0 0.0
    %2080 = vmatpush.msra.mxu0 0.0
    %2081 = vmatpush.msra.mxu0 0.0
    %2082 = vmatpush.msra.mxu0 0.0
    %2083 = vmatpush.msra.mxu0 0.0
    %2084 = vmatpush.msra.mxu0 0.0
    %2085 = vmatpush.msra.mxu0 0.0
    %2086 = vmatpush.msra.mxu0 0.0
    %2087 = vmatpush.msra.mxu0 0.0
    %2088 = vmatpush.msra.mxu0 0.0
    %2089 = vmatpush.msra.mxu0 %v2069
    %2090 = vmatmul.f32.gmra.mxu0 %v260
    %v2091 = vpop.f32.mrf.mxu0
    %v2092 = vadd.f32 0.0, %v2091
    %2093 = vdwg.mxu0
    %2094 = vmatpush.msra.mxu0 0.0
    %2095 = vmatpush.msra.mxu0 0.0
    %2096 = vmatpush.msra.mxu0 0.0
    %2097 = vmatpush.msra.mxu0 0.0
    %2098 = vmatpush.msra.mxu0 0.0
    %2099 = vmatpush.msra.mxu0 0.0
    %2100 = vmatpush.msra.mxu0 0.0
    %2101 = vmatpush.msra.mxu0 0.0
    %2102 = vmatpush.msra.mxu0 0.0
    %2103 = vmatpush.msra.mxu0 0.0
    %2104 = vmatpush.msra.mxu0 0.0
    %2105 = vmatpush.msra.mxu0 0.0
    %2106 = vmatpush.msra.mxu0 0.0
    %2107 = vmatpush.msra.mxu0 0.0
    %2108 = vmatpush.msra.mxu0 0.0
    %2109 = vmatpush.msra.mxu0 %v2072
    %2110 = vmatmul.f32.gmra.mxu0 %v260
    %v2111 = vpop.f32.mrf.mxu0
    %v2112 = vadd.f32 0.0, %v2111
    %2113 = vdwg.mxu0
    %v2114 = vadd.f32 %v2028, %v2092
    %v2115 = vadd.f32 %v2048, %v2112
    %2116 = vst [vmem:[#allocation1] ss:$2 sm:$0xff] %v1920
    %v2117 = vld.sshfl [vmem:[#allocation1 + $0x8] sm:$0xff pattern:$0x75316420]
    %2118 = vrot.lane.b32.xlu0 %v2117, 1
    %v2119 = vpop.permute.xlu0 %2118
    %2121 = vst [vmem:[#allocation1] ss:$2 sm:$0xff] %v1920
    %v2122 = vld.sshfl [vmem:[#allocation1] sm:$0xff pattern:$0x75316420]
    %v2123 = vld.sshfl [vmem:[#allocation1 + $0x8] sm:$0xff pattern:$0x75316420]
    %2124 = vrot.lane.b32.xlu0 %v2122, 1
    %v2125 = vpop.permute.xlu0 %2124
    %2126 = vrot.lane.b32.xlu0 %v2123, 1
    %v2127 = vpop.permute.xlu0 %2126
    %v2128 = vsel %vm322, %v2125, %v2127
    %v2131 = vsel %vm322, %v2119, %v2125
    %v2132 = vsel %vm68, %v2131, 0.0
    %v2133 = vsel %vm69, %v2128, 0.0
    %v2135 = vsel %vm144, %v2132, 0
    %v2138 = vsel %vm144, %v2133, 0
    %2140 = vmatpush.msra.mxu0 0.0
    %2141 = vmatpush.msra.mxu0 0.0
    %2142 = vmatpush.msra.mxu0 0.0
    %2143 = vmatpush.msra.mxu0 0.0
    %2144 = vmatpush.msra.mxu0 0.0
    %2145 = vmatpush.msra.mxu0 0.0
    %2146 = vmatpush.msra.mxu0 0.0
    %2147 = vmatpush.msra.mxu0 0.0
    %2148 = vmatpush.msra.mxu0 0.0
    %2149 = vmatpush.msra.mxu0 0.0
    %2150 = vmatpush.msra.mxu0 0.0
    %2151 = vmatpush.msra.mxu0 0.0
    %2152 = vmatpush.msra.mxu0 0.0
    %2153 = vmatpush.msra.mxu0 0.0
    %2154 = vmatpush.msra.mxu0 0.0
    %2155 = vmatpush.msra.mxu0 %v2135
    %2156 = vmatmul.f32.gmra.mxu0 %v331
    %v2157 = vpop.f32.mrf.mxu0
    %v2158 = vadd.f32 0.0, %v2157
    %2159 = vdwg.mxu0
    %2160 = vmatpush.msra.mxu0 0.0
    %2161 = vmatpush.msra.mxu0 0.0
    %2162 = vmatpush.msra.mxu0 0.0
    %2163 = vmatpush.msra.mxu0 0.0
    %2164 = vmatpush.msra.mxu0 0.0
    %2165 = vmatpush.msra.mxu0 0.0
    %2166 = vmatpush.msra.mxu0 0.0
    %2167 = vmatpush.msra.mxu0 0.0
    %2168 = vmatpush.msra.mxu0 0.0
    %2169 = vmatpush.msra.mxu0 0.0
    %2170 = vmatpush.msra.mxu0 0.0
    %2171 = vmatpush.msra.mxu0 0.0
    %2172 = vmatpush.msra.mxu0 0.0
    %2173 = vmatpush.msra.mxu0 0.0
    %2174 = vmatpush.msra.mxu0 0.0
    %2175 = vmatpush.msra.mxu0 %v2138
    %2176 = vmatmul.f32.gmra.mxu0 %v331
    %v2177 = vpop.f32.mrf.mxu0
    %v2178 = vadd.f32 0.0, %v2177
    %2179 = vdwg.mxu0
    %v2180 = vadd.f32 %v2114, %v2158
    %v2181 = vadd.f32 %v2115, %v2178
    %2182 = vst [vmem:[#allocation1] ss:$2 sm:$0xff] %v1920
    %v2183 = vld.sshfl [vmem:[#allocation1] sm:$0xff pattern:$0x75316420]
    %v2184 = vld.sshfl [vmem:[#allocation1 + $0x8] sm:$0xff pattern:$0x75316420]
    %v2187 = vsel %vm72, %v2183, 0.0
    %v2188 = vsel %vm73, %v2184, 0.0
    %v2190 = vsel %vm144, %v2187, 0
    %v2193 = vsel %vm144, %v2188, 0
    %2195 = vmatpush.msra.mxu0 0.0
    %2196 = vmatpush.msra.mxu0 0.0
    %2197 = vmatpush.msra.mxu0 0.0
    %2198 = vmatpush.msra.mxu0 0.0
    %2199 = vmatpush.msra.mxu0 0.0
    %2200 = vmatpush.msra.mxu0 0.0
    %2201 = vmatpush.msra.mxu0 0.0
    %2202 = vmatpush.msra.mxu0 0.0
    %2203 = vmatpush.msra.mxu0 0.0
    %2204 = vmatpush.msra.mxu0 0.0
    %2205 = vmatpush.msra.mxu0 0.0
    %2206 = vmatpush.msra.mxu0 0.0
    %2207 = vmatpush.msra.mxu0 0.0
    %2208 = vmatpush.msra.mxu0 0.0
    %2209 = vmatpush.msra.mxu0 0.0
    %2210 = vmatpush.msra.mxu0 %v2190
    %2211 = vmatmul.f32.gmra.mxu0 %v390
    %v2212 = vpop.f32.mrf.mxu0
    %v2213 = vadd.f32 0.0, %v2212
    %2214 = vdwg.mxu0
    %2215 = vmatpush.msra.mxu0 0.0
    %2216 = vmatpush.msra.mxu0 0.0
    %2217 = vmatpush.msra.mxu0 0.0
    %2218 = vmatpush.msra.mxu0 0.0
    %2219 = vmatpush.msra.mxu0 0.0
    %2220 = vmatpush.msra.mxu0 0.0
    %2221 = vmatpush.msra.mxu0 0.0
    %2222 = vmatpush.msra.mxu0 0.0
    %2223 = vmatpush.msra.mxu0 0.0
    %2224 = vmatpush.msra.mxu0 0.0
    %2225 = vmatpush.msra.mxu0 0.0
    %2226 = vmatpush.msra.mxu0 0.0
    %2227 = vmatpush.msra.mxu0 0.0
    %2228 = vmatpush.msra.mxu0 0.0
    %2229 = vmatpush.msra.mxu0 0.0
    %2230 = vmatpush.msra.mxu0 %v2193
    %2231 = vmatmul.f32.gmra.mxu0 %v390
    %v2232 = vpop.f32.mrf.mxu0
    %v2233 = vadd.f32 0.0, %v2232
    %2234 = vdwg.mxu0
    %v2235 = vadd.f32 %v2180, %v2213
    %v2236 = vadd.f32 %v2181, %v2233
    %2237 = vst [vmem:[#allocation1] ss:$2 sm:$0xff] %v1920
    %v2238 = vld.sshfl [vmem:[#allocation1] sm:$0xff pattern:$0x75316420]
    %v2239 = vld.sshfl [vmem:[#allocation1 + $0x8] sm:$0xff pattern:$0x75316420]
    %2240 = vrot.lane.b32.xlu0 %v2238, 127
    %v2241 = vpop.permute.xlu0 %2240
    %2242 = vrot.lane.b32.xlu0 %v2239, 127
    %v2243 = vpop.permute.xlu0 %2242
    %v2244 = vsel %vm447, %v2241, %v2243
    %2247 = vst [vmem:[#allocation1] ss:$2 sm:$0xff] %v1920
    %v2248 = vld.sshfl [vmem:[#allocation1] sm:$0xff pattern:$0x75316420]
    %2249 = vrot.lane.b32.xlu0 %v2248, 127
    %v2250 = vpop.permute.xlu0 %2249
    %v2252 = vsel %vm447, %v2243, %v2250
    %v2253 = vsel %vm76, %v2244, 0.0
    %v2254 = vsel %vm77, %v2252, 0.0
    %v2256 = vsel %vm144, %v2253, 0
    %v2259 = vsel %vm144, %v2254, 0
    %2261 = vmatpush.msra.mxu0 0.0
    %2262 = vmatpush.msra.mxu0 0.0
    %2263 = vmatpush.msra.mxu0 0.0
    %2264 = vmatpush.msra.mxu0 0.0
    %2265 = vmatpush.msra.mxu0 0.0
    %2266 = vmatpush.msra.mxu0 0.0
    %2267 = vmatpush.msra.mxu0 0.0
    %2268 = vmatpush.msra.mxu0 0.0
    %2269 = vmatpush.msra.mxu0 0.0
    %2270 = vmatpush.msra.mxu0 0.0
    %2271 = vmatpush.msra.mxu0 0.0
    %2272 = vmatpush.msra.mxu0 0.0
    %2273 = vmatpush.msra.mxu0 0.0
    %2274 = vmatpush.msra.mxu0 0.0
    %2275 = vmatpush.msra.mxu0 0.0
    %2276 = vmatpush.msra.mxu0 %v2256
    %2277 = vmatmul.f32.gmra.mxu0 %v461
    %v2278 = vpop.f32.mrf.mxu0
    %v2279 = vadd.f32 0.0, %v2278
    %2280 = vdwg.mxu0
    %2281 = vmatpush.msra.mxu0 0.0
    %2282 = vmatpush.msra.mxu0 0.0
    %2283 = vmatpush.msra.mxu0 0.0
    %2284 = vmatpush.msra.mxu0 0.0
    %2285 = vmatpush.msra.mxu0 0.0
    %2286 = vmatpush.msra.mxu0 0.0
    %2287 = vmatpush.msra.mxu0 0.0
    %2288 = vmatpush.msra.mxu0 0.0
    %2289 = vmatpush.msra.mxu0 0.0
    %2290 = vmatpush.msra.mxu0 0.0
    %2291 = vmatpush.msra.mxu0 0.0
    %2292 = vmatpush.msra.mxu0 0.0
    %2293 = vmatpush.msra.mxu0 0.0
    %2294 = vmatpush.msra.mxu0 0.0
    %2295 = vmatpush.msra.mxu0 0.0
    %2296 = vmatpush.msra.mxu0 %v2259
    %2297 = vmatmul.f32.gmra.mxu0 %v461
    %v2298 = vpop.f32.mrf.mxu0
    %v2299 = vadd.f32 0.0, %v2298
    %2300 = vdwg.mxu0
    %v2301 = vadd.f32 %v2235, %v2279
    %v2302 = vadd.f32 %v2236, %v2299
    %2303 = vst [vmem:[#allocation1] ss:$2 sm:$0xff] %v1920
    %v2304 = vld.sshfl [vmem:[#allocation1] sm:$0xff pattern:$0x75316420]
    %v2305 = vld.sshfl [vmem:[#allocation1 + $0x8] sm:$0xff pattern:$0x75316420]
    %2306 = vrot.lane.b32.xlu0 %v2304, 113
    %v2307 = vpop.permute.xlu0 %2306
    %2308 = vrot.lane.b32.xlu0 %v2305, 113
    %v2309 = vpop.permute.xlu0 %2308
    %v2310 = vsel %vm518, %v2307, %v2309
    %2313 = vst [vmem:[#allocation1] ss:$2 sm:$0xff] %v1920
    %v2314 = vld.sshfl [vmem:[#allocation1] sm:$0xff pattern:$0x75316420]
    %2315 = vrot.lane.b32.xlu0 %v2314, 113
    %v2316 = vpop.permute.xlu0 %2315
    %v2318 = vsel %vm518, %v2309, %v2316
    %v2319 = vsel %vm88, %v2310, 0.0
    %v2320 = vsel %vm89, %v2318, 0.0
    %v2322 = vsel %vm144, %v2319, 0
    %v2325 = vsel %vm144, %v2320, 0
    %2327 = vmatpush.msra.mxu0 0.0
    %2328 = vmatpush.msra.mxu0 0.0
    %2329 = vmatpush.msra.mxu0 0.0
    %2330 = vmatpush.msra.mxu0 0.0
    %2331 = vmatpush.msra.mxu0 0.0
    %2332 = vmatpush.msra.mxu0 0.0
    %2333 = vmatpush.msra.mxu0 0.0
    %2334 = vmatpush.msra.mxu0 0.0
    %2335 = vmatpush.msra.mxu0 0.0
    %2336 = vmatpush.msra.mxu0 0.0
    %2337 = vmatpush.msra.mxu0 0.0
    %2338 = vmatpush.msra.mxu0 0.0
    %2339 = vmatpush.msra.mxu0 0.0
    %2340 = vmatpush.msra.mxu0 0.0
    %2341 = vmatpush.msra.mxu0 0.0
    %2342 = vmatpush.msra.mxu0 %v2322
    %2343 = vmatmul.f32.gmra.mxu0 %v532
    %v2344 = vpop.f32.mrf.mxu0
    %v2345 = vadd.f32 0.0, %v2344
    %2346 = vdwg.mxu0
    %2347 = vmatpush.msra.mxu0 0.0
    %2348 = vmatpush.msra.mxu0 0.0
    %2349 = vmatpush.msra.mxu0 0.0
    %2350 = vmatpush.msra.mxu0 0.0
    %2351 = vmatpush.msra.mxu0 0.0
    %2352 = vmatpush.msra.mxu0 0.0
    %2353 = vmatpush.msra.mxu0 0.0
    %2354 = vmatpush.msra.mxu0 0.0
    %2355 = vmatpush.msra.mxu0 0.0
    %2356 = vmatpush.msra.mxu0 0.0
    %2357 = vmatpush.msra.mxu0 0.0
    %2358 = vmatpush.msra.mxu0 0.0
    %2359 = vmatpush.msra.mxu0 0.0
    %2360 = vmatpush.msra.mxu0 0.0
    %2361 = vmatpush.msra.mxu0 0.0
    %2362 = vmatpush.msra.mxu0 %v2325
    %2363 = vmatmul.f32.gmra.mxu0 %v532
    %v2364 = vpop.f32.mrf.mxu0
    %v2365 = vadd.f32 0.0, %v2364
    %2366 = vdwg.mxu0
    %v2367 = vadd.f32 %v2301, %v2345
    %v2368 = vadd.f32 %v2302, %v2365
    %2369 = vst [vmem:[#allocation1] ss:$2 sm:$0xff] %v1920
    %v2370 = vld.sshfl [vmem:[#allocation1] sm:$0xff pattern:$0x75316420]
    %v2371 = vld.sshfl [vmem:[#allocation1 + $0x8] sm:$0xff pattern:$0x75316420]
    %2372 = vrot.lane.b32.xlu0 %v2370, 112
    %v2373 = vpop.permute.xlu0 %2372
    %2374 = vrot.lane.b32.xlu0 %v2371, 112
    %v2375 = vpop.permute.xlu0 %2374
    %v2376 = vsel %vm589, %v2373, %v2375
    %2379 = vst [vmem:[#allocation1] ss:$2 sm:$0xff] %v1920
    %v2380 = vld.sshfl [vmem:[#allocation1] sm:$0xff pattern:$0x75316420]
    %2381 = vrot.lane.b32.xlu0 %v2380, 112
    %v2382 = vpop.permute.xlu0 %2381
    %v2384 = vsel %vm589, %v2375, %v2382
    %v2385 = vsel %vm92, %v2376, 0.0
    %v2386 = vsel %vm93, %v2384, 0.0
    %v2388 = vsel %vm144, %v2385, 0
    %v2391 = vsel %vm144, %v2386, 0
    %2393 = vmatpush.msra.mxu0 0.0
    %2394 = vmatpush.msra.mxu0 0.0
    %2395 = vmatpush.msra.mxu0 0.0
    %2396 = vmatpush.msra.mxu0 0.0
    %2397 = vmatpush.msra.mxu0 0.0
    %2398 = vmatpush.msra.mxu0 0.0
    %2399 = vmatpush.msra.mxu0 0.0
    %2400 = vmatpush.msra.mxu0 0.0
    %2401 = vmatpush.msra.mxu0 0.0
    %2402 = vmatpush.msra.mxu0 0.0
    %2403 = vmatpush.msra.mxu0 0.0
    %2404 = vmatpush.msra.mxu0 0.0
    %2405 = vmatpush.msra.mxu0 0.0
    %2406 = vmatpush.msra.mxu0 0.0
    %2407 = vmatpush.msra.mxu0 0.0
    %2408 = vmatpush.msra.mxu0 %v2388
    %2409 = vmatmul.f32.gmra.mxu0 %v603
    %v2410 = vpop.f32.mrf.mxu0
    %v2411 = vadd.f32 0.0, %v2410
    %2412 = vdwg.mxu0
    %2413 = vmatpush.msra.mxu0 0.0
    %2414 = vmatpush.msra.mxu0 0.0
    %2415 = vmatpush.msra.mxu0 0.0
    %2416 = vmatpush.msra.mxu0 0.0
    %2417 = vmatpush.msra.mxu0 0.0
    %2418 = vmatpush.msra.mxu0 0.0
    %2419 = vmatpush.msra.mxu0 0.0
    %2420 = vmatpush.msra.mxu0 0.0
    %2421 = vmatpush.msra.mxu0 0.0
    %2422 = vmatpush.msra.mxu0 0.0
    %2423 = vmatpush.msra.mxu0 0.0
    %2424 = vmatpush.msra.mxu0 0.0
    %2425 = vmatpush.msra.mxu0 0.0
    %2426 = vmatpush.msra.mxu0 0.0
    %2427 = vmatpush.msra.mxu0 0.0
    %2428 = vmatpush.msra.mxu0 %v2391
    %2429 = vmatmul.f32.gmra.mxu0 %v603
    %v2430 = vpop.f32.mrf.mxu0
    %v2431 = vadd.f32 0.0, %v2430
    %2432 = vdwg.mxu0
    %v2433 = vadd.f32 %v2367, %v2411
    %v2434 = vadd.f32 %v2368, %v2431
    %2435 = vst [vmem:[#allocation1] ss:$2 sm:$0xff] %v1920
    %v2436 = vld.sshfl [vmem:[#allocation1] sm:$0xff pattern:$0x75316420]
    %v2437 = vld.sshfl [vmem:[#allocation1 + $0x8] sm:$0xff pattern:$0x75316420]
    %2438 = vrot.lane.b32.xlu0 %v2436, 111
    %v2439 = vpop.permute.xlu0 %2438
    %2440 = vrot.lane.b32.xlu0 %v2437, 111
    %v2441 = vpop.permute.xlu0 %2440
    %v2442 = vsel %vm660, %v2439, %v2441
    %2445 = vst [vmem:[#allocation1] ss:$2 sm:$0xff] %v1920
    %v2446 = vld.sshfl [vmem:[#allocation1] sm:$0xff pattern:$0x75316420]
    %2447 = vrot.lane.b32.xlu0 %v2446, 111
    %v2448 = vpop.permute.xlu0 %2447
    %v2450 = vsel %vm660, %v2441, %v2448
    %v2451 = vsel %vm96, %v2442, 0.0
    %v2452 = vsel %vm97, %v2450, 0.0
    %v2454 = vsel %vm144, %v2451, 0
    %v2457 = vsel %vm144, %v2452, 0
    %2459 = vmatpush.msra.mxu0 0.0
    %2460 = vmatpush.msra.mxu0 0.0
    %2461 = vmatpush.msra.mxu0 0.0
    %2462 = vmatpush.msra.mxu0 0.0
    %2463 = vmatpush.msra.mxu0 0.0
    %2464 = vmatpush.msra.mxu0 0.0
    %2465 = vmatpush.msra.mxu0 0.0
    %2466 = vmatpush.msra.mxu0 0.0
    %2467 = vmatpush.msra.mxu0 0.0
    %2468 = vmatpush.msra.mxu0 0.0
    %2469 = vmatpush.msra.mxu0 0.0
    %2470 = vmatpush.msra.mxu0 0.0
    %2471 = vmatpush.msra.mxu0 0.0
    %2472 = vmatpush.msra.mxu0 0.0
    %2473 = vmatpush.msra.mxu0 0.0
    %2474 = vmatpush.msra.mxu0 %v2454
    %2475 = vmatmul.f32.gmra.mxu0 %v674
    %v2476 = vpop.f32.mrf.mxu0
    %v2477 = vadd.f32 0.0, %v2476
    %2478 = vdwg.mxu0
    %2479 = vmatpush.msra.mxu0 0.0
    %2480 = vmatpush.msra.mxu0 0.0
    %2481 = vmatpush.msra.mxu0 0.0
    %2482 = vmatpush.msra.mxu0 0.0
    %2483 = vmatpush.msra.mxu0 0.0
    %2484 = vmatpush.msra.mxu0 0.0
    %2485 = vmatpush.msra.mxu0 0.0
    %2486 = vmatpush.msra.mxu0 0.0
    %2487 = vmatpush.msra.mxu0 0.0
    %2488 = vmatpush.msra.mxu0 0.0
    %2489 = vmatpush.msra.mxu0 0.0
    %2490 = vmatpush.msra.mxu0 0.0
    %2491 = vmatpush.msra.mxu0 0.0
    %2492 = vmatpush.msra.mxu0 0.0
    %2493 = vmatpush.msra.mxu0 0.0
    %2494 = vmatpush.msra.mxu0 %v2457
    %2495 = vmatmul.f32.gmra.mxu0 %v674
    %v2496 = vpop.f32.mrf.mxu0
    %v2497 = vadd.f32 0.0, %v2496
    %2498 = vdwg.mxu0
    %v2499 = vadd.f32 %v2433, %v2477
    %v2500 = vadd.f32 %v2434, %v2497
    %v2501 = vadd.f32 %v2499, %v726
    %v2502 = vadd.f32 %v2500, %v726
    %v2503 = vmax.f32 %v2501, 0.0
    %v2504 = vmax.f32 %v2502, 0.0
    %v2505 = vsub.f32 %v1917, %v2503
    %v2506 = vsub.f32 %v1918, %v2504
    %v2507 = vand.u32 2147483647, %v2505
    %v2508 = vand.u32 2147483647, %v2506
    %v2509 = vmul.f32 %v2507, %v17
    %v2510 = vmul.f32 %v2508, %v18
    %v2511 = vadd.f32 %v2509, %v2510
    %2512 = vadd.xlane.f32.xlu0 %v2511
    %v2513 = vpop.xlane.xlu0 %2512
    %v2514 = vrot.slane %v2513, 4
    %v2515 = vadd.f32 %v2513, %v2514
    %v2516 = vrot.slane %v2515, 2
    %v2517 = vadd.f32 %v2515, %v2516
    %v2518 = vrot.slane %v2517, 1
    %v2519 = vadd.f32 %v2517, %v2518
    %v2520 = vadd.f32 %v2519, %v16
    %2522 = vrot.lane.b32.xlu0 %v1332, 91
    %v2523 = vpop.permute.xlu0 %2522
    %2526 = vrot.lane.b32.xlu0 %v2520, 92
    %v2527 = vpop.permute.xlu0 %2526
    %v2529 = vsel %vm322, %v2523, %v2527
    %v2530 = vsub.f32 0.0, %v2529
    %v2531 = vmul.f32 %v2530, 1.442695
    %v2532 = vpow.pop %v2531
    %v2533 = vadd.f32 %v2532, 1.0
    %v2534 = vrcp.pop %v2533
    %v2535 = vmul.f32 %v2533, %v2534
    %v2536 = vsub.f32 1.0, %v2535
    %v2537 = vmul.f32 %v2534, %v2536
    %v2538 = vadd.f32 %v2534, %v2537
    %vm2539 = vweird.f32 %v2533
    %vm2540 = vweird.f32 %v2534
    %vm2541 = vmor %vm2539, %vm2540
    %v2542 = vsel %vm2541, %v2534, %v2538
    %v2543 = vand.u32 2147483647, %v2533
    %vm2544 = vcmp.eq.f32.partialorder %v2543, 8.507059e+37
    %v2545 = vand.u32 %v2533, 2147483648
    %v2546 = vor.u32 1.1754944e-38, %v2545
    %v2547 = vsel %vm2544, %v2546, %v2542
    %v2548 = vmul.f32 1.0, %v2547
    %vm2549 = vcmask 8192
    %2550 = vst.msk [vmem:[#allocation2] sm:$0x1] %vm2549, %v2548
    // Predicated region
    $region14: #{siamese_forward.1} parent=1 // pred_check
      _
    $region15: #{siamese_forward.1} parent=1 // pred_check_branch
      %2552 = sbr.rel (0) target = $region17
    $region16: #{siamese_forward.1} parent=1 // pred_region
      %2554 = vsyncadd [#allocation3], 0
      %s2556 = sshll.u32 [#allocation2], 4
      %s2557 = int_to_ptr.vmem [resolvable:$true] %s2556
      %s2558 = sshll.u32 %s3, 4
      %s2559 = int_to_ptr.hbm [resolvable:$true] %s2558
      %2561 = dma.vmem_to_hbm [thread:$0]  %s2557, 16, %s2559, [#allocation3]
    $region17: #{siamese_forward.1} parent=1 // pred_fallthru
      _
    // Predicated region
    $region18: #{siamese_forward.1} parent=1 // pred_check
      _
    $region19: #{siamese_forward.1} parent=1 // pred_check_branch
      %2563 = sbr.rel (0) target = $region21
    $region20: #{siamese_forward.1} parent=1 // pred_region
      %2565 = dma.done [#allocation3], 16
    $region21: #{siamese_forward.1} parent=1 // pred_fallthru
      _
    %2566 = vsyncpa [#allocation3], 1

</llo_original>
